<compile_context>
chip_gen: v7x
topology: tpu7x:2x2x1
jax: 0.10.0
libtpu: 0.0.40
codegen_flags: <defaults>
</compile_context>

<pallas_src>
import math
from functools import partial
from dataclasses import dataclass

import jax
import jax.numpy as jnp
from jax.experimental import pallas as pl
from jax.experimental.pallas import tpu as pltpu


@dataclass(frozen=True)
class ModelArgs:
    dim: int = 32
    n_layers: int = 2
    n_heads: int = 4
    vocab_size: int = 50
    multiple_of: int = 16
    norm_eps: float = 1e-5
    max_seq_len: int = 16


# ---------------------------- fused MoK-expert kernel ----------------------------

def _rmsnorm(x, w, eps):
    # x: (M, dim) f32, w: (1, dim) f32
    ms = jnp.mean(x * x, axis=-1, keepdims=True)
    return x * jax.lax.rsqrt(ms + eps) * w


def _mok_encoder_kernel(sel_ref, h_ref, cos_ref, sin_ref, pswap_ref,
                        down_ref, up_ref, fnorm_ref,
                        anorm_ref, wqkv_ref, wo_ref, ffnorm_ref, w13_ref, w2_ref,
                        out_ref, *, n_layers, n_heads, head_dim, batch, seq, eps, start_pos):
    dim = n_heads * head_dim
    scale = 1.0 / math.sqrt(head_dim)

    # --- downscaler: (M, emb) bf16 @ (emb, dim) bf16 -> f32 ---
    h = jnp.dot(h_ref[...], down_ref[...], preferred_element_type=jnp.float32)

    cos = cos_ref[...]          # (M, dim) interleaved-duplicated cos
    ssin = sin_ref[...]         # (M, dim) interleaved-duplicated sin with (-,+) sign pattern
    pswap = pswap_ref[...]      # (dim, dim) pair-swap permutation

    # --- causal mask generated in-kernel (large finite negative instead of -inf) ---
    row = jax.lax.broadcasted_iota(jnp.int32, (seq, seq), 0)
    col = jax.lax.broadcasted_iota(jnp.int32, (seq, seq), 1)
    mask = jnp.where(col > row + start_pos, jnp.float32(-1e30), jnp.float32(0.0))

    for l in range(n_layers):
        # ---- attention ----
        xn = _rmsnorm(h, anorm_ref[l], eps)
        qkv = jnp.dot(xn.astype(jnp.bfloat16), wqkv_ref[l],
                      preferred_element_type=jnp.float32)          # (M, 3*dim)
        q = qkv[:, 0:dim]
        k = qkv[:, dim:2 * dim]
        v = qkv[:, 2 * dim:3 * dim]

        # RoPE: out[2j] = x[2j]*cos - x[2j+1]*sin ; out[2j+1] = x[2j]*sin + x[2j+1]*cos
        q = q * cos + jnp.dot(q, pswap, preferred_element_type=jnp.float32) * ssin
        k = k * cos + jnp.dot(k, pswap, preferred_element_type=jnp.float32) * ssin

        # per-(batch, head) attention, fully unrolled inside the single kernel
        batch_outs = []
        for b in range(batch):
            qb = q[b * seq:(b + 1) * seq, :]
            kb = k[b * seq:(b + 1) * seq, :]
            vb = v[b * seq:(b + 1) * seq, :]
            head_outs = []
            for hh in range(n_heads):
                lo, hi = hh * head_dim, (hh + 1) * head_dim
                qh, kh, vh = qb[:, lo:hi], kb[:, lo:hi], vb[:, lo:hi]
                s = jax.lax.dot_general(qh, kh, (((1,), (1,)), ((), ())),
                                        preferred_element_type=jnp.float32)
                s = s * scale + mask
                s = s - jnp.max(s, axis=-1, keepdims=True)
                p = jnp.exp(s)
                p = p / jnp.sum(p, axis=-1, keepdims=True)
                head_outs.append(jnp.dot(p, vh, preferred_element_type=jnp.float32))
            batch_outs.append(jnp.concatenate(head_outs, axis=-1))
        attn = jnp.concatenate(batch_outs, axis=0)                  # (M, dim)

        h = h + jnp.dot(attn.astype(jnp.bfloat16), wo_ref[l],
                        preferred_element_type=jnp.float32)

        # ---- SwiGLU FFN (w1 || w3 fused) ----
        hn = _rmsnorm(h, ffnorm_ref[l], eps)
        a13 = jnp.dot(hn.astype(jnp.bfloat16), w13_ref[l],
                      preferred_element_type=jnp.float32)           # (M, 2*hidden)
        hidden = a13.shape[-1] // 2
        a1 = a13[:, :hidden]
        a3 = a13[:, hidden:]
        ff = (a1 * jax.nn.sigmoid(a1)) * a3                          # silu(w1 x) * (w3 x)
        h = h + jnp.dot(ff.astype(jnp.bfloat16), w2_ref[l],
                        preferred_element_type=jnp.float32)

    # ---- final norm + upscaler + routing select + bf16 cast (epilogue) ----
    hn = _rmsnorm(h, fnorm_ref[...], eps)
    y = jnp.dot(hn.astype(jnp.bfloat16), up_ref[...],
                preferred_element_type=jnp.float32)                  # (M, emb)
    out_ref[...] = (y * sel_ref[...]).astype(jnp.bfloat16)


# ---------------------------- plain-JAX glue ----------------------------

def _rope_tables(head_dim, seq, dim, start_pos, batch, theta=10000.0):
    inv = 1.0 / theta ** (jnp.arange(0, head_dim, 2)[: head_dim // 2].astype(jnp.float32)
                          / head_dim)
    t = jnp.arange(start_pos, start_pos + seq, dtype=jnp.float32)
    freqs = jnp.outer(t, inv)                                 # (S, hd/2)
    cos = jnp.repeat(jnp.cos(freqs), 2, axis=-1)              # [c0,c0,c1,c1,...]
    sin = jnp.repeat(jnp.sin(freqs), 2, axis=-1)
    sign = jnp.tile(jnp.array([-1.0, 1.0], jnp.float32), head_dim // 2)
    sin = sin * sign[None, :]                                 # (-s0,+s0,-s1,+s1,...)
    n_heads = dim // head_dim
    cos = jnp.tile(cos, (1, n_heads))                         # (S, dim)
    sin = jnp.tile(sin, (1, n_heads))
    return jnp.tile(cos, (batch, 1)), jnp.tile(sin, (batch, 1))   # (B*S, dim)


def aux_loss(router_probs, expert_indices, num_experts):
    router_probs = router_probs[None].astype(jnp.float32)       # (1, B, E)
    expert_indices = expert_indices[None]                        # (1, B, 2)
    expert_mask = jax.nn.one_hot(expert_indices, num_experts, dtype=jnp.int32)
    expert_mask = expert_mask.max(axis=-2)                       # (1, B, E)
    tokens_pge = jnp.mean(expert_mask.astype(jnp.float32), axis=-2)
    router_pge = jnp.mean(router_probs, axis=-2)
    return num_experts ** 2 * jnp.mean(tokens_pge * router_pge)


def z_loss(router_logits):
    # NOTE: the PyTorch reference passes the already-softmaxed gate values here;
    # we keep that behaviour to match its semantics exactly.
    rl = router_logits[None].astype(jnp.float32)
    ng, tg, _ = rl.shape
    log_z = jax.nn.logsumexp(rl, axis=-1)
    return jnp.sum(log_z ** 2) / (ng * tg)


def encoders_mok_fwd(params, tokens, args, start_pos=0):
    emb_w = params['embedding']                 # (vocab, emb_dim)
    gate = params['gate']                       # (num_experts, emb_dim)
    encoders = params['encoders']
    expert_params = [p for p in encoders if p is not None]
    num_experts = len(expert_params)
    assert gate.shape[0] == num_experts

    B, S = tokens.shape
    emb_dim = emb_w.shape[1]
    dim, H, L = args.dim, args.n_heads, args.n_layers
    hd = dim // H
    M = B * S

    h = emb_w[tokens]                                            # (B, S, emb) f32

    # ---- routing + losses (plain JAX: 2-lane-wide outputs, not worth a kernel) ----
    gated = jnp.einsum('bse,xe->bsx', h, gate)                   # (B, S, E)
    gated = jax.nn.softmax(jnp.mean(gated, axis=1), axis=-1)     # (B, E)
    top1 = jnp.argmax(gated, axis=-1)
    mask1 = jax.nn.one_hot(top1, num_experts, dtype=jnp.int32)
    logits_except1 = jnp.where(mask1.astype(bool), -jnp.inf, gated)
    top2 = jnp.argmax(logits_except1, axis=-1)
    gate_loss = aux_loss(gated, jnp.stack([top1, top2], axis=-1), num_experts) + z_loss(gated)

    # per-expert routing mask, folded into the kernel epilogue
    # TODO(synk): the PyTorch module gathers only routed batch rows (dynamic shape) and
    # scatters back; we run the dense batch through every expert and zero unrouted rows,
    # which produces identical values since the encoder is per-batch-row independent.
    expert_ids = jnp.arange(num_experts)
    sel_be = (top1[None, :] == expert_ids[:, None]) | (top2[None, :] == expert_ids[:, None])
    sel = jnp.repeat(sel_be.astype(jnp.float32), S, axis=1).reshape(num_experts, M, 1)

    h_bf = h.reshape(M, emb_dim).astype(jnp.bfloat16)

    # RoPE tables + pair-swap permutation matrix (exact interleaved rotation via MXU)
    cos_bs, sin_bs = _rope_tables(hd, S, dim, start_pos, B)
    idx = jnp.arange(dim)
    pswap = (idx[:, None] == (idx[None, :] ^ 1)).astype(jnp.float32)

    # ---- stack expert weights with a leading expert dim (bf16 for MXU operands) ----
    def stack(fn):
        return jnp.stack([fn(ep) for ep in expert_params], axis=0)

    w_down = stack(lambda ep: ep['downscaler'].astype(jnp.bfloat16))      # (E, emb, dim)
    w_up = stack(lambda ep: ep['upscaler'].astype(jnp.bfloat16))          # (E, dim, emb)
    w_fnorm = stack(lambda ep: ep['norm_w'].reshape(1, dim))              # (E, 1, dim)
    anorm = stack(lambda ep: jnp.stack(
        [lp['attn_norm'].reshape(1, dim) for lp in ep['layers']]))        # (E, L, 1, dim)
    wqkv = stack(lambda ep: jnp.stack(
        [jnp.concatenate([lp['wq'], lp['wk'], lp['wv']], axis=1).astype(jnp.bfloat16)
         for lp in ep['layers']]))                                        # (E, L, dim, 3*dim)
    wo = stack(lambda ep: jnp.stack(
        [lp['wo'].astype(jnp.bfloat16) for lp in ep['layers']]))          # (E, L, dim, dim)
    ffnorm = stack(lambda ep: jnp.stack(
        [lp['ffn_norm'].reshape(1, dim) for lp in ep['layers']]))         # (E, L, 1, dim)
    w13 = stack(lambda ep: jnp.stack(
        [jnp.concatenate([lp['w1'], lp['w3']], axis=1).astype(jnp.bfloat16)
         for lp in ep['layers']]))                                        # (E, L, dim, 2*hidden)
    w2 = stack(lambda ep: jnp.stack(
        [lp['w2'].astype(jnp.bfloat16) for lp in ep['layers']]))          # (E, L, hidden, dim)
    hidden = w2.shape[2]

    kernel = partial(_mok_encoder_kernel, n_layers=L, n_heads=H, head_dim=hd,
                     batch=B, seq=S, eps=args.norm_eps, start_pos=start_pos)

    def shared_spec(shape):
        return pl.BlockSpec(shape, lambda e, _s=len(shape): (0,) * _s)

    def expert_spec(shape):
        return pl.BlockSpec((None,) + shape, lambda e, _s=len(shape): (e,) + (0,) * _s)

    out = pl.pallas_call(
        kernel,
        out_shape=jax.ShapeDtypeStruct((num_experts, M, emb_dim), jnp.bfloat16),
        grid=(num_experts,),
        in_specs=[
            expert_spec((M, 1)),               # routing select
            shared_spec((M, emb_dim)),         # token embeddings (bf16)
            shared_spec((M, dim)),             # RoPE cos
            shared_spec((M, dim)),             # RoPE sin (signed)
            shared_spec((dim, dim)),           # pair-swap permutation
            expert_spec((emb_dim, dim)),       # downscaler
            expert_spec((dim, emb_dim)),       # upscaler
            expert_spec((1, dim)),             # final norm weight
            expert_spec((L, 1, dim)),          # attention norm weights
            expert_spec((L, dim, 3 * dim)),    # wq||wk||wv
            expert_spec((L, dim, dim)),        # wo
            expert_spec((L, 1, dim)),          # ffn norm weights
            expert_spec((L, dim, 2 * hidden)), # w1||w3
            expert_spec((L, hidden, dim)),     # w2
        ],
        out_specs=expert_spec((M, emb_dim)),
        compiler_params=pltpu.CompilerParams(dimension_semantics=("parallel",)),
    )(sel, h_bf, cos_bs, sin_bs, pswap, w_down, w_up, w_fnorm,
      anorm, wqkv, wo, ffnorm, w13, w2)

    results = []
    e_idx = 0
    for ep in encoders:
        if ep is None:
            results.append(None)
        else:
            results.append(out[e_idx].reshape(B, S, emb_dim))
            e_idx += 1
    return gate_loss, results


# ---------------------------- deterministic init ----------------------------

def init_encoder(key, args, emb_dim):
    hidden = int(2 * (4 * args.dim) / 3)
    hidden = args.multiple_of * ((hidden + args.multiple_of - 1) // args.multiple_of)
    keys = jax.random.split(key, 2 + args.n_layers)
    params = {
        'downscaler': 0.02 * jax.random.normal(keys[0], (emb_dim, args.dim), jnp.float32),
        'upscaler': 0.02 * jax.random.normal(keys[1], (args.dim, emb_dim), jnp.float32),
        'norm_w': jnp.ones((args.dim,), jnp.float32),
        'layers': [],
    }
    for l in range(args.n_layers):
        lk = jax.random.split(keys[2 + l], 7)
        params['layers'].append({
            'wq': 0.02 * jax.random.normal(lk[0], (args.dim, args.dim), jnp.float32),
            'wk': 0.02 * jax.random.normal(lk[1], (args.dim, args.dim), jnp.float32),
            'wv': 0.02 * jax.random.normal(lk[2], (args.dim, args.dim), jnp.float32),
            'wo': 0.02 * jax.random.normal(lk[3], (args.dim, args.dim), jnp.float32),
            'w1': 0.02 * jax.random.normal(lk[4], (args.dim, hidden), jnp.float32),
            'w3': 0.02 * jax.random.normal(lk[5], (args.dim, hidden), jnp.float32),
            'w2': 0.02 * jax.random.normal(lk[6], (hidden, args.dim), jnp.float32),
            'attn_norm': jnp.ones((args.dim,), jnp.float32),
            'ffn_norm': jnp.ones((args.dim,), jnp.float32),
        })
    return params


if __name__ == "__main__":
    args = ModelArgs()
    emb_dim = 64          # decoder / embedding hidden dim (upscaler out, downscaler in)
    B, S = 2, 8
    num_experts = 2

    key = jax.random.PRNGKey(0)
    k_emb, k_gate, k_e0, k_e1, k_tok = jax.random.split(key, 5)
    params = {
        'embedding': 0.02 * jax.random.normal(k_emb, (args.vocab_size, emb_dim), jnp.float32),
        'gate': math.sqrt(0.1 / emb_dim)
                * jax.random.normal(k_gate, (num_experts, emb_dim), jnp.float32),
        # middle entry is None, mirroring List[Encoder | None]
        'encoders': [init_encoder(k_e0, args, emb_dim), None, init_encoder(k_e1, args, emb_dim)],
    }
    tokens = jax.random.randint(k_tok, (B, S), 0, args.vocab_size)

    fwd = jax.jit(lambda p, t: encoders_mok_fwd(p, t, args, start_pos=0))
    gate_loss, results = fwd(params, tokens)

    gate_loss = jax.block_until_ready(gate_loss)
    for r in results:
        if r is not None:
            jax.block_until_ready(r)

    assert bool(jnp.isfinite(gate_loss))
    assert results[1] is None
    assert results[0].dtype == jnp.bfloat16 and results[0].shape == (B, S, emb_dim)
    assert bool(jnp.all(jnp.isfinite(results[0].astype(jnp.float32))))
    assert bool(jnp.all(jnp.isfinite(results[2].astype(jnp.float32))))
    print("KERNEL_OK")
</pallas_src>

<mosaic_0001>
module attributes {stable_mosaic.version = 11 : i64} {
  func.func @_mok_encoder_kernel(%arg0: i32, %arg1: memref<1x16x1xf32, #tpu.memory_space<vmem>>, %arg2: memref<16x64xbf16, #tpu.memory_space<vmem>>, %arg3: memref<16x32xf32, #tpu.memory_space<vmem>>, %arg4: memref<16x32xf32, #tpu.memory_space<vmem>>, %arg5: memref<32x32xf32, #tpu.memory_space<vmem>>, %arg6: memref<1x64x32xbf16, #tpu.memory_space<vmem>>, %arg7: memref<1x32x64xbf16, #tpu.memory_space<vmem>>, %arg8: memref<1x1x32xf32, #tpu.memory_space<vmem>>, %arg9: memref<1x2x1x32xf32, #tpu.memory_space<vmem>>, %arg10: memref<1x2x32x96xbf16, #tpu.memory_space<vmem>>, %arg11: memref<1x2x32x32xbf16, #tpu.memory_space<vmem>>, %arg12: memref<1x2x1x32xf32, #tpu.memory_space<vmem>>, %arg13: memref<1x2x32x192xbf16, #tpu.memory_space<vmem>>, %arg14: memref<1x2x96x32xbf16, #tpu.memory_space<vmem>>, %arg15: memref<1x16x64xbf16, #tpu.memory_space<vmem>>) attributes {dimension_semantics = [#tpu.dimension_semantics<parallel>], iteration_bounds = array<i64: 2>, scalar_prefetch = 0 : i64, scratch_operands = 0 : i64, tpu.core_type = #tpu.core_type<tc>, window_params = [{transform_indices = @transform_0, window_bounds = array<i64: 1, 16, 1>}, {pipeline_mode = #tpu.pipeline_mode<synchronous>, transform_indices = @transform_1, window_bounds = array<i64: 16, 64>}, {pipeline_mode = #tpu.pipeline_mode<synchronous>, transform_indices = @transform_2, window_bounds = array<i64: 16, 32>}, {pipeline_mode = #tpu.pipeline_mode<synchronous>, transform_indices = @transform_3, window_bounds = array<i64: 16, 32>}, {pipeline_mode = #tpu.pipeline_mode<synchronous>, transform_indices = @transform_4, window_bounds = array<i64: 32, 32>}, {transform_indices = @transform_5, window_bounds = array<i64: 1, 64, 32>}, {transform_indices = @transform_6, window_bounds = array<i64: 1, 32, 64>}, {transform_indices = @transform_7, window_bounds = array<i64: 1, 1, 32>}, {transform_indices = @transform_8, window_bounds = array<i64: 1, 2, 1, 32>}, {transform_indices = @transform_9, window_bounds = array<i64: 1, 2, 32, 96>}, {transform_indices = @transform_10, window_bounds = array<i64: 1, 2, 32, 32>}, {transform_indices = @transform_11, window_bounds = array<i64: 1, 2, 1, 32>}, {transform_indices = @transform_12, window_bounds = array<i64: 1, 2, 32, 192>}, {transform_indices = @transform_13, window_bounds = array<i64: 1, 2, 96, 32>}, {transform_indices = @transform_14, window_bounds = array<i64: 1, 16, 64>}]} {
    %c0 = arith.constant 0 : index
    %c0_0 = arith.constant 0 : index
    %0 = vector.load %arg2[%c0, %c0_0] : memref<16x64xbf16, #tpu.memory_space<vmem>>, vector<16x64xbf16>
    %c0_1 = arith.constant 0 : index
    %c0_2 = arith.constant 0 : index
    %c0_3 = arith.constant 0 : index
    %1 = vector.load %arg6[%c0_1, %c0_2, %c0_3] : memref<1x64x32xbf16, #tpu.memory_space<vmem>>, vector<1x64x32xbf16>
    %2 = vector.shape_cast %1 : vector<1x64x32xbf16> to vector<64x32xbf16>
    %cst = arith.constant dense<0.000000e+00> : vector<16x32xf32>
    %3 = tpu.matmul %0, %2, %cst {dimension_numbers = #tpu.dot_dimension_numbers<[1], [0], [0], [1], [0, 0, 1, 1], [], []>} : vector<16x64xbf16>, vector<64x32xbf16>, vector<16x32xf32> -> vector<16x32xf32>
    %c0_4 = arith.constant 0 : index
    %c0_5 = arith.constant 0 : index
    %4 = vector.load %arg3[%c0_4, %c0_5] : memref<16x32xf32, #tpu.memory_space<vmem>>, vector<16x32xf32>
    %c0_6 = arith.constant 0 : index
    %c0_7 = arith.constant 0 : index
    %5 = vector.load %arg4[%c0_6, %c0_7] : memref<16x32xf32, #tpu.memory_space<vmem>>, vector<16x32xf32>
    %c0_8 = arith.constant 0 : index
    %c0_9 = arith.constant 0 : index
    %6 = vector.load %arg5[%c0_8, %c0_9] : memref<32x32xf32, #tpu.memory_space<vmem>>, vector<32x32xf32>
    %7 = tpu.iota {dimensions = array<i32: 0>} : vector<8x8xi32>
    %8 = tpu.iota {dimensions = array<i32: 1>} : vector<8x8xi32>
    %c0_i32 = arith.constant 0 : i32
    %9 = vector.broadcast %c0_i32 : i32 to vector<8x8xi32>
    %10 = arith.addi %7, %9 : vector<8x8xi32>
    %11 = arith.cmpi sgt, %8, %10 : vector<8x8xi32>
    %cst_10 = arith.constant -1.000000e+30 : f32
    %cst_11 = arith.constant 0.000000e+00 : f32
    %12 = vector.broadcast %cst_10 : f32 to vector<8x8xf32>
    %13 = vector.broadcast %cst_11 : f32 to vector<8x8xf32>
    %14 = arith.select %11, %12, %13 : vector<8x8xi1>, vector<8x8xf32>
    %c0_12 = arith.constant 0 : index
    %c0_13 = arith.constant 0 : index
    %c0_14 = arith.constant 0 : index
    %c0_15 = arith.constant 0 : index
    %15 = vector.load %arg9[%c0_12, %c0_13, %c0_14, %c0_15] : memref<1x2x1x32xf32, #tpu.memory_space<vmem>>, vector<1x1x1x32xf32>
    %16 = vector.shape_cast %15 : vector<1x1x1x32xf32> to vector<1x32xf32>
    %17 = arith.mulf %3, %3 : vector<16x32xf32>
    %cst_16 = arith.constant dense<0.000000e+00> : vector<16xf32>
    %18 = vector.multi_reduction <add>, %17, %cst_16 [1] : vector<16x32xf32> to vector<16xf32>
    %19 = vector.shape_cast %18 : vector<16xf32> to vector<16x1xf32>
    %cst_17 = arith.constant 3.200000e+01 : f32
    %20 = vector.broadcast %cst_17 : f32 to vector<16x1xf32>
    %21 = arith.divf %19, %20 : vector<16x1xf32>
    %cst_18 = arith.constant 9.99999974E-6 : f32
    %22 = vector.broadcast %cst_18 : f32 to vector<16x1xf32>
    %23 = arith.addf %21, %22 : vector<16x1xf32>
    %24 = math.rsqrt %23 : vector<16x1xf32>
    %25 = vector.broadcast %24 : vector<16x1xf32> to vector<16x32xf32>
    %26 = arith.mulf %3, %25 : vector<16x32xf32>
    %27 = vector.broadcast %16 : vector<1x32xf32> to vector<16x32xf32>
    %28 = arith.mulf %26, %27 : vector<16x32xf32>
    %29 = arith.truncf %28 : vector<16x32xf32> to vector<16x32xbf16>
    %c0_19 = arith.constant 0 : index
    %c0_20 = arith.constant 0 : index
    %c0_21 = arith.constant 0 : index
    %c0_22 = arith.constant 0 : index
    %30 = vector.load %arg10[%c0_19, %c0_20, %c0_21, %c0_22] : memref<1x2x32x96xbf16, #tpu.memory_space<vmem>>, vector<1x1x32x96xbf16>
    %31 = vector.shape_cast %30 : vector<1x1x32x96xbf16> to vector<32x96xbf16>
    %cst_23 = arith.constant dense<0.000000e+00> : vector<16x96xf32>
    %32 = tpu.matmul %29, %31, %cst_23 {dimension_numbers = #tpu.dot_dimension_numbers<[1], [0], [0], [1], [0, 0, 1, 1], [], []>} : vector<16x32xbf16>, vector<32x96xbf16>, vector<16x96xf32> -> vector<16x96xf32>
    %33 = vector.extract_strided_slice %32 {offsets = [0, 0], sizes = [16, 32], strides = [1, 1]} : vector<16x96xf32> to vector<16x32xf32>
    %34 = vector.extract_strided_slice %32 {offsets = [0, 32], sizes = [16, 32], strides = [1, 1]} : vector<16x96xf32> to vector<16x32xf32>
    %35 = vector.extract_strided_slice %32 {offsets = [0, 64], sizes = [16, 32], strides = [1, 1]} : vector<16x96xf32> to vector<16x32xf32>
    %36 = arith.mulf %33, %4 : vector<16x32xf32>
    %cst_24 = arith.constant dense<0.000000e+00> : vector<16x32xf32>
    %37 = tpu.matmul %33, %6, %cst_24 {dimension_numbers = #tpu.dot_dimension_numbers<[1], [0], [0], [1], [0, 0, 1, 1], [], []>} : vector<16x32xf32>, vector<32x32xf32>, vector<16x32xf32> -> vector<16x32xf32>
    %38 = arith.mulf %37, %5 : vector<16x32xf32>
    %39 = arith.addf %36, %38 : vector<16x32xf32>
    %40 = arith.mulf %34, %4 : vector<16x32xf32>
    %cst_25 = arith.constant dense<0.000000e+00> : vector<16x32xf32>
    %41 = tpu.matmul %34, %6, %cst_25 {dimension_numbers = #tpu.dot_dimension_numbers<[1], [0], [0], [1], [0, 0, 1, 1], [], []>} : vector<16x32xf32>, vector<32x32xf32>, vector<16x32xf32> -> vector<16x32xf32>
    %42 = arith.mulf %41, %5 : vector<16x32xf32>
    %43 = arith.addf %40, %42 : vector<16x32xf32>
    %44 = vector.extract_strided_slice %39 {offsets = [0, 0], sizes = [8, 32], strides = [1, 1]} : vector<16x32xf32> to vector<8x32xf32>
    %45 = vector.extract_strided_slice %43 {offsets = [0, 0], sizes = [8, 32], strides = [1, 1]} : vector<16x32xf32> to vector<8x32xf32>
    %46 = vector.extract_strided_slice %35 {offsets = [0, 0], sizes = [8, 32], strides = [1, 1]} : vector<16x32xf32> to vector<8x32xf32>
    %47 = vector.extract_strided_slice %44 {offsets = [0, 0], sizes = [8, 8], strides = [1, 1]} : vector<8x32xf32> to vector<8x8xf32>
    %48 = vector.extract_strided_slice %45 {offsets = [0, 0], sizes = [8, 8], strides = [1, 1]} : vector<8x32xf32> to vector<8x8xf32>
    %49 = vector.extract_strided_slice %46 {offsets = [0, 0], sizes = [8, 8], strides = [1, 1]} : vector<8x32xf32> to vector<8x8xf32>
    %cst_26 = arith.constant dense<0.000000e+00> : vector<8x8xf32>
    %50 = tpu.matmul %47, %48, %cst_26 {dimension_numbers = #tpu.dot_dimension_numbers<[1], [1], [0], [0], [0, 0, 1, 0], [], []>} : vector<8x8xf32>, vector<8x8xf32>, vector<8x8xf32> -> vector<8x8xf32>
    %cst_27 = arith.constant 0.353553385 : f32
    %51 = vector.broadcast %cst_27 : f32 to vector<8x8xf32>
    %52 = arith.mulf %50, %51 : vector<8x8xf32>
    %53 = arith.addf %52, %14 : vector<8x8xf32>
    %cst_28 = arith.constant dense<0xFF800000> : vector<8xf32>
    %54 = vector.multi_reduction <maximumf>, %53, %cst_28 [1] : vector<8x8xf32> to vector<8xf32>
    %55 = vector.shape_cast %54 : vector<8xf32> to vector<8x1xf32>
    %56 = vector.broadcast %55 : vector<8x1xf32> to vector<8x8xf32>
    %57 = arith.subf %53, %56 : vector<8x8xf32>
    %58 = math.exp %57 : vector<8x8xf32>
    %cst_29 = arith.constant dense<0.000000e+00> : vector<8xf32>
    %59 = vector.multi_reduction <add>, %58, %cst_29 [1] : vector<8x8xf32> to vector<8xf32>
    %60 = vector.shape_cast %59 : vector<8xf32> to vector<8x1xf32>
    %61 = vector.broadcast %60 : vector<8x1xf32> to vector<8x8xf32>
    %62 = arith.divf %58, %61 : vector<8x8xf32>
    %cst_30 = arith.constant dense<0.000000e+00> : vector<8x8xf32>
    %63 = tpu.matmul %62, %49, %cst_30 {dimension_numbers = #tpu.dot_dimension_numbers<[1], [0], [0], [1], [0, 0, 1, 1], [], []>} : vector<8x8xf32>, vector<8x8xf32>, vector<8x8xf32> -> vector<8x8xf32>
    %64 = vector.extract_strided_slice %44 {offsets = [0, 8], sizes = [8, 8], strides = [1, 1]} : vector<8x32xf32> to vector<8x8xf32>
    %65 = vector.extract_strided_slice %45 {offsets = [0, 8], sizes = [8, 8], strides = [1, 1]} : vector<8x32xf32> to vector<8x8xf32>
    %66 = vector.extract_strided_slice %46 {offsets = [0, 8], sizes = [8, 8], strides = [1, 1]} : vector<8x32xf32> to vector<8x8xf32>
    %cst_31 = arith.constant dense<0.000000e+00> : vector<8x8xf32>
    %67 = tpu.matmul %64, %65, %cst_31 {dimension_numbers = #tpu.dot_dimension_numbers<[1], [1], [0], [0], [0, 0, 1, 0], [], []>} : vector<8x8xf32>, vector<8x8xf32>, vector<8x8xf32> -> vector<8x8xf32>
    %cst_32 = arith.constant 0.353553385 : f32
    %68 = vector.broadcast %cst_32 : f32 to vector<8x8xf32>
    %69 = arith.mulf %67, %68 : vector<8x8xf32>
    %70 = arith.addf %69, %14 : vector<8x8xf32>
    %cst_33 = arith.constant dense<0xFF800000> : vector<8xf32>
    %71 = vector.multi_reduction <maximumf>, %70, %cst_33 [1] : vector<8x8xf32> to vector<8xf32>
    %72 = vector.shape_cast %71 : vector<8xf32> to vector<8x1xf32>
    %73 = vector.broadcast %72 : vector<8x1xf32> to vector<8x8xf32>
    %74 = arith.subf %70, %73 : vector<8x8xf32>
    %75 = math.exp %74 : vector<8x8xf32>
    %cst_34 = arith.constant dense<0.000000e+00> : vector<8xf32>
    %76 = vector.multi_reduction <add>, %75, %cst_34 [1] : vector<8x8xf32> to vector<8xf32>
    %77 = vector.shape_cast %76 : vector<8xf32> to vector<8x1xf32>
    %78 = vector.broadcast %77 : vector<8x1xf32> to vector<8x8xf32>
    %79 = arith.divf %75, %78 : vector<8x8xf32>
    %cst_35 = arith.constant dense<0.000000e+00> : vector<8x8xf32>
    %80 = tpu.matmul %79, %66, %cst_35 {dimension_numbers = #tpu.dot_dimension_numbers<[1], [0], [0], [1], [0, 0, 1, 1], [], []>} : vector<8x8xf32>, vector<8x8xf32>, vector<8x8xf32> -> vector<8x8xf32>
    %81 = vector.extract_strided_slice %44 {offsets = [0, 16], sizes = [8, 8], strides = [1, 1]} : vector<8x32xf32> to vector<8x8xf32>
    %82 = vector.extract_strided_slice %45 {offsets = [0, 16], sizes = [8, 8], strides = [1, 1]} : vector<8x32xf32> to vector<8x8xf32>
    %83 = vector.extract_strided_slice %46 {offsets = [0, 16], sizes = [8, 8], strides = [1, 1]} : vector<8x32xf32> to vector<8x8xf32>
    %cst_36 = arith.constant dense<0.000000e+00> : vector<8x8xf32>
    %84 = tpu.matmul %81, %82, %cst_36 {dimension_numbers = #tpu.dot_dimension_numbers<[1], [1], [0], [0], [0, 0, 1, 0], [], []>} : vector<8x8xf32>, vector<8x8xf32>, vector<8x8xf32> -> vector<8x8xf32>
    %cst_37 = arith.constant 0.353553385 : f32
    %85 = vector.broadcast %cst_37 : f32 to vector<8x8xf32>
    %86 = arith.mulf %84, %85 : vector<8x8xf32>
    %87 = arith.addf %86, %14 : vector<8x8xf32>
    %cst_38 = arith.constant dense<0xFF800000> : vector<8xf32>
    %88 = vector.multi_reduction <maximumf>, %87, %cst_38 [1] : vector<8x8xf32> to vector<8xf32>
    %89 = vector.shape_cast %88 : vector<8xf32> to vector<8x1xf32>
    %90 = vector.broadcast %89 : vector<8x1xf32> to vector<8x8xf32>
    %91 = arith.subf %87, %90 : vector<8x8xf32>
    %92 = math.exp %91 : vector<8x8xf32>
    %cst_39 = arith.constant dense<0.000000e+00> : vector<8xf32>
    %93 = vector.multi_reduction <add>, %92, %cst_39 [1] : vector<8x8xf32> to vector<8xf32>
    %94 = vector.shape_cast %93 : vector<8xf32> to vector<8x1xf32>
    %95 = vector.broadcast %94 : vector<8x1xf32> to vector<8x8xf32>
    %96 = arith.divf %92, %95 : vector<8x8xf32>
    %cst_40 = arith.constant dense<0.000000e+00> : vector<8x8xf32>
    %97 = tpu.matmul %96, %83, %cst_40 {dimension_numbers = #tpu.dot_dimension_numbers<[1], [0], [0], [1], [0, 0, 1, 1], [], []>} : vector<8x8xf32>, vector<8x8xf32>, vector<8x8xf32> -> vector<8x8xf32>
    %98 = vector.extract_strided_slice %44 {offsets = [0, 24], sizes = [8, 8], strides = [1, 1]} : vector<8x32xf32> to vector<8x8xf32>
    %99 = vector.extract_strided_slice %45 {offsets = [0, 24], sizes = [8, 8], strides = [1, 1]} : vector<8x32xf32> to vector<8x8xf32>
    %100 = vector.extract_strided_slice %46 {offsets = [0, 24], sizes = [8, 8], strides = [1, 1]} : vector<8x32xf32> to vector<8x8xf32>
    %cst_41 = arith.constant dense<0.000000e+00> : vector<8x8xf32>
    %101 = tpu.matmul %98, %99, %cst_41 {dimension_numbers = #tpu.dot_dimension_numbers<[1], [1], [0], [0], [0, 0, 1, 0], [], []>} : vector<8x8xf32>, vector<8x8xf32>, vector<8x8xf32> -> vector<8x8xf32>
    %cst_42 = arith.constant 0.353553385 : f32
    %102 = vector.broadcast %cst_42 : f32 to vector<8x8xf32>
    %103 = arith.mulf %101, %102 : vector<8x8xf32>
    %104 = arith.addf %103, %14 : vector<8x8xf32>
    %cst_43 = arith.constant dense<0xFF800000> : vector<8xf32>
    %105 = vector.multi_reduction <maximumf>, %104, %cst_43 [1] : vector<8x8xf32> to vector<8xf32>
    %106 = vector.shape_cast %105 : vector<8xf32> to vector<8x1xf32>
    %107 = vector.broadcast %106 : vector<8x1xf32> to vector<8x8xf32>
    %108 = arith.subf %104, %107 : vector<8x8xf32>
    %109 = math.exp %108 : vector<8x8xf32>
    %cst_44 = arith.constant dense<0.000000e+00> : vector<8xf32>
    %110 = vector.multi_reduction <add>, %109, %cst_44 [1] : vector<8x8xf32> to vector<8xf32>
    %111 = vector.shape_cast %110 : vector<8xf32> to vector<8x1xf32>
    %112 = vector.broadcast %111 : vector<8x1xf32> to vector<8x8xf32>
    %113 = arith.divf %109, %112 : vector<8x8xf32>
    %cst_45 = arith.constant dense<0.000000e+00> : vector<8x8xf32>
    %114 = tpu.matmul %113, %100, %cst_45 {dimension_numbers = #tpu.dot_dimension_numbers<[1], [0], [0], [1], [0, 0, 1, 1], [], []>} : vector<8x8xf32>, vector<8x8xf32>, vector<8x8xf32> -> vector<8x8xf32>
    %115 = tpu.concatenate %63, %80, %97, %114 in 1 : vector<8x8xf32>, vector<8x8xf32>, vector<8x8xf32>, vector<8x8xf32> -> vector<8x32xf32>
    %116 = vector.extract_strided_slice %39 {offsets = [8, 0], sizes = [8, 32], strides = [1, 1]} : vector<16x32xf32> to vector<8x32xf32>
    %117 = vector.extract_strided_slice %43 {offsets = [8, 0], sizes = [8, 32], strides = [1, 1]} : vector<16x32xf32> to vector<8x32xf32>
    %118 = vector.extract_strided_slice %35 {offsets = [8, 0], sizes = [8, 32], strides = [1, 1]} : vector<16x32xf32> to vector<8x32xf32>
    %119 = vector.extract_strided_slice %116 {offsets = [0, 0], sizes = [8, 8], strides = [1, 1]} : vector<8x32xf32> to vector<8x8xf32>
    %120 = vector.extract_strided_slice %117 {offsets = [0, 0], sizes = [8, 8], strides = [1, 1]} : vector<8x32xf32> to vector<8x8xf32>
    %121 = vector.extract_strided_slice %118 {offsets = [0, 0], sizes = [8, 8], strides = [1, 1]} : vector<8x32xf32> to vector<8x8xf32>
    %cst_46 = arith.constant dense<0.000000e+00> : vector<8x8xf32>
    %122 = tpu.matmul %119, %120, %cst_46 {dimension_numbers = #tpu.dot_dimension_numbers<[1], [1], [0], [0], [0, 0, 1, 0], [], []>} : vector<8x8xf32>, vector<8x8xf32>, vector<8x8xf32> -> vector<8x8xf32>
    %cst_47 = arith.constant 0.353553385 : f32
    %123 = vector.broadcast %cst_47 : f32 to vector<8x8xf32>
    %124 = arith.mulf %122, %123 : vector<8x8xf32>
    %125 = arith.addf %124, %14 : vector<8x8xf32>
    %cst_48 = arith.constant dense<0xFF800000> : vector<8xf32>
    %126 = vector.multi_reduction <maximumf>, %125, %cst_48 [1] : vector<8x8xf32> to vector<8xf32>
    %127 = vector.shape_cast %126 : vector<8xf32> to vector<8x1xf32>
    %128 = vector.broadcast %127 : vector<8x1xf32> to vector<8x8xf32>
    %129 = arith.subf %125, %128 : vector<8x8xf32>
    %130 = math.exp %129 : vector<8x8xf32>
    %cst_49 = arith.constant dense<0.000000e+00> : vector<8xf32>
    %131 = vector.multi_reduction <add>, %130, %cst_49 [1] : vector<8x8xf32> to vector<8xf32>
    %132 = vector.shape_cast %131 : vector<8xf32> to vector<8x1xf32>
    %133 = vector.broadcast %132 : vector<8x1xf32> to vector<8x8xf32>
    %134 = arith.divf %130, %133 : vector<8x8xf32>
    %cst_50 = arith.constant dense<0.000000e+00> : vector<8x8xf32>
    %135 = tpu.matmul %134, %121, %cst_50 {dimension_numbers = #tpu.dot_dimension_numbers<[1], [0], [0], [1], [0, 0, 1, 1], [], []>} : vector<8x8xf32>, vector<8x8xf32>, vector<8x8xf32> -> vector<8x8xf32>
    %136 = vector.extract_strided_slice %116 {offsets = [0, 8], sizes = [8, 8], strides = [1, 1]} : vector<8x32xf32> to vector<8x8xf32>
    %137 = vector.extract_strided_slice %117 {offsets = [0, 8], sizes = [8, 8], strides = [1, 1]} : vector<8x32xf32> to vector<8x8xf32>
    %138 = vector.extract_strided_slice %118 {offsets = [0, 8], sizes = [8, 8], strides = [1, 1]} : vector<8x32xf32> to vector<8x8xf32>
    %cst_51 = arith.constant dense<0.000000e+00> : vector<8x8xf32>
    %139 = tpu.matmul %136, %137, %cst_51 {dimension_numbers = #tpu.dot_dimension_numbers<[1], [1], [0], [0], [0, 0, 1, 0], [], []>} : vector<8x8xf32>, vector<8x8xf32>, vector<8x8xf32> -> vector<8x8xf32>
    %cst_52 = arith.constant 0.353553385 : f32
    %140 = vector.broadcast %cst_52 : f32 to vector<8x8xf32>
    %141 = arith.mulf %139, %140 : vector<8x8xf32>
    %142 = arith.addf %141, %14 : vector<8x8xf32>
    %cst_53 = arith.constant dense<0xFF800000> : vector<8xf32>
    %143 = vector.multi_reduction <maximumf>, %142, %cst_53 [1] : vector<8x8xf32> to vector<8xf32>
    %144 = vector.shape_cast %143 : vector<8xf32> to vector<8x1xf32>
    %145 = vector.broadcast %144 : vector<8x1xf32> to vector<8x8xf32>
    %146 = arith.subf %142, %145 : vector<8x8xf32>
    %147 = math.exp %146 : vector<8x8xf32>
    %cst_54 = arith.constant dense<0.000000e+00> : vector<8xf32>
    %148 = vector.multi_reduction <add>, %147, %cst_54 [1] : vector<8x8xf32> to vector<8xf32>
    %149 = vector.shape_cast %148 : vector<8xf32> to vector<8x1xf32>
    %150 = vector.broadcast %149 : vector<8x1xf32> to vector<8x8xf32>
    %151 = arith.divf %147, %150 : vector<8x8xf32>
    %cst_55 = arith.constant dense<0.000000e+00> : vector<8x8xf32>
    %152 = tpu.matmul %151, %138, %cst_55 {dimension_numbers = #tpu.dot_dimension_numbers<[1], [0], [0], [1], [0, 0, 1, 1], [], []>} : vector<8x8xf32>, vector<8x8xf32>, vector<8x8xf32> -> vector<8x8xf32>
    %153 = vector.extract_strided_slice %116 {offsets = [0, 16], sizes = [8, 8], strides = [1, 1]} : vector<8x32xf32> to vector<8x8xf32>
    %154 = vector.extract_strided_slice %117 {offsets = [0, 16], sizes = [8, 8], strides = [1, 1]} : vector<8x32xf32> to vector<8x8xf32>
    %155 = vector.extract_strided_slice %118 {offsets = [0, 16], sizes = [8, 8], strides = [1, 1]} : vector<8x32xf32> to vector<8x8xf32>
    %cst_56 = arith.constant dense<0.000000e+00> : vector<8x8xf32>
    %156 = tpu.matmul %153, %154, %cst_56 {dimension_numbers = #tpu.dot_dimension_numbers<[1], [1], [0], [0], [0, 0, 1, 0], [], []>} : vector<8x8xf32>, vector<8x8xf32>, vector<8x8xf32> -> vector<8x8xf32>
    %cst_57 = arith.constant 0.353553385 : f32
    %157 = vector.broadcast %cst_57 : f32 to vector<8x8xf32>
    %158 = arith.mulf %156, %157 : vector<8x8xf32>
    %159 = arith.addf %158, %14 : vector<8x8xf32>
    %cst_58 = arith.constant dense<0xFF800000> : vector<8xf32>
    %160 = vector.multi_reduction <maximumf>, %159, %cst_58 [1] : vector<8x8xf32> to vector<8xf32>
    %161 = vector.shape_cast %160 : vector<8xf32> to vector<8x1xf32>
    %162 = vector.broadcast %161 : vector<8x1xf32> to vector<8x8xf32>
    %163 = arith.subf %159, %162 : vector<8x8xf32>
    %164 = math.exp %163 : vector<8x8xf32>
    %cst_59 = arith.constant dense<0.000000e+00> : vector<8xf32>
    %165 = vector.multi_reduction <add>, %164, %cst_59 [1] : vector<8x8xf32> to vector<8xf32>
    %166 = vector.shape_cast %165 : vector<8xf32> to vector<8x1xf32>
    %167 = vector.broadcast %166 : vector<8x1xf32> to vector<8x8xf32>
    %168 = arith.divf %164, %167 : vector<8x8xf32>
    %cst_60 = arith.constant dense<0.000000e+00> : vector<8x8xf32>
    %169 = tpu.matmul %168, %155, %cst_60 {dimension_numbers = #tpu.dot_dimension_numbers<[1], [0], [0], [1], [0, 0, 1, 1], [], []>} : vector<8x8xf32>, vector<8x8xf32>, vector<8x8xf32> -> vector<8x8xf32>
    %170 = vector.extract_strided_slice %116 {offsets = [0, 24], sizes = [8, 8], strides = [1, 1]} : vector<8x32xf32> to vector<8x8xf32>
    %171 = vector.extract_strided_slice %117 {offsets = [0, 24], sizes = [8, 8], strides = [1, 1]} : vector<8x32xf32> to vector<8x8xf32>
    %172 = vector.extract_strided_slice %118 {offsets = [0, 24], sizes = [8, 8], strides = [1, 1]} : vector<8x32xf32> to vector<8x8xf32>
    %cst_61 = arith.constant dense<0.000000e+00> : vector<8x8xf32>
    %173 = tpu.matmul %170, %171, %cst_61 {dimension_numbers = #tpu.dot_dimension_numbers<[1], [1], [0], [0], [0, 0, 1, 0], [], []>} : vector<8x8xf32>, vector<8x8xf32>, vector<8x8xf32> -> vector<8x8xf32>
    %cst_62 = arith.constant 0.353553385 : f32
    %174 = vector.broadcast %cst_62 : f32 to vector<8x8xf32>
    %175 = arith.mulf %173, %174 : vector<8x8xf32>
    %176 = arith.addf %175, %14 : vector<8x8xf32>
    %cst_63 = arith.constant dense<0xFF800000> : vector<8xf32>
    %177 = vector.multi_reduction <maximumf>, %176, %cst_63 [1] : vector<8x8xf32> to vector<8xf32>
    %178 = vector.shape_cast %177 : vector<8xf32> to vector<8x1xf32>
    %179 = vector.broadcast %178 : vector<8x1xf32> to vector<8x8xf32>
    %180 = arith.subf %176, %179 : vector<8x8xf32>
    %181 = math.exp %180 : vector<8x8xf32>
    %cst_64 = arith.constant dense<0.000000e+00> : vector<8xf32>
    %182 = vector.multi_reduction <add>, %181, %cst_64 [1] : vector<8x8xf32> to vector<8xf32>
    %183 = vector.shape_cast %182 : vector<8xf32> to vector<8x1xf32>
    %184 = vector.broadcast %183 : vector<8x1xf32> to vector<8x8xf32>
    %185 = arith.divf %181, %184 : vector<8x8xf32>
    %cst_65 = arith.constant dense<0.000000e+00> : vector<8x8xf32>
    %186 = tpu.matmul %185, %172, %cst_65 {dimension_numbers = #tpu.dot_dimension_numbers<[1], [0], [0], [1], [0, 0, 1, 1], [], []>} : vector<8x8xf32>, vector<8x8xf32>, vector<8x8xf32> -> vector<8x8xf32>
    %187 = tpu.concatenate %135, %152, %169, %186 in 1 : vector<8x8xf32>, vector<8x8xf32>, vector<8x8xf32>, vector<8x8xf32> -> vector<8x32xf32>
    %188 = tpu.concatenate %115, %187 in 0 : vector<8x32xf32>, vector<8x32xf32> -> vector<16x32xf32>
    %189 = arith.truncf %188 : vector<16x32xf32> to vector<16x32xbf16>
    %c0_66 = arith.constant 0 : index
    %c0_67 = arith.constant 0 : index
    %c0_68 = arith.constant 0 : index
    %c0_69 = arith.constant 0 : index
    %190 = vector.load %arg11[%c0_66, %c0_67, %c0_68, %c0_69] : memref<1x2x32x32xbf16, #tpu.memory_space<vmem>>, vector<1x1x32x32xbf16>
    %191 = vector.shape_cast %190 : vector<1x1x32x32xbf16> to vector<32x32xbf16>
    %cst_70 = arith.constant dense<0.000000e+00> : vector<16x32xf32>
    %192 = tpu.matmul %189, %191, %cst_70 {dimension_numbers = #tpu.dot_dimension_numbers<[1], [0], [0], [1], [0, 0, 1, 1], [], []>} : vector<16x32xbf16>, vector<32x32xbf16>, vector<16x32xf32> -> vector<16x32xf32>
    %193 = arith.addf %3, %192 : vector<16x32xf32>
    %c0_71 = arith.constant 0 : index
    %c0_72 = arith.constant 0 : index
    %c0_73 = arith.constant 0 : index
    %c0_74 = arith.constant 0 : index
    %194 = vector.load %arg12[%c0_71, %c0_72, %c0_73, %c0_74] : memref<1x2x1x32xf32, #tpu.memory_space<vmem>>, vector<1x1x1x32xf32>
    %195 = vector.shape_cast %194 : vector<1x1x1x32xf32> to vector<1x32xf32>
    %196 = arith.mulf %193, %193 : vector<16x32xf32>
    %cst_75 = arith.constant dense<0.000000e+00> : vector<16xf32>
    %197 = vector.multi_reduction <add>, %196, %cst_75 [1] : vector<16x32xf32> to vector<16xf32>
    %198 = vector.shape_cast %197 : vector<16xf32> to vector<16x1xf32>
    %cst_76 = arith.constant 3.200000e+01 : f32
    %199 = vector.broadcast %cst_76 : f32 to vector<16x1xf32>
    %200 = arith.divf %198, %199 : vector<16x1xf32>
    %cst_77 = arith.constant 9.99999974E-6 : f32
    %201 = vector.broadcast %cst_77 : f32 to vector<16x1xf32>
    %202 = arith.addf %200, %201 : vector<16x1xf32>
    %203 = math.rsqrt %202 : vector<16x1xf32>
    %204 = vector.broadcast %203 : vector<16x1xf32> to vector<16x32xf32>
    %205 = arith.mulf %193, %204 : vector<16x32xf32>
    %206 = vector.broadcast %195 : vector<1x32xf32> to vector<16x32xf32>
    %207 = arith.mulf %205, %206 : vector<16x32xf32>
    %208 = arith.truncf %207 : vector<16x32xf32> to vector<16x32xbf16>
    %c0_78 = arith.constant 0 : index
    %c0_79 = arith.constant 0 : index
    %c0_80 = arith.constant 0 : index
    %c0_81 = arith.constant 0 : index
    %209 = vector.load %arg13[%c0_78, %c0_79, %c0_80, %c0_81] : memref<1x2x32x192xbf16, #tpu.memory_space<vmem>>, vector<1x1x32x192xbf16>
    %210 = vector.shape_cast %209 : vector<1x1x32x192xbf16> to vector<32x192xbf16>
    %cst_82 = arith.constant dense<0.000000e+00> : vector<16x192xf32>
    %211 = tpu.matmul %208, %210, %cst_82 {dimension_numbers = #tpu.dot_dimension_numbers<[1], [0], [0], [1], [0, 0, 1, 1], [], []>} : vector<16x32xbf16>, vector<32x192xbf16>, vector<16x192xf32> -> vector<16x192xf32>
    %212 = vector.extract_strided_slice %211 {offsets = [0, 0], sizes = [16, 96], strides = [1, 1]} : vector<16x192xf32> to vector<16x96xf32>
    %213 = vector.extract_strided_slice %211 {offsets = [0, 96], sizes = [16, 96], strides = [1, 1]} : vector<16x192xf32> to vector<16x96xf32>
    %214 = arith.negf %212 : vector<16x96xf32>
    %215 = math.exp %214 : vector<16x96xf32>
    %cst_83 = arith.constant 1.000000e+00 : f32
    %216 = vector.broadcast %cst_83 : f32 to vector<16x96xf32>
    %217 = arith.addf %216, %215 : vector<16x96xf32>
    %218 = arith.divf %216, %217 : vector<16x96xf32>
    %219 = arith.mulf %212, %218 : vector<16x96xf32>
    %220 = arith.mulf %219, %213 : vector<16x96xf32>
    %221 = arith.truncf %220 : vector<16x96xf32> to vector<16x96xbf16>
    %c0_84 = arith.constant 0 : index
    %c0_85 = arith.constant 0 : index
    %c0_86 = arith.constant 0 : index
    %c0_87 = arith.constant 0 : index
    %222 = vector.load %arg14[%c0_84, %c0_85, %c0_86, %c0_87] : memref<1x2x96x32xbf16, #tpu.memory_space<vmem>>, vector<1x1x96x32xbf16>
    %223 = vector.shape_cast %222 : vector<1x1x96x32xbf16> to vector<96x32xbf16>
    %cst_88 = arith.constant dense<0.000000e+00> : vector<16x32xf32>
    %224 = tpu.matmul %221, %223, %cst_88 {dimension_numbers = #tpu.dot_dimension_numbers<[1], [0], [0], [1], [0, 0, 1, 1], [], []>} : vector<16x96xbf16>, vector<96x32xbf16>, vector<16x32xf32> -> vector<16x32xf32>
    %225 = arith.addf %193, %224 : vector<16x32xf32>
    %c0_89 = arith.constant 0 : index
    %c1 = arith.constant 1 : index
    %c0_90 = arith.constant 0 : index
    %c0_91 = arith.constant 0 : index
    %226 = vector.load %arg9[%c0_89, %c1, %c0_90, %c0_91] : memref<1x2x1x32xf32, #tpu.memory_space<vmem>>, vector<1x1x1x32xf32>
    %227 = vector.shape_cast %226 : vector<1x1x1x32xf32> to vector<1x32xf32>
    %228 = arith.mulf %225, %225 : vector<16x32xf32>
    %cst_92 = arith.constant dense<0.000000e+00> : vector<16xf32>
    %229 = vector.multi_reduction <add>, %228, %cst_92 [1] : vector<16x32xf32> to vector<16xf32>
    %230 = vector.shape_cast %229 : vector<16xf32> to vector<16x1xf32>
    %cst_93 = arith.constant 3.200000e+01 : f32
    %231 = vector.broadcast %cst_93 : f32 to vector<16x1xf32>
    %232 = arith.divf %230, %231 : vector<16x1xf32>
    %cst_94 = arith.constant 9.99999974E-6 : f32
    %233 = vector.broadcast %cst_94 : f32 to vector<16x1xf32>
    %234 = arith.addf %232, %233 : vector<16x1xf32>
    %235 = math.rsqrt %234 : vector<16x1xf32>
    %236 = vector.broadcast %235 : vector<16x1xf32> to vector<16x32xf32>
    %237 = arith.mulf %225, %236 : vector<16x32xf32>
    %238 = vector.broadcast %227 : vector<1x32xf32> to vector<16x32xf32>
    %239 = arith.mulf %237, %238 : vector<16x32xf32>
    %240 = arith.truncf %239 : vector<16x32xf32> to vector<16x32xbf16>
    %c0_95 = arith.constant 0 : index
    %c1_96 = arith.constant 1 : index
    %c0_97 = arith.constant 0 : index
    %c0_98 = arith.constant 0 : index
    %241 = vector.load %arg10[%c0_95, %c1_96, %c0_97, %c0_98] : memref<1x2x32x96xbf16, #tpu.memory_space<vmem>>, vector<1x1x32x96xbf16>
    %242 = vector.shape_cast %241 : vector<1x1x32x96xbf16> to vector<32x96xbf16>
    %cst_99 = arith.constant dense<0.000000e+00> : vector<16x96xf32>
    %243 = tpu.matmul %240, %242, %cst_99 {dimension_numbers = #tpu.dot_dimension_numbers<[1], [0], [0], [1], [0, 0, 1, 1], [], []>} : vector<16x32xbf16>, vector<32x96xbf16>, vector<16x96xf32> -> vector<16x96xf32>
    %244 = vector.extract_strided_slice %243 {offsets = [0, 0], sizes = [16, 32], strides = [1, 1]} : vector<16x96xf32> to vector<16x32xf32>
    %245 = vector.extract_strided_slice %243 {offsets = [0, 32], sizes = [16, 32], strides = [1, 1]} : vector<16x96xf32> to vector<16x32xf32>
    %246 = vector.extract_strided_slice %243 {offsets = [0, 64], sizes = [16, 32], strides = [1, 1]} : vector<16x96xf32> to vector<16x32xf32>
    %247 = arith.mulf %244, %4 : vector<16x32xf32>
    %cst_100 = arith.constant dense<0.000000e+00> : vector<16x32xf32>
    %248 = tpu.matmul %244, %6, %cst_100 {dimension_numbers = #tpu.dot_dimension_numbers<[1], [0], [0], [1], [0, 0, 1, 1], [], []>} : vector<16x32xf32>, vector<32x32xf32>, vector<16x32xf32> -> vector<16x32xf32>
    %249 = arith.mulf %248, %5 : vector<16x32xf32>
    %250 = arith.addf %247, %249 : vector<16x32xf32>
    %251 = arith.mulf %245, %4 : vector<16x32xf32>
    %cst_101 = arith.constant dense<0.000000e+00> : vector<16x32xf32>
    %252 = tpu.matmul %245, %6, %cst_101 {dimension_numbers = #tpu.dot_dimension_numbers<[1], [0], [0], [1], [0, 0, 1, 1], [], []>} : vector<16x32xf32>, vector<32x32xf32>, vector<16x32xf32> -> vector<16x32xf32>
    %253 = arith.mulf %252, %5 : vector<16x32xf32>
    %254 = arith.addf %251, %253 : vector<16x32xf32>
    %255 = vector.extract_strided_slice %250 {offsets = [0, 0], sizes = [8, 32], strides = [1, 1]} : vector<16x32xf32> to vector<8x32xf32>
    %256 = vector.extract_strided_slice %254 {offsets = [0, 0], sizes = [8, 32], strides = [1, 1]} : vector<16x32xf32> to vector<8x32xf32>
    %257 = vector.extract_strided_slice %246 {offsets = [0, 0], sizes = [8, 32], strides = [1, 1]} : vector<16x32xf32> to vector<8x32xf32>
    %258 = vector.extract_strided_slice %255 {offsets = [0, 0], sizes = [8, 8], strides = [1, 1]} : vector<8x32xf32> to vector<8x8xf32>
    %259 = vector.extract_strided_slice %256 {offsets = [0, 0], sizes = [8, 8], strides = [1, 1]} : vector<8x32xf32> to vector<8x8xf32>
    %260 = vector.extract_strided_slice %257 {offsets = [0, 0], sizes = [8, 8], strides = [1, 1]} : vector<8x32xf32> to vector<8x8xf32>
    %cst_102 = arith.constant dense<0.000000e+00> : vector<8x8xf32>
    %261 = tpu.matmul %258, %259, %cst_102 {dimension_numbers = #tpu.dot_dimension_numbers<[1], [1], [0], [0], [0, 0, 1, 0], [], []>} : vector<8x8xf32>, vector<8x8xf32>, vector<8x8xf32> -> vector<8x8xf32>
    %cst_103 = arith.constant 0.353553385 : f32
    %262 = vector.broadcast %cst_103 : f32 to vector<8x8xf32>
    %263 = arith.mulf %261, %262 : vector<8x8xf32>
    %264 = arith.addf %263, %14 : vector<8x8xf32>
    %cst_104 = arith.constant dense<0xFF800000> : vector<8xf32>
    %265 = vector.multi_reduction <maximumf>, %264, %cst_104 [1] : vector<8x8xf32> to vector<8xf32>
    %266 = vector.shape_cast %265 : vector<8xf32> to vector<8x1xf32>
    %267 = vector.broadcast %266 : vector<8x1xf32> to vector<8x8xf32>
    %268 = arith.subf %264, %267 : vector<8x8xf32>
    %269 = math.exp %268 : vector<8x8xf32>
    %cst_105 = arith.constant dense<0.000000e+00> : vector<8xf32>
    %270 = vector.multi_reduction <add>, %269, %cst_105 [1] : vector<8x8xf32> to vector<8xf32>
    %271 = vector.shape_cast %270 : vector<8xf32> to vector<8x1xf32>
    %272 = vector.broadcast %271 : vector<8x1xf32> to vector<8x8xf32>
    %273 = arith.divf %269, %272 : vector<8x8xf32>
    %cst_106 = arith.constant dense<0.000000e+00> : vector<8x8xf32>
    %274 = tpu.matmul %273, %260, %cst_106 {dimension_numbers = #tpu.dot_dimension_numbers<[1], [0], [0], [1], [0, 0, 1, 1], [], []>} : vector<8x8xf32>, vector<8x8xf32>, vector<8x8xf32> -> vector<8x8xf32>
    %275 = vector.extract_strided_slice %255 {offsets = [0, 8], sizes = [8, 8], strides = [1, 1]} : vector<8x32xf32> to vector<8x8xf32>
    %276 = vector.extract_strided_slice %256 {offsets = [0, 8], sizes = [8, 8], strides = [1, 1]} : vector<8x32xf32> to vector<8x8xf32>
    %277 = vector.extract_strided_slice %257 {offsets = [0, 8], sizes = [8, 8], strides = [1, 1]} : vector<8x32xf32> to vector<8x8xf32>
    %cst_107 = arith.constant dense<0.000000e+00> : vector<8x8xf32>
    %278 = tpu.matmul %275, %276, %cst_107 {dimension_numbers = #tpu.dot_dimension_numbers<[1], [1], [0], [0], [0, 0, 1, 0], [], []>} : vector<8x8xf32>, vector<8x8xf32>, vector<8x8xf32> -> vector<8x8xf32>
    %cst_108 = arith.constant 0.353553385 : f32
    %279 = vector.broadcast %cst_108 : f32 to vector<8x8xf32>
    %280 = arith.mulf %278, %279 : vector<8x8xf32>
    %281 = arith.addf %280, %14 : vector<8x8xf32>
    %cst_109 = arith.constant dense<0xFF800000> : vector<8xf32>
    %282 = vector.multi_reduction <maximumf>, %281, %cst_109 [1] : vector<8x8xf32> to vector<8xf32>
    %283 = vector.shape_cast %282 : vector<8xf32> to vector<8x1xf32>
    %284 = vector.broadcast %283 : vector<8x1xf32> to vector<8x8xf32>
    %285 = arith.subf %281, %284 : vector<8x8xf32>
    %286 = math.exp %285 : vector<8x8xf32>
    %cst_110 = arith.constant dense<0.000000e+00> : vector<8xf32>
    %287 = vector.multi_reduction <add>, %286, %cst_110 [1] : vector<8x8xf32> to vector<8xf32>
    %288 = vector.shape_cast %287 : vector<8xf32> to vector<8x1xf32>
    %289 = vector.broadcast %288 : vector<8x1xf32> to vector<8x8xf32>
    %290 = arith.divf %286, %289 : vector<8x8xf32>
    %cst_111 = arith.constant dense<0.000000e+00> : vector<8x8xf32>
    %291 = tpu.matmul %290, %277, %cst_111 {dimension_numbers = #tpu.dot_dimension_numbers<[1], [0], [0], [1], [0, 0, 1, 1], [], []>} : vector<8x8xf32>, vector<8x8xf32>, vector<8x8xf32> -> vector<8x8xf32>
    %292 = vector.extract_strided_slice %255 {offsets = [0, 16], sizes = [8, 8], strides = [1, 1]} : vector<8x32xf32> to vector<8x8xf32>
    %293 = vector.extract_strided_slice %256 {offsets = [0, 16], sizes = [8, 8], strides = [1, 1]} : vector<8x32xf32> to vector<8x8xf32>
    %294 = vector.extract_strided_slice %257 {offsets = [0, 16], sizes = [8, 8], strides = [1, 1]} : vector<8x32xf32> to vector<8x8xf32>
    %cst_112 = arith.constant dense<0.000000e+00> : vector<8x8xf32>
    %295 = tpu.matmul %292, %293, %cst_112 {dimension_numbers = #tpu.dot_dimension_numbers<[1], [1], [0], [0], [0, 0, 1, 0], [], []>} : vector<8x8xf32>, vector<8x8xf32>, vector<8x8xf32> -> vector<8x8xf32>
    %cst_113 = arith.constant 0.353553385 : f32
    %296 = vector.broadcast %cst_113 : f32 to vector<8x8xf32>
    %297 = arith.mulf %295, %296 : vector<8x8xf32>
    %298 = arith.addf %297, %14 : vector<8x8xf32>
    %cst_114 = arith.constant dense<0xFF800000> : vector<8xf32>
    %299 = vector.multi_reduction <maximumf>, %298, %cst_114 [1] : vector<8x8xf32> to vector<8xf32>
    %300 = vector.shape_cast %299 : vector<8xf32> to vector<8x1xf32>
    %301 = vector.broadcast %300 : vector<8x1xf32> to vector<8x8xf32>
    %302 = arith.subf %298, %301 : vector<8x8xf32>
    %303 = math.exp %302 : vector<8x8xf32>
    %cst_115 = arith.constant dense<0.000000e+00> : vector<8xf32>
    %304 = vector.multi_reduction <add>, %303, %cst_115 [1] : vector<8x8xf32> to vector<8xf32>
    %305 = vector.shape_cast %304 : vector<8xf32> to vector<8x1xf32>
    %306 = vector.broadcast %305 : vector<8x1xf32> to vector<8x8xf32>
    %307 = arith.divf %303, %306 : vector<8x8xf32>
    %cst_116 = arith.constant dense<0.000000e+00> : vector<8x8xf32>
    %308 = tpu.matmul %307, %294, %cst_116 {dimension_numbers = #tpu.dot_dimension_numbers<[1], [0], [0], [1], [0, 0, 1, 1], [], []>} : vector<8x8xf32>, vector<8x8xf32>, vector<8x8xf32> -> vector<8x8xf32>
    %309 = vector.extract_strided_slice %255 {offsets = [0, 24], sizes = [8, 8], strides = [1, 1]} : vector<8x32xf32> to vector<8x8xf32>
    %310 = vector.extract_strided_slice %256 {offsets = [0, 24], sizes = [8, 8], strides = [1, 1]} : vector<8x32xf32> to vector<8x8xf32>
    %311 = vector.extract_strided_slice %257 {offsets = [0, 24], sizes = [8, 8], strides = [1, 1]} : vector<8x32xf32> to vector<8x8xf32>
    %cst_117 = arith.constant dense<0.000000e+00> : vector<8x8xf32>
    %312 = tpu.matmul %309, %310, %cst_117 {dimension_numbers = #tpu.dot_dimension_numbers<[1], [1], [0], [0], [0, 0, 1, 0], [], []>} : vector<8x8xf32>, vector<8x8xf32>, vector<8x8xf32> -> vector<8x8xf32>
    %cst_118 = arith.constant 0.353553385 : f32
    %313 = vector.broadcast %cst_118 : f32 to vector<8x8xf32>
    %314 = arith.mulf %312, %313 : vector<8x8xf32>
    %315 = arith.addf %314, %14 : vector<8x8xf32>
    %cst_119 = arith.constant dense<0xFF800000> : vector<8xf32>
    %316 = vector.multi_reduction <maximumf>, %315, %cst_119 [1] : vector<8x8xf32> to vector<8xf32>
    %317 = vector.shape_cast %316 : vector<8xf32> to vector<8x1xf32>
    %318 = vector.broadcast %317 : vector<8x1xf32> to vector<8x8xf32>
    %319 = arith.subf %315, %318 : vector<8x8xf32>
    %320 = math.exp %319 : vector<8x8xf32>
    %cst_120 = arith.constant dense<0.000000e+00> : vector<8xf32>
    %321 = vector.multi_reduction <add>, %320, %cst_120 [1] : vector<8x8xf32> to vector<8xf32>
    %322 = vector.shape_cast %321 : vector<8xf32> to vector<8x1xf32>
    %323 = vector.broadcast %322 : vector<8x1xf32> to vector<8x8xf32>
    %324 = arith.divf %320, %323 : vector<8x8xf32>
    %cst_121 = arith.constant dense<0.000000e+00> : vector<8x8xf32>
    %325 = tpu.matmul %324, %311, %cst_121 {dimension_numbers = #tpu.dot_dimension_numbers<[1], [0], [0], [1], [0, 0, 1, 1], [], []>} : vector<8x8xf32>, vector<8x8xf32>, vector<8x8xf32> -> vector<8x8xf32>
    %326 = tpu.concatenate %274, %291, %308, %325 in 1 : vector<8x8xf32>, vector<8x8xf32>, vector<8x8xf32>, vector<8x8xf32> -> vector<8x32xf32>
    %327 = vector.extract_strided_slice %250 {offsets = [8, 0], sizes = [8, 32], strides = [1, 1]} : vector<16x32xf32> to vector<8x32xf32>
    %328 = vector.extract_strided_slice %254 {offsets = [8, 0], sizes = [8, 32], strides = [1, 1]} : vector<16x32xf32> to vector<8x32xf32>
    %329 = vector.extract_strided_slice %246 {offsets = [8, 0], sizes = [8, 32], strides = [1, 1]} : vector<16x32xf32> to vector<8x32xf32>
    %330 = vector.extract_strided_slice %327 {offsets = [0, 0], sizes = [8, 8], strides = [1, 1]} : vector<8x32xf32> to vector<8x8xf32>
    %331 = vector.extract_strided_slice %328 {offsets = [0, 0], sizes = [8, 8], strides = [1, 1]} : vector<8x32xf32> to vector<8x8xf32>
    %332 = vector.extract_strided_slice %329 {offsets = [0, 0], sizes = [8, 8], strides = [1, 1]} : vector<8x32xf32> to vector<8x8xf32>
    %cst_122 = arith.constant dense<0.000000e+00> : vector<8x8xf32>
    %333 = tpu.matmul %330, %331, %cst_122 {dimension_numbers = #tpu.dot_dimension_numbers<[1], [1], [0], [0], [0, 0, 1, 0], [], []>} : vector<8x8xf32>, vector<8x8xf32>, vector<8x8xf32> -> vector<8x8xf32>
    %cst_123 = arith.constant 0.353553385 : f32
    %334 = vector.broadcast %cst_123 : f32 to vector<8x8xf32>
    %335 = arith.mulf %333, %334 : vector<8x8xf32>
    %336 = arith.addf %335, %14 : vector<8x8xf32>
    %cst_124 = arith.constant dense<0xFF800000> : vector<8xf32>
    %337 = vector.multi_reduction <maximumf>, %336, %cst_124 [1] : vector<8x8xf32> to vector<8xf32>
    %338 = vector.shape_cast %337 : vector<8xf32> to vector<8x1xf32>
    %339 = vector.broadcast %338 : vector<8x1xf32> to vector<8x8xf32>
    %340 = arith.subf %336, %339 : vector<8x8xf32>
    %341 = math.exp %340 : vector<8x8xf32>
    %cst_125 = arith.constant dense<0.000000e+00> : vector<8xf32>
    %342 = vector.multi_reduction <add>, %341, %cst_125 [1] : vector<8x8xf32> to vector<8xf32>
    %343 = vector.shape_cast %342 : vector<8xf32> to vector<8x1xf32>
    %344 = vector.broadcast %343 : vector<8x1xf32> to vector<8x8xf32>
    %345 = arith.divf %341, %344 : vector<8x8xf32>
    %cst_126 = arith.constant dense<0.000000e+00> : vector<8x8xf32>
    %346 = tpu.matmul %345, %332, %cst_126 {dimension_numbers = #tpu.dot_dimension_numbers<[1], [0], [0], [1], [0, 0, 1, 1], [], []>} : vector<8x8xf32>, vector<8x8xf32>, vector<8x8xf32> -> vector<8x8xf32>
    %347 = vector.extract_strided_slice %327 {offsets = [0, 8], sizes = [8, 8], strides = [1, 1]} : vector<8x32xf32> to vector<8x8xf32>
    %348 = vector.extract_strided_slice %328 {offsets = [0, 8], sizes = [8, 8], strides = [1, 1]} : vector<8x32xf32> to vector<8x8xf32>
    %349 = vector.extract_strided_slice %329 {offsets = [0, 8], sizes = [8, 8], strides = [1, 1]} : vector<8x32xf32> to vector<8x8xf32>
    %cst_127 = arith.constant dense<0.000000e+00> : vector<8x8xf32>
    %350 = tpu.matmul %347, %348, %cst_127 {dimension_numbers = #tpu.dot_dimension_numbers<[1], [1], [0], [0], [0, 0, 1, 0], [], []>} : vector<8x8xf32>, vector<8x8xf32>, vector<8x8xf32> -> vector<8x8xf32>
    %cst_128 = arith.constant 0.353553385 : f32
    %351 = vector.broadcast %cst_128 : f32 to vector<8x8xf32>
    %352 = arith.mulf %350, %351 : vector<8x8xf32>
    %353 = arith.addf %352, %14 : vector<8x8xf32>
    %cst_129 = arith.constant dense<0xFF800000> : vector<8xf32>
    %354 = vector.multi_reduction <maximumf>, %353, %cst_129 [1] : vector<8x8xf32> to vector<8xf32>
    %355 = vector.shape_cast %354 : vector<8xf32> to vector<8x1xf32>
    %356 = vector.broadcast %355 : vector<8x1xf32> to vector<8x8xf32>
    %357 = arith.subf %353, %356 : vector<8x8xf32>
    %358 = math.exp %357 : vector<8x8xf32>
    %cst_130 = arith.constant dense<0.000000e+00> : vector<8xf32>
    %359 = vector.multi_reduction <add>, %358, %cst_130 [1] : vector<8x8xf32> to vector<8xf32>
    %360 = vector.shape_cast %359 : vector<8xf32> to vector<8x1xf32>
    %361 = vector.broadcast %360 : vector<8x1xf32> to vector<8x8xf32>
    %362 = arith.divf %358, %361 : vector<8x8xf32>
    %cst_131 = arith.constant dense<0.000000e+00> : vector<8x8xf32>
    %363 = tpu.matmul %362, %349, %cst_131 {dimension_numbers = #tpu.dot_dimension_numbers<[1], [0], [0], [1], [0, 0, 1, 1], [], []>} : vector<8x8xf32>, vector<8x8xf32>, vector<8x8xf32> -> vector<8x8xf32>
    %364 = vector.extract_strided_slice %327 {offsets = [0, 16], sizes = [8, 8], strides = [1, 1]} : vector<8x32xf32> to vector<8x8xf32>
    %365 = vector.extract_strided_slice %328 {offsets = [0, 16], sizes = [8, 8], strides = [1, 1]} : vector<8x32xf32> to vector<8x8xf32>
    %366 = vector.extract_strided_slice %329 {offsets = [0, 16], sizes = [8, 8], strides = [1, 1]} : vector<8x32xf32> to vector<8x8xf32>
    %cst_132 = arith.constant dense<0.000000e+00> : vector<8x8xf32>
    %367 = tpu.matmul %364, %365, %cst_132 {dimension_numbers = #tpu.dot_dimension_numbers<[1], [1], [0], [0], [0, 0, 1, 0], [], []>} : vector<8x8xf32>, vector<8x8xf32>, vector<8x8xf32> -> vector<8x8xf32>
    %cst_133 = arith.constant 0.353553385 : f32
    %368 = vector.broadcast %cst_133 : f32 to vector<8x8xf32>
    %369 = arith.mulf %367, %368 : vector<8x8xf32>
    %370 = arith.addf %369, %14 : vector<8x8xf32>
    %cst_134 = arith.constant dense<0xFF800000> : vector<8xf32>
    %371 = vector.multi_reduction <maximumf>, %370, %cst_134 [1] : vector<8x8xf32> to vector<8xf32>
    %372 = vector.shape_cast %371 : vector<8xf32> to vector<8x1xf32>
    %373 = vector.broadcast %372 : vector<8x1xf32> to vector<8x8xf32>
    %374 = arith.subf %370, %373 : vector<8x8xf32>
    %375 = math.exp %374 : vector<8x8xf32>
    %cst_135 = arith.constant dense<0.000000e+00> : vector<8xf32>
    %376 = vector.multi_reduction <add>, %375, %cst_135 [1] : vector<8x8xf32> to vector<8xf32>
    %377 = vector.shape_cast %376 : vector<8xf32> to vector<8x1xf32>
    %378 = vector.broadcast %377 : vector<8x1xf32> to vector<8x8xf32>
    %379 = arith.divf %375, %378 : vector<8x8xf32>
    %cst_136 = arith.constant dense<0.000000e+00> : vector<8x8xf32>
    %380 = tpu.matmul %379, %366, %cst_136 {dimension_numbers = #tpu.dot_dimension_numbers<[1], [0], [0], [1], [0, 0, 1, 1], [], []>} : vector<8x8xf32>, vector<8x8xf32>, vector<8x8xf32> -> vector<8x8xf32>
    %381 = vector.extract_strided_slice %327 {offsets = [0, 24], sizes = [8, 8], strides = [1, 1]} : vector<8x32xf32> to vector<8x8xf32>
    %382 = vector.extract_strided_slice %328 {offsets = [0, 24], sizes = [8, 8], strides = [1, 1]} : vector<8x32xf32> to vector<8x8xf32>
    %383 = vector.extract_strided_slice %329 {offsets = [0, 24], sizes = [8, 8], strides = [1, 1]} : vector<8x32xf32> to vector<8x8xf32>
    %cst_137 = arith.constant dense<0.000000e+00> : vector<8x8xf32>
    %384 = tpu.matmul %381, %382, %cst_137 {dimension_numbers = #tpu.dot_dimension_numbers<[1], [1], [0], [0], [0, 0, 1, 0], [], []>} : vector<8x8xf32>, vector<8x8xf32>, vector<8x8xf32> -> vector<8x8xf32>
    %cst_138 = arith.constant 0.353553385 : f32
    %385 = vector.broadcast %cst_138 : f32 to vector<8x8xf32>
    %386 = arith.mulf %384, %385 : vector<8x8xf32>
    %387 = arith.addf %386, %14 : vector<8x8xf32>
    %cst_139 = arith.constant dense<0xFF800000> : vector<8xf32>
    %388 = vector.multi_reduction <maximumf>, %387, %cst_139 [1] : vector<8x8xf32> to vector<8xf32>
    %389 = vector.shape_cast %388 : vector<8xf32> to vector<8x1xf32>
    %390 = vector.broadcast %389 : vector<8x1xf32> to vector<8x8xf32>
    %391 = arith.subf %387, %390 : vector<8x8xf32>
    %392 = math.exp %391 : vector<8x8xf32>
    %cst_140 = arith.constant dense<0.000000e+00> : vector<8xf32>
    %393 = vector.multi_reduction <add>, %392, %cst_140 [1] : vector<8x8xf32> to vector<8xf32>
    %394 = vector.shape_cast %393 : vector<8xf32> to vector<8x1xf32>
    %395 = vector.broadcast %394 : vector<8x1xf32> to vector<8x8xf32>
    %396 = arith.divf %392, %395 : vector<8x8xf32>
    %cst_141 = arith.constant dense<0.000000e+00> : vector<8x8xf32>
    %397 = tpu.matmul %396, %383, %cst_141 {dimension_numbers = #tpu.dot_dimension_numbers<[1], [0], [0], [1], [0, 0, 1, 1], [], []>} : vector<8x8xf32>, vector<8x8xf32>, vector<8x8xf32> -> vector<8x8xf32>
    %398 = tpu.concatenate %346, %363, %380, %397 in 1 : vector<8x8xf32>, vector<8x8xf32>, vector<8x8xf32>, vector<8x8xf32> -> vector<8x32xf32>
    %399 = tpu.concatenate %326, %398 in 0 : vector<8x32xf32>, vector<8x32xf32> -> vector<16x32xf32>
    %400 = arith.truncf %399 : vector<16x32xf32> to vector<16x32xbf16>
    %c0_142 = arith.constant 0 : index
    %c1_143 = arith.constant 1 : index
    %c0_144 = arith.constant 0 : index
    %c0_145 = arith.constant 0 : index
    %401 = vector.load %arg11[%c0_142, %c1_143, %c0_144, %c0_145] : memref<1x2x32x32xbf16, #tpu.memory_space<vmem>>, vector<1x1x32x32xbf16>
    %402 = vector.shape_cast %401 : vector<1x1x32x32xbf16> to vector<32x32xbf16>
    %cst_146 = arith.constant dense<0.000000e+00> : vector<16x32xf32>
    %403 = tpu.matmul %400, %402, %cst_146 {dimension_numbers = #tpu.dot_dimension_numbers<[1], [0], [0], [1], [0, 0, 1, 1], [], []>} : vector<16x32xbf16>, vector<32x32xbf16>, vector<16x32xf32> -> vector<16x32xf32>
    %404 = arith.addf %225, %403 : vector<16x32xf32>
    %c0_147 = arith.constant 0 : index
    %c1_148 = arith.constant 1 : index
    %c0_149 = arith.constant 0 : index
    %c0_150 = arith.constant 0 : index
    %405 = vector.load %arg12[%c0_147, %c1_148, %c0_149, %c0_150] : memref<1x2x1x32xf32, #tpu.memory_space<vmem>>, vector<1x1x1x32xf32>
    %406 = vector.shape_cast %405 : vector<1x1x1x32xf32> to vector<1x32xf32>
    %407 = arith.mulf %404, %404 : vector<16x32xf32>
    %cst_151 = arith.constant dense<0.000000e+00> : vector<16xf32>
    %408 = vector.multi_reduction <add>, %407, %cst_151 [1] : vector<16x32xf32> to vector<16xf32>
    %409 = vector.shape_cast %408 : vector<16xf32> to vector<16x1xf32>
    %cst_152 = arith.constant 3.200000e+01 : f32
    %410 = vector.broadcast %cst_152 : f32 to vector<16x1xf32>
    %411 = arith.divf %409, %410 : vector<16x1xf32>
    %cst_153 = arith.constant 9.99999974E-6 : f32
    %412 = vector.broadcast %cst_153 : f32 to vector<16x1xf32>
    %413 = arith.addf %411, %412 : vector<16x1xf32>
    %414 = math.rsqrt %413 : vector<16x1xf32>
    %415 = vector.broadcast %414 : vector<16x1xf32> to vector<16x32xf32>
    %416 = arith.mulf %404, %415 : vector<16x32xf32>
    %417 = vector.broadcast %406 : vector<1x32xf32> to vector<16x32xf32>
    %418 = arith.mulf %416, %417 : vector<16x32xf32>
    %419 = arith.truncf %418 : vector<16x32xf32> to vector<16x32xbf16>
    %c0_154 = arith.constant 0 : index
    %c1_155 = arith.constant 1 : index
    %c0_156 = arith.constant 0 : index
    %c0_157 = arith.constant 0 : index
    %420 = vector.load %arg13[%c0_154, %c1_155, %c0_156, %c0_157] : memref<1x2x32x192xbf16, #tpu.memory_space<vmem>>, vector<1x1x32x192xbf16>
    %421 = vector.shape_cast %420 : vector<1x1x32x192xbf16> to vector<32x192xbf16>
    %cst_158 = arith.constant dense<0.000000e+00> : vector<16x192xf32>
    %422 = tpu.matmul %419, %421, %cst_158 {dimension_numbers = #tpu.dot_dimension_numbers<[1], [0], [0], [1], [0, 0, 1, 1], [], []>} : vector<16x32xbf16>, vector<32x192xbf16>, vector<16x192xf32> -> vector<16x192xf32>
    %423 = vector.extract_strided_slice %422 {offsets = [0, 0], sizes = [16, 96], strides = [1, 1]} : vector<16x192xf32> to vector<16x96xf32>
    %424 = vector.extract_strided_slice %422 {offsets = [0, 96], sizes = [16, 96], strides = [1, 1]} : vector<16x192xf32> to vector<16x96xf32>
    %425 = arith.negf %423 : vector<16x96xf32>
    %426 = math.exp %425 : vector<16x96xf32>
    %cst_159 = arith.constant 1.000000e+00 : f32
    %427 = vector.broadcast %cst_159 : f32 to vector<16x96xf32>
    %428 = arith.addf %427, %426 : vector<16x96xf32>
    %429 = arith.divf %427, %428 : vector<16x96xf32>
    %430 = arith.mulf %423, %429 : vector<16x96xf32>
    %431 = arith.mulf %430, %424 : vector<16x96xf32>
    %432 = arith.truncf %431 : vector<16x96xf32> to vector<16x96xbf16>
    %c0_160 = arith.constant 0 : index
    %c1_161 = arith.constant 1 : index
    %c0_162 = arith.constant 0 : index
    %c0_163 = arith.constant 0 : index
    %433 = vector.load %arg14[%c0_160, %c1_161, %c0_162, %c0_163] : memref<1x2x96x32xbf16, #tpu.memory_space<vmem>>, vector<1x1x96x32xbf16>
    %434 = vector.shape_cast %433 : vector<1x1x96x32xbf16> to vector<96x32xbf16>
    %cst_164 = arith.constant dense<0.000000e+00> : vector<16x32xf32>
    %435 = tpu.matmul %432, %434, %cst_164 {dimension_numbers = #tpu.dot_dimension_numbers<[1], [0], [0], [1], [0, 0, 1, 1], [], []>} : vector<16x96xbf16>, vector<96x32xbf16>, vector<16x32xf32> -> vector<16x32xf32>
    %436 = arith.addf %404, %435 : vector<16x32xf32>
    %c0_165 = arith.constant 0 : index
    %c0_166 = arith.constant 0 : index
    %c0_167 = arith.constant 0 : index
    %437 = vector.load %arg8[%c0_165, %c0_166, %c0_167] : memref<1x1x32xf32, #tpu.memory_space<vmem>>, vector<1x1x32xf32>
    %438 = vector.shape_cast %437 : vector<1x1x32xf32> to vector<1x32xf32>
    %439 = arith.mulf %436, %436 : vector<16x32xf32>
    %cst_168 = arith.constant dense<0.000000e+00> : vector<16xf32>
    %440 = vector.multi_reduction <add>, %439, %cst_168 [1] : vector<16x32xf32> to vector<16xf32>
    %441 = vector.shape_cast %440 : vector<16xf32> to vector<16x1xf32>
    %cst_169 = arith.constant 3.200000e+01 : f32
    %442 = vector.broadcast %cst_169 : f32 to vector<16x1xf32>
    %443 = arith.divf %441, %442 : vector<16x1xf32>
    %cst_170 = arith.constant 9.99999974E-6 : f32
    %444 = vector.broadcast %cst_170 : f32 to vector<16x1xf32>
    %445 = arith.addf %443, %444 : vector<16x1xf32>
    %446 = math.rsqrt %445 : vector<16x1xf32>
    %447 = vector.broadcast %446 : vector<16x1xf32> to vector<16x32xf32>
    %448 = arith.mulf %436, %447 : vector<16x32xf32>
    %449 = vector.broadcast %438 : vector<1x32xf32> to vector<16x32xf32>
    %450 = arith.mulf %448, %449 : vector<16x32xf32>
    %451 = arith.truncf %450 : vector<16x32xf32> to vector<16x32xbf16>
    %c0_171 = arith.constant 0 : index
    %c0_172 = arith.constant 0 : index
    %c0_173 = arith.constant 0 : index
    %452 = vector.load %arg7[%c0_171, %c0_172, %c0_173] : memref<1x32x64xbf16, #tpu.memory_space<vmem>>, vector<1x32x64xbf16>
    %453 = vector.shape_cast %452 : vector<1x32x64xbf16> to vector<32x64xbf16>
    %cst_174 = arith.constant dense<0.000000e+00> : vector<16x64xf32>
    %454 = tpu.matmul %451, %453, %cst_174 {dimension_numbers = #tpu.dot_dimension_numbers<[1], [0], [0], [1], [0, 0, 1, 1], [], []>} : vector<16x32xbf16>, vector<32x64xbf16>, vector<16x64xf32> -> vector<16x64xf32>
    %c0_175 = arith.constant 0 : index
    %c0_176 = arith.constant 0 : index
    %c0_177 = arith.constant 0 : index
    %455 = vector.load %arg1[%c0_175, %c0_176, %c0_177] : memref<1x16x1xf32, #tpu.memory_space<vmem>>, vector<1x16x1xf32>
    %456 = vector.shape_cast %455 : vector<1x16x1xf32> to vector<16x1xf32>
    %457 = vector.broadcast %456 : vector<16x1xf32> to vector<16x64xf32>
    %458 = arith.mulf %454, %457 : vector<16x64xf32>
    %459 = arith.truncf %458 : vector<16x64xf32> to vector<16x64xbf16>
    %c0_178 = arith.constant 0 : index
    %c0_179 = arith.constant 0 : index
    %c0_180 = arith.constant 0 : index
    %460 = vector.load %arg15[%c0_178, %c0_179, %c0_180] : memref<1x16x64xbf16, #tpu.memory_space<vmem>>, vector<1x16x64xbf16>
    %461 = vector.shape_cast %460 : vector<1x16x64xbf16> to vector<16x64xbf16>
    %462 = vector.shape_cast %459 : vector<16x64xbf16> to vector<1x16x64xbf16>
    tpu.vector_store %arg15[%c0_178, %c0_179, %c0_180], %462 {strides = array<i32>} : memref<1x16x64xbf16, #tpu.memory_space<vmem>>, vector<1x16x64xbf16>,
    return
  }
  func.func @transform_0(%arg0: i32) -> (i32, i32, i32) {
    %c0_i32 = arith.constant 0 : i32
    %c0_i32_0 = arith.constant 0 : i32
    %c0_i32_1 = arith.constant 0 : i32
    return %arg0, %c0_i32, %c0_i32_0 : i32, i32, i32
  }
  func.func @transform_1(%arg0: i32) -> (i32, i32) {
    %c0_i32 = arith.constant 0 : i32
    %c0_i32_0 = arith.constant 0 : i32
    %c0_i32_1 = arith.constant 0 : i32
    return %c0_i32, %c0_i32_0 : i32, i32
  }
  func.func @transform_2(%arg0: i32) -> (i32, i32) {
    %c0_i32 = arith.constant 0 : i32
    %c0_i32_0 = arith.constant 0 : i32
    %c0_i32_1 = arith.constant 0 : i32
    return %c0_i32, %c0_i32_0 : i32, i32
  }
  func.func @transform_3(%arg0: i32) -> (i32, i32) {
    %c0_i32 = arith.constant 0 : i32
    %c0_i32_0 = arith.constant 0 : i32
    %c0_i32_1 = arith.constant 0 : i32
    return %c0_i32, %c0_i32_0 : i32, i32
  }
  func.func @transform_4(%arg0: i32) -> (i32, i32) {
    %c0_i32 = arith.constant 0 : i32
    %c0_i32_0 = arith.constant 0 : i32
    %c0_i32_1 = arith.constant 0 : i32
    return %c0_i32, %c0_i32_0 : i32, i32
  }
  func.func @transform_5(%arg0: i32) -> (i32, i32, i32) {
    %c0_i32 = arith.constant 0 : i32
    %c0_i32_0 = arith.constant 0 : i32
    %c0_i32_1 = arith.constant 0 : i32
    return %arg0, %c0_i32, %c0_i32_0 : i32, i32, i32
  }
  func.func @transform_6(%arg0: i32) -> (i32, i32, i32) {
    %c0_i32 = arith.constant 0 : i32
    %c0_i32_0 = arith.constant 0 : i32
    %c0_i32_1 = arith.constant 0 : i32
    return %arg0, %c0_i32, %c0_i32_0 : i32, i32, i32
  }
  func.func @transform_7(%arg0: i32) -> (i32, i32, i32) {
    %c0_i32 = arith.constant 0 : i32
    %c0_i32_0 = arith.constant 0 : i32
    %c0_i32_1 = arith.constant 0 : i32
    return %arg0, %c0_i32, %c0_i32_0 : i32, i32, i32
  }
  func.func @transform_8(%arg0: i32) -> (i32, i32, i32, i32) {
    %c0_i32 = arith.constant 0 : i32
    %c0_i32_0 = arith.constant 0 : i32
    %c0_i32_1 = arith.constant 0 : i32
    %c0_i32_2 = arith.constant 0 : i32
    return %arg0, %c0_i32, %c0_i32_0, %c0_i32_1 : i32, i32, i32, i32
  }
  func.func @transform_9(%arg0: i32) -> (i32, i32, i32, i32) {
    %c0_i32 = arith.constant 0 : i32
    %c0_i32_0 = arith.constant 0 : i32
    %c0_i32_1 = arith.constant 0 : i32
    %c0_i32_2 = arith.constant 0 : i32
    return %arg0, %c0_i32, %c0_i32_0, %c0_i32_1 : i32, i32, i32, i32
  }
  func.func @transform_10(%arg0: i32) -> (i32, i32, i32, i32) {
    %c0_i32 = arith.constant 0 : i32
    %c0_i32_0 = arith.constant 0 : i32
    %c0_i32_1 = arith.constant 0 : i32
    %c0_i32_2 = arith.constant 0 : i32
    return %arg0, %c0_i32, %c0_i32_0, %c0_i32_1 : i32, i32, i32, i32
  }
  func.func @transform_11(%arg0: i32) -> (i32, i32, i32, i32) {
    %c0_i32 = arith.constant 0 : i32
    %c0_i32_0 = arith.constant 0 : i32
    %c0_i32_1 = arith.constant 0 : i32
    %c0_i32_2 = arith.constant 0 : i32
    return %arg0, %c0_i32, %c0_i32_0, %c0_i32_1 : i32, i32, i32, i32
  }
  func.func @transform_12(%arg0: i32) -> (i32, i32, i32, i32) {
    %c0_i32 = arith.constant 0 : i32
    %c0_i32_0 = arith.constant 0 : i32
    %c0_i32_1 = arith.constant 0 : i32
    %c0_i32_2 = arith.constant 0 : i32
    return %arg0, %c0_i32, %c0_i32_0, %c0_i32_1 : i32, i32, i32, i32
  }
  func.func @transform_13(%arg0: i32) -> (i32, i32, i32, i32) {
    %c0_i32 = arith.constant 0 : i32
    %c0_i32_0 = arith.constant 0 : i32
    %c0_i32_1 = arith.constant 0 : i32
    %c0_i32_2 = arith.constant 0 : i32
    return %arg0, %c0_i32, %c0_i32_0, %c0_i32_1 : i32, i32, i32, i32
  }
  func.func @transform_14(%arg0: i32) -> (i32, i32, i32) {
    %c0_i32 = arith.constant 0 : i32
    %c0_i32_0 = arith.constant 0 : i32
    %c0_i32_1 = arith.constant 0 : i32
    return %arg0, %c0_i32, %c0_i32_0 : i32, i32, i32
  }
}

</mosaic_0001>

<llo_original>
// kernel: tile.23
$region0: #{tile.23}
  #allocation0 [shape = 's32[1]{0}', space=sflag, size = 0x4, scoped, tag = 'scoped memory for tile.23']
  %s0 = inlined_call_operand.vmem [shape: f32[2], index: 0, kind: input, shape index: {}]
  %s1 = inlined_call_operand.vmem [shape: f32[4,2], index: 1, kind: output, shape index: {}]
  // Predicated region
  $region2: #{tile.23} parent=0 // pred_check
    _
  $region3: #{tile.23} parent=0 // pred_check_branch
    %3 = sbr.rel (0) target = $region5
  $region4: #{tile.23} parent=0 // pred_region
    _
  $region5: #{tile.23} parent=0 // pred_fallthru
    _
  %v4 = vld [vmem:[%s0] ss:$0 sm:$0xff]
  %5 = vst [vmem:[%s1] sm:$0xf] %v4

// kernel: _lambda_.1
$region0: #{_lambda_.1}
  #allocation0 [shape = 'u32[]', space=smem, size = 0x4, offset = 0x4, fixed_abs, tag = 'smem constant byte address 0x4 - core index']
  #allocation1 [shape = 'u32[144,128]{1,0:T(1,128)}', space=vmem, size = 0x12000, scoped, tag = 'internal scratch']
  %s0 = inlined_call_operand.vmem [shape: f32[2,16,1], index: 0, kind: input, shape index: {}]
  %s1 = inlined_call_operand.vmem [shape: bf16[16,64], index: 1, kind: input, shape index: {}]
  %s2 = inlined_call_operand.vmem [shape: f32[16,32], index: 2, kind: input, shape index: {}]
  %s3 = inlined_call_operand.vmem [shape: f32[16,32], index: 3, kind: input, shape index: {}]
  %s4 = inlined_call_operand.vmem [shape: f32[32,32], index: 4, kind: input, shape index: {}]
  %s5 = inlined_call_operand.vmem [shape: bf16[2,64,32], index: 5, kind: input, shape index: {}]
  %s6 = inlined_call_operand.vmem [shape: bf16[2,32,64], index: 6, kind: input, shape index: {}]
  %s7 = inlined_call_operand.vmem [shape: f32[2,1,32], index: 7, kind: input, shape index: {}]
  %s8 = inlined_call_operand.vmem [shape: f32[2,2,1,32], index: 8, kind: input, shape index: {}]
  %s9 = inlined_call_operand.vmem [shape: bf16[2,2,32,96], index: 9, kind: input, shape index: {}]
  %s10 = inlined_call_operand.vmem [shape: bf16[2,2,32,32], index: 10, kind: input, shape index: {}]
  %s11 = inlined_call_operand.vmem [shape: f32[2,2,1,32], index: 11, kind: input, shape index: {}]
  %s12 = inlined_call_operand.vmem [shape: bf16[2,2,32,192], index: 12, kind: input, shape index: {}]
  %s13 = inlined_call_operand.vmem [shape: bf16[2,2,96,32], index: 13, kind: input, shape index: {}]
  %s14 = inlined_call_operand.vmem [shape: bf16[2,16,64], index: 14, kind: output, shape index: {}]
  %s15 = sld [smem:[#allocation0]]
  $region89: #{_lambda_.1} parent=0
    _
  %s17 = ssub.s32 1, %s15
  %s18 = scalar_select 0, %s17, %s15
  loop: start=0, step=1, limit=4
  $region2: #{_lambda_.1} parent=0 // loop_pre_header
    _
  $region3: #{_lambda_.1} parent=0 // loop_header
    %s20 = sphi 0, %s24
    %p21 = scmp.ge.s32.totalorder %s20, 4
    %s30 = sphi 0, %s32
    %s33 = sphi 0, %s30
    %s34 = sphi 0, %s33
    %s50 = sphi 0, %s34
    %s54 = sphi 0, %s54
    %s56 = sphi 0, %s54
    %s57 = sphi 0, %s56
    %s71 = sphi 0, %s57
    %s75 = sphi 0, %s75
    %s77 = sphi 0, %s75
    %s78 = sphi 0, %s77
    %s92 = sphi 0, %s78
    %s96 = sphi 0, %s96
    %s98 = sphi 0, %s96
    %s99 = sphi 0, %s98
    %s113 = sphi 0, %s99
    %s117 = sphi 0, %s117
    %s119 = sphi 0, %s117
    %s120 = sphi 0, %s119
    %s134 = sphi 0, %s120
    %s140 = sphi 0, %s142
    %s143 = sphi 0, %s140
    %s144 = sphi 0, %s143
    %s160 = sphi 0, %s144
    %s166 = sphi 0, %s168
    %s169 = sphi 0, %s166
    %s170 = sphi 0, %s169
    %s186 = sphi 0, %s170
    %s192 = sphi 0, %s194
    %s195 = sphi 0, %s192
    %s196 = sphi 0, %s195
    %s212 = sphi 0, %s196
    %s218 = sphi 0, %s220
    %s221 = sphi 0, %s218
    %s222 = sphi 0, %s221
    %s238 = sphi 0, %s222
    %s244 = sphi 0, %s246
    %s247 = sphi 0, %s244
    %s248 = sphi 0, %s247
    %s264 = sphi 0, %s248
    %s270 = sphi 0, %s272
    %s273 = sphi 0, %s270
    %s274 = sphi 0, %s273
    %s290 = sphi 0, %s274
    %s296 = sphi 0, %s298
    %s299 = sphi 0, %s296
    %s300 = sphi 0, %s299
    %s316 = sphi 0, %s300
    %s322 = sphi 0, %s324
    %s325 = sphi 0, %s322
    %s326 = sphi 0, %s325
    %s342 = sphi 0, %s326
    %s348 = sphi 0, %s350
    %s351 = sphi 0, %s348
    %s352 = sphi 0, %s351
    %s368 = sphi 0, %s352
    %s374 = sphi 0, %s376
    %s377 = sphi 0, %s374
    %s378 = sphi 0, %s377
    %s394 = sphi 0, %s378
  $region4: #{_lambda_.1} parent=0 // loop_header_branch
    %23 = sbr.rel (%p21) target = $region8
  $region5: #{_lambda_.1} parent=0 // loop_body
    %s25 = ssub.s32 %s20, 1
    %s26 = ssub.s32 %s20, 2
    %s27 = sadd.s32 %s20, 1
    %s28 = ssub.s32 %s20, %s27
    %p29 = scmp.eq.s32.totalorder %s28, 0
    %s31 = sadd.s32 %s30, 1
    %s32 = scalar_select %p29, %s30, %s31
    %p35 = pneg %p29
    %p36 = scmp.eq.s32.totalorder %s20, 1
    %p37 = por %p35, %p36
    %p38 = scmp.ne.s32.totalorder %s30, %s33
    %p39 = scmp.eq.s32.totalorder %s20, 0
    %p40 = por %p38, %p39
    %p41 = scmp.ne.s32.totalorder %s30, %s33
    %p42 = scmp.eq.s32.totalorder %s25, 1
    %p43 = por %p41, %p42
    %p44 = scmp.ne.s32.totalorder %s33, %s34
    %p45 = scmp.eq.s32.totalorder %s25, 0
    %p46 = por %p44, %p45
    %p47 = scmp.ne.s32.totalorder %s33, %s34
    %p48 = scmp.eq.s32.totalorder %s26, 1
    %p49 = por %p47, %p48
    %p51 = scmp.ne.s32.totalorder %s34, %s50
    %p52 = scmp.eq.s32.totalorder %s26, 0
    %p53 = por %p51, %p52
    %s55 = sadd.s32 %s54, 1
    %p58 = scmp.eq.s32.totalorder %s20, 1
    %p59 = scmp.ne.s32.totalorder %s54, %s56
    %p60 = scmp.eq.s32.totalorder %s20, 0
    %p61 = por %p59, %p60
    %p62 = scmp.ne.s32.totalorder %s54, %s56
    %p63 = scmp.eq.s32.totalorder %s25, 1
    %p64 = por %p62, %p63
    %p65 = scmp.ne.s32.totalorder %s56, %s57
    %p66 = scmp.eq.s32.totalorder %s25, 0
    %p67 = por %p65, %p66
    %p68 = scmp.ne.s32.totalorder %s56, %s57
    %p69 = scmp.eq.s32.totalorder %s26, 1
    %p70 = por %p68, %p69
    %p72 = scmp.ne.s32.totalorder %s57, %s71
    %p73 = scmp.eq.s32.totalorder %s26, 0
    %p74 = por %p72, %p73
    %s76 = sadd.s32 %s75, 1
    %p79 = scmp.eq.s32.totalorder %s20, 1
    %p80 = scmp.ne.s32.totalorder %s75, %s77
    %p81 = scmp.eq.s32.totalorder %s20, 0
    %p82 = por %p80, %p81
    %p83 = scmp.ne.s32.totalorder %s75, %s77
    %p84 = scmp.eq.s32.totalorder %s25, 1
    %p85 = por %p83, %p84
    %p86 = scmp.ne.s32.totalorder %s77, %s78
    %p87 = scmp.eq.s32.totalorder %s25, 0
    %p88 = por %p86, %p87
    %p89 = scmp.ne.s32.totalorder %s77, %s78
    %p90 = scmp.eq.s32.totalorder %s26, 1
    %p91 = por %p89, %p90
    %p93 = scmp.ne.s32.totalorder %s78, %s92
    %p94 = scmp.eq.s32.totalorder %s26, 0
    %p95 = por %p93, %p94
    %s97 = sadd.s32 %s96, 1
    %p100 = scmp.eq.s32.totalorder %s20, 1
    %p101 = scmp.ne.s32.totalorder %s96, %s98
    %p102 = scmp.eq.s32.totalorder %s20, 0
    %p103 = por %p101, %p102
    %p104 = scmp.ne.s32.totalorder %s96, %s98
    %p105 = scmp.eq.s32.totalorder %s25, 1
    %p106 = por %p104, %p105
    %p107 = scmp.ne.s32.totalorder %s98, %s99
    %p108 = scmp.eq.s32.totalorder %s25, 0
    %p109 = por %p107, %p108
    %p110 = scmp.ne.s32.totalorder %s98, %s99
    %p111 = scmp.eq.s32.totalorder %s26, 1
    %p112 = por %p110, %p111
    %p114 = scmp.ne.s32.totalorder %s99, %s113
    %p115 = scmp.eq.s32.totalorder %s26, 0
    %p116 = por %p114, %p115
    %s118 = sadd.s32 %s117, 1
    %p121 = scmp.eq.s32.totalorder %s20, 1
    %p122 = scmp.ne.s32.totalorder %s117, %s119
    %p123 = scmp.eq.s32.totalorder %s20, 0
    %p124 = por %p122, %p123
    %p125 = scmp.ne.s32.totalorder %s117, %s119
    %p126 = scmp.eq.s32.totalorder %s25, 1
    %p127 = por %p125, %p126
    %p128 = scmp.ne.s32.totalorder %s119, %s120
    %p129 = scmp.eq.s32.totalorder %s25, 0
    %p130 = por %p128, %p129
    %p131 = scmp.ne.s32.totalorder %s119, %s120
    %p132 = scmp.eq.s32.totalorder %s26, 1
    %p133 = por %p131, %p132
    %p135 = scmp.ne.s32.totalorder %s120, %s134
    %p136 = scmp.eq.s32.totalorder %s26, 0
    %p137 = por %p135, %p136
    %s138 = ssub.s32 %s20, %s27
    %p139 = scmp.eq.s32.totalorder %s138, 0
    %s141 = sadd.s32 %s140, 1
    %s142 = scalar_select %p139, %s140, %s141
    %p145 = pneg %p139
    %p146 = scmp.eq.s32.totalorder %s20, 1
    %p147 = por %p145, %p146
    %p148 = scmp.ne.s32.totalorder %s140, %s143
    %p149 = scmp.eq.s32.totalorder %s20, 0
    %p150 = por %p148, %p149
    %p151 = scmp.ne.s32.totalorder %s140, %s143
    %p152 = scmp.eq.s32.totalorder %s25, 1
    %p153 = por %p151, %p152
    %p154 = scmp.ne.s32.totalorder %s143, %s144
    %p155 = scmp.eq.s32.totalorder %s25, 0
    %p156 = por %p154, %p155
    %p157 = scmp.ne.s32.totalorder %s143, %s144
    %p158 = scmp.eq.s32.totalorder %s26, 1
    %p159 = por %p157, %p158
    %p161 = scmp.ne.s32.totalorder %s144, %s160
    %p162 = scmp.eq.s32.totalorder %s26, 0
    %p163 = por %p161, %p162
    %s164 = ssub.s32 %s20, %s27
    %p165 = scmp.eq.s32.totalorder %s164, 0
    %s167 = sadd.s32 %s166, 1
    %s168 = scalar_select %p165, %s166, %s167
    %p171 = pneg %p165
    %p172 = scmp.eq.s32.totalorder %s20, 1
    %p173 = por %p171, %p172
    %p174 = scmp.ne.s32.totalorder %s166, %s169
    %p175 = scmp.eq.s32.totalorder %s20, 0
    %p176 = por %p174, %p175
    %p177 = scmp.ne.s32.totalorder %s166, %s169
    %p178 = scmp.eq.s32.totalorder %s25, 1
    %p179 = por %p177, %p178
    %p180 = scmp.ne.s32.totalorder %s169, %s170
    %p181 = scmp.eq.s32.totalorder %s25, 0
    %p182 = por %p180, %p181
    %p183 = scmp.ne.s32.totalorder %s169, %s170
    %p184 = scmp.eq.s32.totalorder %s26, 1
    %p185 = por %p183, %p184
    %p187 = scmp.ne.s32.totalorder %s170, %s186
    %p188 = scmp.eq.s32.totalorder %s26, 0
    %p189 = por %p187, %p188
    %s190 = ssub.s32 %s20, %s27
    %p191 = scmp.eq.s32.totalorder %s190, 0
    %s193 = sadd.s32 %s192, 1
    %s194 = scalar_select %p191, %s192, %s193
    %p197 = pneg %p191
    %p198 = scmp.eq.s32.totalorder %s20, 1
    %p199 = por %p197, %p198
    %p200 = scmp.ne.s32.totalorder %s192, %s195
    %p201 = scmp.eq.s32.totalorder %s20, 0
    %p202 = por %p200, %p201
    %p203 = scmp.ne.s32.totalorder %s192, %s195
    %p204 = scmp.eq.s32.totalorder %s25, 1
    %p205 = por %p203, %p204
    %p206 = scmp.ne.s32.totalorder %s195, %s196
    %p207 = scmp.eq.s32.totalorder %s25, 0
    %p208 = por %p206, %p207
    %p209 = scmp.ne.s32.totalorder %s195, %s196
    %p210 = scmp.eq.s32.totalorder %s26, 1
    %p211 = por %p209, %p210
    %p213 = scmp.ne.s32.totalorder %s196, %s212
    %p214 = scmp.eq.s32.totalorder %s26, 0
    %p215 = por %p213, %p214
    %s216 = ssub.s32 %s20, %s27
    %p217 = scmp.eq.s32.totalorder %s216, 0
    %s219 = sadd.s32 %s218, 1
    %s220 = scalar_select %p217, %s218, %s219
    %p223 = pneg %p217
    %p224 = scmp.eq.s32.totalorder %s20, 1
    %p225 = por %p223, %p224
    %p226 = scmp.ne.s32.totalorder %s218, %s221
    %p227 = scmp.eq.s32.totalorder %s20, 0
    %p228 = por %p226, %p227
    %p229 = scmp.ne.s32.totalorder %s218, %s221
    %p230 = scmp.eq.s32.totalorder %s25, 1
    %p231 = por %p229, %p230
    %p232 = scmp.ne.s32.totalorder %s221, %s222
    %p233 = scmp.eq.s32.totalorder %s25, 0
    %p234 = por %p232, %p233
    %p235 = scmp.ne.s32.totalorder %s221, %s222
    %p236 = scmp.eq.s32.totalorder %s26, 1
    %p237 = por %p235, %p236
    %p239 = scmp.ne.s32.totalorder %s222, %s238
    %p240 = scmp.eq.s32.totalorder %s26, 0
    %p241 = por %p239, %p240
    %s242 = ssub.s32 %s20, %s27
    %p243 = scmp.eq.s32.totalorder %s242, 0
    %s245 = sadd.s32 %s244, 1
    %s246 = scalar_select %p243, %s244, %s245
    %p249 = pneg %p243
    %p250 = scmp.eq.s32.totalorder %s20, 1
    %p251 = por %p249, %p250
    %p252 = scmp.ne.s32.totalorder %s244, %s247
    %p253 = scmp.eq.s32.totalorder %s20, 0
    %p254 = por %p252, %p253
    %p255 = scmp.ne.s32.totalorder %s244, %s247
    %p256 = scmp.eq.s32.totalorder %s25, 1
    %p257 = por %p255, %p256
    %p258 = scmp.ne.s32.totalorder %s247, %s248
    %p259 = scmp.eq.s32.totalorder %s25, 0
    %p260 = por %p258, %p259
    %p261 = scmp.ne.s32.totalorder %s247, %s248
    %p262 = scmp.eq.s32.totalorder %s26, 1
    %p263 = por %p261, %p262
    %p265 = scmp.ne.s32.totalorder %s248, %s264
    %p266 = scmp.eq.s32.totalorder %s26, 0
    %p267 = por %p265, %p266
    %s268 = ssub.s32 %s20, %s27
    %p269 = scmp.eq.s32.totalorder %s268, 0
    %s271 = sadd.s32 %s270, 1
    %s272 = scalar_select %p269, %s270, %s271
    %p275 = pneg %p269
    %p276 = scmp.eq.s32.totalorder %s20, 1
    %p277 = por %p275, %p276
    %p278 = scmp.ne.s32.totalorder %s270, %s273
    %p279 = scmp.eq.s32.totalorder %s20, 0
    %p280 = por %p278, %p279
    %p281 = scmp.ne.s32.totalorder %s270, %s273
    %p282 = scmp.eq.s32.totalorder %s25, 1
    %p283 = por %p281, %p282
    %p284 = scmp.ne.s32.totalorder %s273, %s274
    %p285 = scmp.eq.s32.totalorder %s25, 0
    %p286 = por %p284, %p285
    %p287 = scmp.ne.s32.totalorder %s273, %s274
    %p288 = scmp.eq.s32.totalorder %s26, 1
    %p289 = por %p287, %p288
    %p291 = scmp.ne.s32.totalorder %s274, %s290
    %p292 = scmp.eq.s32.totalorder %s26, 0
    %p293 = por %p291, %p292
    %s294 = ssub.s32 %s20, %s27
    %p295 = scmp.eq.s32.totalorder %s294, 0
    %s297 = sadd.s32 %s296, 1
    %s298 = scalar_select %p295, %s296, %s297
    %p301 = pneg %p295
    %p302 = scmp.eq.s32.totalorder %s20, 1
    %p303 = por %p301, %p302
    %p304 = scmp.ne.s32.totalorder %s296, %s299
    %p305 = scmp.eq.s32.totalorder %s20, 0
    %p306 = por %p304, %p305
    %p307 = scmp.ne.s32.totalorder %s296, %s299
    %p308 = scmp.eq.s32.totalorder %s25, 1
    %p309 = por %p307, %p308
    %p310 = scmp.ne.s32.totalorder %s299, %s300
    %p311 = scmp.eq.s32.totalorder %s25, 0
    %p312 = por %p310, %p311
    %p313 = scmp.ne.s32.totalorder %s299, %s300
    %p314 = scmp.eq.s32.totalorder %s26, 1
    %p315 = por %p313, %p314
    %p317 = scmp.ne.s32.totalorder %s300, %s316
    %p318 = scmp.eq.s32.totalorder %s26, 0
    %p319 = por %p317, %p318
    %s320 = ssub.s32 %s20, %s27
    %p321 = scmp.eq.s32.totalorder %s320, 0
    %s323 = sadd.s32 %s322, 1
    %s324 = scalar_select %p321, %s322, %s323
    %p327 = pneg %p321
    %p328 = scmp.eq.s32.totalorder %s20, 1
    %p329 = por %p327, %p328
    %p330 = scmp.ne.s32.totalorder %s322, %s325
    %p331 = scmp.eq.s32.totalorder %s20, 0
    %p332 = por %p330, %p331
    %p333 = scmp.ne.s32.totalorder %s322, %s325
    %p334 = scmp.eq.s32.totalorder %s25, 1
    %p335 = por %p333, %p334
    %p336 = scmp.ne.s32.totalorder %s325, %s326
    %p337 = scmp.eq.s32.totalorder %s25, 0
    %p338 = por %p336, %p337
    %p339 = scmp.ne.s32.totalorder %s325, %s326
    %p340 = scmp.eq.s32.totalorder %s26, 1
    %p341 = por %p339, %p340
    %p343 = scmp.ne.s32.totalorder %s326, %s342
    %p344 = scmp.eq.s32.totalorder %s26, 0
    %p345 = por %p343, %p344
    %s346 = ssub.s32 %s20, %s27
    %p347 = scmp.eq.s32.totalorder %s346, 0
    %s349 = sadd.s32 %s348, 1
    %s350 = scalar_select %p347, %s348, %s349
    %p353 = pneg %p347
    %p354 = scmp.eq.s32.totalorder %s20, 1
    %p355 = por %p353, %p354
    %p356 = scmp.ne.s32.totalorder %s348, %s351
    %p357 = scmp.eq.s32.totalorder %s20, 0
    %p358 = por %p356, %p357
    %p359 = scmp.ne.s32.totalorder %s348, %s351
    %p360 = scmp.eq.s32.totalorder %s25, 1
    %p361 = por %p359, %p360
    %p362 = scmp.ne.s32.totalorder %s351, %s352
    %p363 = scmp.eq.s32.totalorder %s25, 0
    %p364 = por %p362, %p363
    %p365 = scmp.ne.s32.totalorder %s351, %s352
    %p366 = scmp.eq.s32.totalorder %s26, 1
    %p367 = por %p365, %p366
    %p369 = scmp.ne.s32.totalorder %s352, %s368
    %p370 = scmp.eq.s32.totalorder %s26, 0
    %p371 = por %p369, %p370
    %s372 = ssub.s32 %s20, %s27
    %p373 = scmp.eq.s32.totalorder %s372, 0
    %s375 = sadd.s32 %s374, 1
    %s376 = scalar_select %p373, %s374, %s375
    %p379 = pneg %p373
    %p380 = scmp.eq.s32.totalorder %s20, 1
    %p381 = por %p379, %p380
    %p382 = scmp.ne.s32.totalorder %s374, %s377
    %p383 = scmp.eq.s32.totalorder %s20, 0
    %p384 = por %p382, %p383
    %p385 = scmp.ne.s32.totalorder %s374, %s377
    %p386 = scmp.eq.s32.totalorder %s25, 1
    %p387 = por %p385, %p386
    %p388 = scmp.ne.s32.totalorder %s377, %s378
    %p389 = scmp.eq.s32.totalorder %s25, 0
    %p390 = por %p388, %p389
    %p391 = scmp.ne.s32.totalorder %s377, %s378
    %p392 = scmp.eq.s32.totalorder %s26, 1
    %p393 = por %p391, %p392
    %p395 = scmp.ne.s32.totalorder %s378, %s394
    %p396 = scmp.eq.s32.totalorder %s26, 0
    %p397 = por %p395, %p396
    %p398 = scmp.le.s32.totalorder 1, %s20
    %p399 = scmp.lt.s32.totalorder %s20, 3
    %p400 = pnand %p398, %p399
    %p401 = pneg %p400
    // Predicated region
    $region9: #{_lambda_.1} parent=5 // pred_check
      _
    $region10: #{_lambda_.1} parent=5 // pred_check_branch
      %403 = sbr.rel (%p400) target = $region12
    $region11: #{_lambda_.1} parent=5 // pred_region
      %s404 = ssub.s32 %s20, 1
      // Predicated region
      $region13: #{_lambda_.1} parent=11 // pred_check
        %p405 = pneg %p67
      $region14: #{_lambda_.1} parent=11 // pred_check_branch
        %407 = sbr.rel (%p405) target = $region16
      $region15: #{_lambda_.1} parent=11 // pred_region
        _
      $region16: #{_lambda_.1} parent=11 // pred_fallthru
        _
      // Predicated region
      $region17: #{_lambda_.1} parent=11 // pred_check
        %p408 = pneg %p88
      $region18: #{_lambda_.1} parent=11 // pred_check_branch
        %410 = sbr.rel (%p408) target = $region20
      $region19: #{_lambda_.1} parent=11 // pred_region
        _
      $region20: #{_lambda_.1} parent=11 // pred_fallthru
        _
      // Predicated region
      $region21: #{_lambda_.1} parent=11 // pred_check
        %p411 = pneg %p109
      $region22: #{_lambda_.1} parent=11 // pred_check_branch
        %413 = sbr.rel (%p411) target = $region24
      $region23: #{_lambda_.1} parent=11 // pred_region
        _
      $region24: #{_lambda_.1} parent=11 // pred_fallthru
        _
      // Predicated region
      $region25: #{_lambda_.1} parent=11 // pred_check
        %p414 = pneg %p130
      $region26: #{_lambda_.1} parent=11 // pred_check_branch
        %416 = sbr.rel (%p414) target = $region28
      $region27: #{_lambda_.1} parent=11 // pred_region
        _
      $region28: #{_lambda_.1} parent=11 // pred_fallthru
        _
    $region12: #{_lambda_.1} parent=5 // pred_fallthru
      _
    %p417 = scmp.lt.s32.totalorder %s20, 2
    // Predicated region
    $region29: #{_lambda_.1} parent=5 // pred_check
      %p418 = pneg %p417
    $region30: #{_lambda_.1} parent=5 // pred_check_branch
      %420 = sbr.rel (%p418) target = $region32
    $region31: #{_lambda_.1} parent=5 // pred_region
      // Predicated region
      $region33: #{_lambda_.1} parent=31 // pred_check
        %p421 = pneg %p40
      $region34: #{_lambda_.1} parent=31 // pred_check_branch
        %423 = sbr.rel (%p421) target = $region36
      $region35: #{_lambda_.1} parent=31 // pred_region
        %p424 = scmp.lt.s32.totalorder %s20, 1
        %s425 = scalar_select %p424, %s20, 1
        %s426 = smul.addr %s425, 2
        %s427 = smul.addr %s426, 8
        %s428 = scalar_lea.vmem %s0, %s427
      $region36: #{_lambda_.1} parent=31 // pred_fallthru
        _
      // Predicated region
      $region37: #{_lambda_.1} parent=31 // pred_check
        %p429 = pneg %p150
      $region38: #{_lambda_.1} parent=31 // pred_check_branch
        %431 = sbr.rel (%p429) target = $region40
      $region39: #{_lambda_.1} parent=31 // pred_region
        %p432 = scmp.lt.s32.totalorder %s20, 1
        %s433 = scalar_select %p432, %s20, 1
        %s434 = smul.addr %s433, 8
        %s435 = smul.addr %s434, 4
        %s436 = scalar_lea.vmem %s5, %s435
      $region40: #{_lambda_.1} parent=31 // pred_fallthru
        _
      // Predicated region
      $region41: #{_lambda_.1} parent=31 // pred_check
        %p437 = pneg %p176
      $region42: #{_lambda_.1} parent=31 // pred_check_branch
        %439 = sbr.rel (%p437) target = $region44
      $region43: #{_lambda_.1} parent=31 // pred_region
        %p440 = scmp.lt.s32.totalorder %s20, 1
        %s441 = scalar_select %p440, %s20, 1
        %s442 = smul.addr %s441, 4
        %s443 = smul.addr %s442, 4
        %s444 = scalar_lea.vmem %s6, %s443
      $region44: #{_lambda_.1} parent=31 // pred_fallthru
        _
      // Predicated region
      $region45: #{_lambda_.1} parent=31 // pred_check
        %p445 = pneg %p202
      $region46: #{_lambda_.1} parent=31 // pred_check_branch
        %447 = sbr.rel (%p445) target = $region48
      $region47: #{_lambda_.1} parent=31 // pred_region
        %p448 = scmp.lt.s32.totalorder %s20, 1
        %s449 = scalar_select %p448, %s20, 1
        %s450 = scalar_lea.vmem %s7, %s449
      $region48: #{_lambda_.1} parent=31 // pred_fallthru
        _
      // Predicated region
      $region49: #{_lambda_.1} parent=31 // pred_check
        %p451 = pneg %p228
      $region50: #{_lambda_.1} parent=31 // pred_check_branch
        %453 = sbr.rel (%p451) target = $region52
      $region51: #{_lambda_.1} parent=31 // pred_region
        %p454 = scmp.lt.s32.totalorder %s20, 1
        %s455 = scalar_select %p454, %s20, 1
        %s456 = smul.addr %s455, 2
        %s457 = scalar_lea.vmem %s8, %s456
      $region52: #{_lambda_.1} parent=31 // pred_fallthru
        _
      // Predicated region
      $region53: #{_lambda_.1} parent=31 // pred_check
        %p458 = pneg %p254
      $region54: #{_lambda_.1} parent=31 // pred_check_branch
        %460 = sbr.rel (%p458) target = $region56
      $region55: #{_lambda_.1} parent=31 // pred_region
        %p461 = scmp.lt.s32.totalorder %s20, 1
        %s462 = scalar_select %p461, %s20, 1
        %s463 = smul.addr %s462, 8
        %s464 = smul.addr %s463, 4
        %s465 = scalar_lea.vmem %s9, %s464
      $region56: #{_lambda_.1} parent=31 // pred_fallthru
        _
      // Predicated region
      $region57: #{_lambda_.1} parent=31 // pred_check
        %p466 = pneg %p280
      $region58: #{_lambda_.1} parent=31 // pred_check_branch
        %468 = sbr.rel (%p466) target = $region60
      $region59: #{_lambda_.1} parent=31 // pred_region
        %p469 = scmp.lt.s32.totalorder %s20, 1
        %s470 = scalar_select %p469, %s20, 1
        %s471 = smul.addr %s470, 8
        %s472 = smul.addr %s471, 4
        %s473 = scalar_lea.vmem %s10, %s472
      $region60: #{_lambda_.1} parent=31 // pred_fallthru
        _
      // Predicated region
      $region61: #{_lambda_.1} parent=31 // pred_check
        %p474 = pneg %p306
      $region62: #{_lambda_.1} parent=31 // pred_check_branch
        %476 = sbr.rel (%p474) target = $region64
      $region63: #{_lambda_.1} parent=31 // pred_region
        %p477 = scmp.lt.s32.totalorder %s20, 1
        %s478 = scalar_select %p477, %s20, 1
        %s479 = smul.addr %s478, 2
        %s480 = scalar_lea.vmem %s11, %s479
      $region64: #{_lambda_.1} parent=31 // pred_fallthru
        _
      // Predicated region
      $region65: #{_lambda_.1} parent=31 // pred_check
        %p481 = pneg %p332
      $region66: #{_lambda_.1} parent=31 // pred_check_branch
        %483 = sbr.rel (%p481) target = $region68
      $region67: #{_lambda_.1} parent=31 // pred_region
        %p484 = scmp.lt.s32.totalorder %s20, 1
        %s485 = scalar_select %p484, %s20, 1
        %s486 = smul.addr %s485, 16
        %s487 = smul.addr %s486, 4
        %s488 = scalar_lea.vmem %s12, %s487
      $region68: #{_lambda_.1} parent=31 // pred_fallthru
        _
      // Predicated region
      $region69: #{_lambda_.1} parent=31 // pred_check
        %p489 = pneg %p358
      $region70: #{_lambda_.1} parent=31 // pred_check_branch
        %491 = sbr.rel (%p489) target = $region72
      $region71: #{_lambda_.1} parent=31 // pred_region
        %p492 = scmp.lt.s32.totalorder %s20, 1
        %s493 = scalar_select %p492, %s20, 1
        %s494 = smul.addr %s493, 24
        %s495 = smul.addr %s494, 4
        %s496 = scalar_lea.vmem %s13, %s495
      $region72: #{_lambda_.1} parent=31 // pred_fallthru
        _
    $region32: #{_lambda_.1} parent=5 // pred_fallthru
      _
    %p497 = scmp.le.s32.totalorder 1, %s20
    %p498 = scmp.lt.s32.totalorder %s20, 3
    %p499 = pnand %p497, %p498
    %p500 = pneg %p499
    // Predicated region
    $region73: #{_lambda_.1} parent=5 // pred_check
      _
    $region74: #{_lambda_.1} parent=5 // pred_check_branch
      %502 = sbr.rel (%p499) target = $region76
    $region75: #{_lambda_.1} parent=5 // pred_region
      %s503 = ssub.s32 %s20, 1
      %p504 = scmp.lt.s32.totalorder %s25, 1
      %s505 = scalar_select %p504, %s25, 1
      %s506 = smul.addr %s505, 2
      %s507 = smul.addr %s506, 8
      %s508 = scalar_lea.vmem %s0, %s507
      %p509 = pneg %p46
      %p510 = pneg %p43
      %p511 = pneg %p67
      %p512 = pneg %p64
      %p513 = pneg %p88
      %p514 = pneg %p85
      %p515 = pneg %p109
      %p516 = pneg %p106
      %p517 = pneg %p130
      %p518 = pneg %p127
      %p519 = scmp.lt.s32.totalorder %s25, 1
      %s520 = scalar_select %p519, %s25, 1
      %s521 = smul.addr %s520, 8
      %s522 = smul.addr %s521, 4
      %s523 = scalar_lea.vmem %s5, %s522
      %p524 = pneg %p156
      %p525 = pneg %p153
      %p526 = scmp.lt.s32.totalorder %s25, 1
      %s527 = scalar_select %p526, %s25, 1
      %s528 = smul.addr %s527, 4
      %s529 = smul.addr %s528, 4
      %s530 = scalar_lea.vmem %s6, %s529
      %p531 = pneg %p182
      %p532 = pneg %p179
      %p533 = scmp.lt.s32.totalorder %s25, 1
      %s534 = scalar_select %p533, %s25, 1
      %s535 = scalar_lea.vmem %s7, %s534
      %p536 = pneg %p208
      %p537 = pneg %p205
      %p538 = scmp.lt.s32.totalorder %s25, 1
      %s539 = scalar_select %p538, %s25, 1
      %s540 = smul.addr %s539, 2
      %s541 = scalar_lea.vmem %s8, %s540
      %p542 = pneg %p234
      %p543 = pneg %p231
      %p544 = scmp.lt.s32.totalorder %s25, 1
      %s545 = scalar_select %p544, %s25, 1
      %s546 = smul.addr %s545, 8
      %s547 = smul.addr %s546, 4
      %s548 = scalar_lea.vmem %s9, %s547
      %p549 = pneg %p260
      %p550 = pneg %p257
      %p551 = scmp.lt.s32.totalorder %s25, 1
      %s552 = scalar_select %p551, %s25, 1
      %s553 = smul.addr %s552, 8
      %s554 = smul.addr %s553, 4
      %s555 = scalar_lea.vmem %s10, %s554
      %p556 = pneg %p286
      %p557 = pneg %p283
      %p558 = scmp.lt.s32.totalorder %s25, 1
      %s559 = scalar_select %p558, %s25, 1
      %s560 = smul.addr %s559, 2
      %s561 = scalar_lea.vmem %s11, %s560
      %p562 = pneg %p312
      %p563 = pneg %p309
      %p564 = scmp.lt.s32.totalorder %s25, 1
      %s565 = scalar_select %p564, %s25, 1
      %s566 = smul.addr %s565, 16
      %s567 = smul.addr %s566, 4
      %s568 = scalar_lea.vmem %s12, %s567
      %p569 = pneg %p338
      %p570 = pneg %p335
      %p571 = scmp.lt.s32.totalorder %s25, 1
      %s572 = scalar_select %p571, %s25, 1
      %s573 = smul.addr %s572, 24
      %s574 = smul.addr %s573, 4
      %s575 = scalar_lea.vmem %s13, %s574
      %p576 = pneg %p364
      %p577 = pneg %p361
      %p578 = pneg %p390
      %p579 = pneg %p387
      %p580 = scmp.lt.s32.totalorder %s25, 1
      %s581 = scalar_select %p580, %s25, 1
      %s582 = smul.addr %s581, 2
      %s583 = smul.addr %s582, 4
      %s584 = scalar_lea.vmem %s14, %s583
      %p585 = scmp.lt.s32.totalorder %s25, 1
      %s586 = scalar_select %p585, %s25, 1
      %s587 = smul.addr %s586, 2
      %s588 = smul.addr %s587, 8
      %s589 = scalar_lea.vmem %s0, %s588
      %p590 = scmp.lt.s32.totalorder %s25, 1
      %s591 = scalar_select %p590, %s25, 1
      %s592 = smul.addr %s591, 8
      %s593 = smul.addr %s592, 4
      %s594 = scalar_lea.vmem %s5, %s593
      %p595 = scmp.lt.s32.totalorder %s25, 1
      %s596 = scalar_select %p595, %s25, 1
      %s597 = smul.addr %s596, 4
      %s598 = smul.addr %s597, 4
      %s599 = scalar_lea.vmem %s6, %s598
      %p600 = scmp.lt.s32.totalorder %s25, 1
      %s601 = scalar_select %p600, %s25, 1
      %s602 = scalar_lea.vmem %s7, %s601
      %p603 = scmp.lt.s32.totalorder %s25, 1
      %s604 = scalar_select %p603, %s25, 1
      %s605 = smul.addr %s604, 2
      %s606 = scalar_lea.vmem %s8, %s605
      %p607 = scmp.lt.s32.totalorder %s25, 1
      %s608 = scalar_select %p607, %s25, 1
      %s609 = smul.addr %s608, 8
      %s610 = smul.addr %s609, 4
      %s611 = scalar_lea.vmem %s9, %s610
      %p612 = scmp.lt.s32.totalorder %s25, 1
      %s613 = scalar_select %p612, %s25, 1
      %s614 = smul.addr %s613, 8
      %s615 = smul.addr %s614, 4
      %s616 = scalar_lea.vmem %s10, %s615
      %p617 = scmp.lt.s32.totalorder %s25, 1
      %s618 = scalar_select %p617, %s25, 1
      %s619 = smul.addr %s618, 2
      %s620 = scalar_lea.vmem %s11, %s619
      %p621 = scmp.lt.s32.totalorder %s25, 1
      %s622 = scalar_select %p621, %s25, 1
      %s623 = smul.addr %s622, 16
      %s624 = smul.addr %s623, 4
      %s625 = scalar_lea.vmem %s12, %s624
      %p626 = scmp.lt.s32.totalorder %s25, 1
      %s627 = scalar_select %p626, %s25, 1
      %s628 = smul.addr %s627, 24
      %s629 = smul.addr %s628, 4
      %s630 = scalar_lea.vmem %s13, %s629
      %p631 = scmp.lt.s32.totalorder %s25, 1
      %s632 = scalar_select %p631, %s25, 1
      %s633 = smul.addr %s632, 2
      %s634 = smul.addr %s633, 4
      %s635 = scalar_lea.vmem %s14, %s634
      %v637 = vld [vmem:[%s1] sm:$0xf]
      %v638 = vld [vmem:[%s1 + $0x4] sm:$0xf]
      %v639 = vld [vmem:[%s594] sm:$0xf]
      %v640 = vld [vmem:[%s594 + $0x4] sm:$0xf]
      %v641 = vld [vmem:[%s594 + $0x8] sm:$0xf]
      %v642 = vld [vmem:[%s594 + $0xc] sm:$0xf]
      %v643 = vld [vmem:[%s594 + $0x10] sm:$0xf]
      %v644 = vld [vmem:[%s594 + $0x14] sm:$0xf]
      %v645 = vld [vmem:[%s594 + $0x18] sm:$0xf]
      %v646 = vld [vmem:[%s594 + $0x1c] sm:$0xf]
      %v649 = vunpack.c.l.b16 %v637
      %v650 = vunpack.c.l.b16 %v638
      %v651 = vpack.c.b16 %v650, %v649
      %v660 = vunpack.c.l.b16 %v639
      %v661 = vunpack.c.l.b16 %v640
      %v662 = vunpack.c.l.b16 %v641
      %v663 = vunpack.c.l.b16 %v642
      %v664 = vunpack.c.l.b16 %v643
      %v665 = vunpack.c.l.b16 %v644
      %v666 = vunpack.c.l.b16 %v645
      %v667 = vunpack.c.l.b16 %v646
      %v668 = vpack.c.b16 %v661, %v660
      %v669 = vpack.c.b16 %v663, %v662
      %v670 = vpack.c.b16 %v665, %v664
      %v671 = vpack.c.b16 %v667, %v666
      %vm676 = vcmask 523264
      %v678 = vsel %vm676, %v651, 0
      %680 = vmatprep.subr.bf16.mxu0 0
      %681 = vmatpush1.bf16.msra.mxu0 %v668
      %682 = vmatprep.subr.bf16.mxu0 0
      %683 = vmatpush1.bf16.msra.mxu0 %v669
      %684 = vmatprep.subr.bf16.mxu0 0
      %685 = vmatpush1.bf16.msra.mxu0 %v670
      %686 = vmatprep.subr.bf16.mxu0 0
      %687 = vmatpush1.bf16.msra.mxu0 %v671
      %688 = vmatprep.subr.bf16.mxu0 0
      %689 = vmatpush1.bf16.msra.mxu0 0
      %690 = vmatprep.subr.bf16.mxu0 0
      %691 = vmatpush1.bf16.msra.mxu0 0
      %692 = vmatprep.subr.bf16.mxu0 0
      %693 = vmatpush1.bf16.msra.mxu0 0
      %694 = vmatprep.subr.bf16.mxu0 0
      %695 = vmatpush1.bf16.msra.mxu0 0
      %696 = vmatprep.subr.bf16.mxu0 0
      %697 = vmatpush1.bf16.msra.mxu0 0
      %698 = vmatprep.subr.bf16.mxu0 0
      %699 = vmatpush1.bf16.msra.mxu0 0
      %700 = vmatprep.subr.bf16.mxu0 0
      %701 = vmatpush1.bf16.msra.mxu0 0
      %702 = vmatprep.subr.bf16.mxu0 0
      %703 = vmatpush1.bf16.msra.mxu0 0
      %704 = vmatprep.subr.bf16.mxu0 0
      %705 = vmatpush1.bf16.msra.mxu0 0
      %706 = vmatprep.subr.bf16.mxu0 0
      %707 = vmatpush1.bf16.msra.mxu0 0
      %708 = vmatprep.subr.bf16.mxu0 0
      %709 = vmatpush1.bf16.msra.mxu0 0
      %710 = vmatprep.subr.bf16.mxu0 0
      %711 = vmatpush1.bf16.msra.mxu0 0
      %712 = vmatprep.mubr.bf16.mxu0 0
      %713 = vmatmul.mubr.bf16.gmra.mrb[0].mxu0 %v678
      %v714 = vpop.f32.mrb[0].mxu0
      %v715 = vadd.f32 0.0, %v714
      %v716 = vpop.f32.mrb[0].mxu0
      %v717 = vpop.f32.mrb[0].mxu0
      %v718 = vadd.f32 0.0, %v717
      %v719 = vpop.f32.mrb[0].mxu0
      %720 = vdwg.mxu0
      %v721 = vld [vmem:[%s2] sm:$0xff]
      %v722 = vld [vmem:[%s2 + $0x8] sm:$0xff]
      %v723 = vld [vmem:[%s3] sm:$0xff]
      %v724 = vld [vmem:[%s3 + $0x8] sm:$0xff]
      %v725 = vld [vmem:[%s4] sm:$0xff]
      %v726 = vld [vmem:[%s4 + $0x8] sm:$0xff]
      %v727 = vld [vmem:[%s4 + $0x10] sm:$0xff]
      %v728 = vld [vmem:[%s4 + $0x18] sm:$0xff]
      %v729 = vlaneseq
      %v730 = vshrl.u32 %v729, 7
      %v731 = vlaneseq
      %v732 = vand.u32 %v731, 127
      %vm733 = vcmp.gt.s32.totalorder %v732, %v730
      %v734 = vsel %vm733, -1e+30, 0.0
      %v735 = vld [vmem:[%s606] sm:$0x1]
      %v736 = vmul.f32 %v715, %v715
      %v737 = vmul.f32 %v718, %v718
      %vm738 = vcmask 261120
      %v739 = vsel %vm738, %v736, 0.0
      %740 = vadd.xlane.f32.xlu0 %v739
      %v741 = vpop.xlane.xlu0 %740
      %v742 = vsel %vm738, %v737, 0.0
      %743 = vadd.xlane.f32.xlu0 %v742
      %v744 = vpop.xlane.xlu0 %743
      %v745 = vrcp.pop 32.0
      %v746 = vmul.f32 %v741, %v745
      %v747 = vmul.f32 %v744, %v745
      %v748 = vadd.f32 %v746, 1e-05
      %v749 = vadd.f32 %v747, 1e-05
      %v750 = vrsqrt.pop %v748
      %v751 = vrsqrt.pop %v749
      %v752 = vmul.f32 %v715, %v750
      %v753 = vmul.f32 %v718, %v751
      %v755 = vlaneseq
      %v756 = vshrl.u32 %v755, 7
      %v757 = vsub.s32 0, %v756
      %v758 = vrot.slane %v735, %v757
      %v760 = vmul.f32 %v752, %v758
      %v761 = vmul.f32 %v753, %v758
      %v762 = vpack.c.bf16 %v761, %v760
      %v763 = vld [vmem:[%s611] sm:$0xf]
      %v764 = vld [vmem:[%s611 + $0x4] sm:$0xf]
      %v765 = vld [vmem:[%s611 + $0x8] sm:$0xf]
      %v766 = vld [vmem:[%s611 + $0xc] sm:$0xf]
      %v771 = vunpack.c.l.b16 %v763
      %v772 = vunpack.c.l.b16 %v764
      %v773 = vunpack.c.l.b16 %v765
      %v774 = vunpack.c.l.b16 %v766
      %v775 = vpack.c.b16 %v772, %v771
      %v776 = vpack.c.b16 %v774, %v773
      %v780 = vsel %vm738, %v762, 0
      %782 = vmatprep.subr.bf16.mxu0 0
      %783 = vmatpush1.bf16.msra.mxu0 %v775
      %784 = vmatprep.subr.bf16.mxu0 0
      %785 = vmatpush1.bf16.msra.mxu0 %v776
      %786 = vmatprep.subr.bf16.mxu0 0
      %787 = vmatpush1.bf16.msra.mxu0 0
      %788 = vmatprep.subr.bf16.mxu0 0
      %789 = vmatpush1.bf16.msra.mxu0 0
      %790 = vmatprep.subr.bf16.mxu0 0
      %791 = vmatpush1.bf16.msra.mxu0 0
      %792 = vmatprep.subr.bf16.mxu0 0
      %793 = vmatpush1.bf16.msra.mxu0 0
      %794 = vmatprep.subr.bf16.mxu0 0
      %795 = vmatpush1.bf16.msra.mxu0 0
      %796 = vmatprep.subr.bf16.mxu0 0
      %797 = vmatpush1.bf16.msra.mxu0 0
      %798 = vmatprep.subr.bf16.mxu0 0
      %799 = vmatpush1.bf16.msra.mxu0 0
      %800 = vmatprep.subr.bf16.mxu0 0
      %801 = vmatpush1.bf16.msra.mxu0 0
      %802 = vmatprep.subr.bf16.mxu0 0
      %803 = vmatpush1.bf16.msra.mxu0 0
      %804 = vmatprep.subr.bf16.mxu0 0
      %805 = vmatpush1.bf16.msra.mxu0 0
      %806 = vmatprep.subr.bf16.mxu0 0
      %807 = vmatpush1.bf16.msra.mxu0 0
      %808 = vmatprep.subr.bf16.mxu0 0
      %809 = vmatpush1.bf16.msra.mxu0 0
      %810 = vmatprep.subr.bf16.mxu0 0
      %811 = vmatpush1.bf16.msra.mxu0 0
      %812 = vmatprep.subr.bf16.mxu0 0
      %813 = vmatpush1.bf16.msra.mxu0 0
      %814 = vmatprep.mubr.bf16.mxu0 0
      %815 = vmatmul.mubr.bf16.gmra.mrb[0].mxu0 %v780
      %v816 = vpop.f32.mrb[0].mxu0
      %v817 = vadd.f32 0.0, %v816
      %v818 = vpop.f32.mrb[0].mxu0
      %v819 = vpop.f32.mrb[0].mxu0
      %v820 = vadd.f32 0.0, %v819
      %v821 = vpop.f32.mrb[0].mxu0
      %822 = vdwg.mxu0
      %v823 = vmul.f32 %v817, %v721
      %v824 = vmul.f32 %v820, %v722
      %v826 = vsel %vm738, %v817, 0
      %v829 = vsel %vm738, %v820, 0
      %831 = vmatprep.subr.mxu0 0.0
      %832 = vmatpush1.msra.mxu0 %v725
      %833 = vmatprep.subr.mxu0 0.0
      %834 = vmatpush1.msra.mxu0 %v726
      %835 = vmatprep.subr.mxu0 0.0
      %836 = vmatpush1.msra.mxu0 %v727
      %837 = vmatprep.subr.mxu0 0.0
      %838 = vmatpush1.msra.mxu0 %v728
      %839 = vmatprep.subr.mxu0 0.0
      %840 = vmatpush1.msra.mxu0 0.0
      %841 = vmatprep.subr.mxu0 0.0
      %842 = vmatpush1.msra.mxu0 0.0
      %843 = vmatprep.subr.mxu0 0.0
      %844 = vmatpush1.msra.mxu0 0.0
      %845 = vmatprep.subr.mxu0 0.0
      %846 = vmatpush1.msra.mxu0 0.0
      %847 = vmatprep.subr.mxu0 0.0
      %848 = vmatpush1.msra.mxu0 0.0
      %849 = vmatprep.subr.mxu0 0.0
      %850 = vmatpush1.msra.mxu0 0.0
      %851 = vmatprep.subr.mxu0 0.0
      %852 = vmatpush1.msra.mxu0 0.0
      %853 = vmatprep.subr.mxu0 0.0
      %854 = vmatpush1.msra.mxu0 0.0
      %855 = vmatprep.subr.mxu0 0.0
      %856 = vmatpush1.msra.mxu0 0.0
      %857 = vmatprep.subr.mxu0 0.0
      %858 = vmatpush1.msra.mxu0 0.0
      %859 = vmatprep.subr.mxu0 0.0
      %860 = vmatpush1.msra.mxu0 0.0
      %861 = vmatprep.subr.mxu0 0.0
      %862 = vmatpush1.msra.mxu0 0.0
      %863 = vmatprep.subr.mxu0 0.0
      %864 = vmatpush1.msra.mxu0 0.0
      %865 = vmatprep.subr.mxu0 0.0
      %866 = vmatpush1.msra.mxu0 0.0
      %867 = vmatprep.subr.mxu0 0.0
      %868 = vmatpush1.msra.mxu0 0.0
      %869 = vmatprep.subr.mxu0 0.0
      %870 = vmatpush1.msra.mxu0 0.0
      %871 = vmatprep.subr.mxu0 0.0
      %872 = vmatpush1.msra.mxu0 0.0
      %873 = vmatprep.subr.mxu0 0.0
      %874 = vmatpush1.msra.mxu0 0.0
      %875 = vmatprep.subr.mxu0 0.0
      %876 = vmatpush1.msra.mxu0 0.0
      %877 = vmatprep.subr.mxu0 0.0
      %878 = vmatpush1.msra.mxu0 0.0
      %879 = vmatprep.subr.mxu0 0.0
      %880 = vmatpush1.msra.mxu0 0.0
      %881 = vmatprep.subr.mxu0 0.0
      %882 = vmatpush1.msra.mxu0 0.0
      %883 = vmatprep.subr.mxu0 0.0
      %884 = vmatpush1.msra.mxu0 0.0
      %885 = vmatprep.subr.mxu0 0.0
      %886 = vmatpush1.msra.mxu0 0.0
      %887 = vmatprep.subr.mxu0 0.0
      %888 = vmatpush1.msra.mxu0 0.0
      %889 = vmatprep.subr.mxu0 0.0
      %890 = vmatpush1.msra.mxu0 0.0
      %891 = vmatprep.subr.mxu0 0.0
      %892 = vmatpush1.msra.mxu0 0.0
      %893 = vmatprep.subr.mxu0 0.0
      %894 = vmatpush1.msra.mxu0 0.0
      %895 = vmatprep.mubr.f32.mxu0 0.0
      %896 = vmatmul.mubr.f32.gmra.mrb[0].mxu0 %v826
      %v897 = vpop.f32.mrb[0].mxu0
      %v898 = vadd.f32 0.0, %v897
      %v899 = vpop.f32.mrb[0].mxu0
      %900 = vmatprep.mubr.f32.mxu0 0.0
      %901 = vmatmul.mubr.f32.gmra.mrb[0].mxu0 %v829
      %v902 = vpop.f32.mrb[0].mxu0
      %v903 = vadd.f32 0.0, %v902
      %v904 = vpop.f32.mrb[0].mxu0
      %905 = vdwg.mxu0
      %v906 = vmul.f32 %v898, %v723
      %v907 = vmul.f32 %v903, %v724
      %v908 = vadd.f32 %v823, %v906
      %v909 = vadd.f32 %v824, %v907
      %912 = vrot.lane.b32.xlu0 %v721, 32
      %v913 = vpop.permute.xlu0 %912
      %914 = vrot.lane.b32.xlu0 %v722, 32
      %v915 = vpop.permute.xlu0 %914
      %v918 = vmul.f32 %v817, %v913
      %v919 = vmul.f32 %v820, %v915
      %920 = vrot.lane.b32.xlu0 %v817, 96
      %v921 = vpop.permute.xlu0 %920
      %922 = vrot.lane.b32.xlu0 %v820, 96
      %v923 = vpop.permute.xlu0 %922
      %v924 = vsel %vm738, %v921, 0
      %v926 = vsel %vm738, %v923, 0
      %928 = vmatprep.subr.mxu0 0.0
      %929 = vmatpush1.msra.mxu0 %v725
      %930 = vmatprep.subr.mxu0 0.0
      %931 = vmatpush1.msra.mxu0 %v726
      %932 = vmatprep.subr.mxu0 0.0
      %933 = vmatpush1.msra.mxu0 %v727
      %934 = vmatprep.subr.mxu0 0.0
      %935 = vmatpush1.msra.mxu0 %v728
      %936 = vmatprep.subr.mxu0 0.0
      %937 = vmatpush1.msra.mxu0 0.0
      %938 = vmatprep.subr.mxu0 0.0
      %939 = vmatpush1.msra.mxu0 0.0
      %940 = vmatprep.subr.mxu0 0.0
      %941 = vmatpush1.msra.mxu0 0.0
      %942 = vmatprep.subr.mxu0 0.0
      %943 = vmatpush1.msra.mxu0 0.0
      %944 = vmatprep.subr.mxu0 0.0
      %945 = vmatpush1.msra.mxu0 0.0
      %946 = vmatprep.subr.mxu0 0.0
      %947 = vmatpush1.msra.mxu0 0.0
      %948 = vmatprep.subr.mxu0 0.0
      %949 = vmatpush1.msra.mxu0 0.0
      %950 = vmatprep.subr.mxu0 0.0
      %951 = vmatpush1.msra.mxu0 0.0
      %952 = vmatprep.subr.mxu0 0.0
      %953 = vmatpush1.msra.mxu0 0.0
      %954 = vmatprep.subr.mxu0 0.0
      %955 = vmatpush1.msra.mxu0 0.0
      %956 = vmatprep.subr.mxu0 0.0
      %957 = vmatpush1.msra.mxu0 0.0
      %958 = vmatprep.subr.mxu0 0.0
      %959 = vmatpush1.msra.mxu0 0.0
      %960 = vmatprep.subr.mxu0 0.0
      %961 = vmatpush1.msra.mxu0 0.0
      %962 = vmatprep.subr.mxu0 0.0
      %963 = vmatpush1.msra.mxu0 0.0
      %964 = vmatprep.subr.mxu0 0.0
      %965 = vmatpush1.msra.mxu0 0.0
      %966 = vmatprep.subr.mxu0 0.0
      %967 = vmatpush1.msra.mxu0 0.0
      %968 = vmatprep.subr.mxu0 0.0
      %969 = vmatpush1.msra.mxu0 0.0
      %970 = vmatprep.subr.mxu0 0.0
      %971 = vmatpush1.msra.mxu0 0.0
      %972 = vmatprep.subr.mxu0 0.0
      %973 = vmatpush1.msra.mxu0 0.0
      %974 = vmatprep.subr.mxu0 0.0
      %975 = vmatpush1.msra.mxu0 0.0
      %976 = vmatprep.subr.mxu0 0.0
      %977 = vmatpush1.msra.mxu0 0.0
      %978 = vmatprep.subr.mxu0 0.0
      %979 = vmatpush1.msra.mxu0 0.0
      %980 = vmatprep.subr.mxu0 0.0
      %981 = vmatpush1.msra.mxu0 0.0
      %982 = vmatprep.subr.mxu0 0.0
      %983 = vmatpush1.msra.mxu0 0.0
      %984 = vmatprep.subr.mxu0 0.0
      %985 = vmatpush1.msra.mxu0 0.0
      %986 = vmatprep.subr.mxu0 0.0
      %987 = vmatpush1.msra.mxu0 0.0
      %988 = vmatprep.subr.mxu0 0.0
      %989 = vmatpush1.msra.mxu0 0.0
      %990 = vmatprep.subr.mxu0 0.0
      %991 = vmatpush1.msra.mxu0 0.0
      %992 = vmatprep.mubr.f32.mxu0 0.0
      %993 = vmatmul.mubr.f32.gmra.mrb[0].mxu0 %v924
      %v994 = vpop.f32.mrb[0].mxu0
      %v995 = vadd.f32 0.0, %v994
      %v996 = vpop.f32.mrb[0].mxu0
      %997 = vmatprep.mubr.f32.mxu0 0.0
      %998 = vmatmul.mubr.f32.gmra.mrb[0].mxu0 %v926
      %v999 = vpop.f32.mrb[0].mxu0
      %v1000 = vadd.f32 0.0, %v999
      %v1001 = vpop.f32.mrb[0].mxu0
      %1002 = vdwg.mxu0
      %v1003 = vmul.f32 %v995, %v723
      %v1004 = vmul.f32 %v1000, %v724
      %1007 = vrot.lane.b32.xlu0 %v1003, 32
      %v1008 = vpop.permute.xlu0 %1007
      %1009 = vrot.lane.b32.xlu0 %v1004, 32
      %v1010 = vpop.permute.xlu0 %1009
      %v1013 = vadd.f32 %v918, %v1008
      %v1014 = vadd.f32 %v919, %v1010
      %1016 = vrot.lane.b32.xlu0 %v1013, 96
      %v1017 = vpop.permute.xlu0 %1016
      %vm1018 = vcmask 64512
      %v1020 = vsel %vm1018, %v908, 0
      %v1022 = vsel %vm1018, %v1017, 0
      %1024 = vmatprep.subr.mxu0 0.0
      %1025 = vmatpush1.xpose.msra.mxu0 %v1022
      %1026 = vmatprep.subr.mxu0 0.0
      %1027 = vmatpush1.xpose.msra.mxu0 0.0
      %1028 = vmatprep.subr.mxu0 0.0
      %1029 = vmatpush1.xpose.msra.mxu0 0.0
      %1030 = vmatprep.subr.mxu0 0.0
      %1031 = vmatpush1.xpose.msra.mxu0 0.0
      %1032 = vmatprep.subr.mxu0 0.0
      %1033 = vmatpush1.xpose.msra.mxu0 0.0
      %1034 = vmatprep.subr.mxu0 0.0
      %1035 = vmatpush1.xpose.msra.mxu0 0.0
      %1036 = vmatprep.subr.mxu0 0.0
      %1037 = vmatpush1.xpose.msra.mxu0 0.0
      %1038 = vmatprep.subr.mxu0 0.0
      %1039 = vmatpush1.xpose.msra.mxu0 0.0
      %1040 = vmatprep.subr.mxu0 0.0
      %1041 = vmatpush1.xpose.msra.mxu0 0.0
      %1042 = vmatprep.subr.mxu0 0.0
      %1043 = vmatpush1.xpose.msra.mxu0 0.0
      %1044 = vmatprep.subr.mxu0 0.0
      %1045 = vmatpush1.xpose.msra.mxu0 0.0
      %1046 = vmatprep.subr.mxu0 0.0
      %1047 = vmatpush1.xpose.msra.mxu0 0.0
      %1048 = vmatprep.subr.mxu0 0.0
      %1049 = vmatpush1.xpose.msra.mxu0 0.0
      %1050 = vmatprep.subr.mxu0 0.0
      %1051 = vmatpush1.xpose.msra.mxu0 0.0
      %1052 = vmatprep.subr.mxu0 0.0
      %1053 = vmatpush1.xpose.msra.mxu0 0.0
      %1054 = vmatprep.subr.mxu0 0.0
      %1055 = vmatpush1.xpose.msra.mxu0 0.0
      %1056 = vmatprep.subr.mxu0 0.0
      %1057 = vmatpush1.xpose.msra.mxu0 0.0
      %1058 = vmatprep.subr.mxu0 0.0
      %1059 = vmatpush1.xpose.msra.mxu0 0.0
      %1060 = vmatprep.subr.mxu0 0.0
      %1061 = vmatpush1.xpose.msra.mxu0 0.0
      %1062 = vmatprep.subr.mxu0 0.0
      %1063 = vmatpush1.xpose.msra.mxu0 0.0
      %1064 = vmatprep.subr.mxu0 0.0
      %1065 = vmatpush1.xpose.msra.mxu0 0.0
      %1066 = vmatprep.subr.mxu0 0.0
      %1067 = vmatpush1.xpose.msra.mxu0 0.0
      %1068 = vmatprep.subr.mxu0 0.0
      %1069 = vmatpush1.xpose.msra.mxu0 0.0
      %1070 = vmatprep.subr.mxu0 0.0
      %1071 = vmatpush1.xpose.msra.mxu0 0.0
      %1072 = vmatprep.subr.mxu0 0.0
      %1073 = vmatpush1.xpose.msra.mxu0 0.0
      %1074 = vmatprep.subr.mxu0 0.0
      %1075 = vmatpush1.xpose.msra.mxu0 0.0
      %1076 = vmatprep.subr.mxu0 0.0
      %1077 = vmatpush1.xpose.msra.mxu0 0.0
      %1078 = vmatprep.subr.mxu0 0.0
      %1079 = vmatpush1.xpose.msra.mxu0 0.0
      %1080 = vmatprep.subr.mxu0 0.0
      %1081 = vmatpush1.xpose.msra.mxu0 0.0
      %1082 = vmatprep.subr.mxu0 0.0
      %1083 = vmatpush1.xpose.msra.mxu0 0.0
      %1084 = vmatprep.subr.mxu0 0.0
      %1085 = vmatpush1.xpose.msra.mxu0 0.0
      %1086 = vmatprep.subr.mxu0 0.0
      %1087 = vmatpush1.xpose.msra.mxu0 0.0
      %1088 = vmatprep.mubr.f32.mxu0 0.0
      %1089 = vmatmul.mubr.f32.gmra.mrb[0].mxu0 %v1020
      %v1090 = vpop.f32.mrb[0].mxu0
      %v1091 = vadd.f32 0.0, %v1090
      %v1092 = vpop.f32.mrb[0].mxu0
      %1093 = vdwg.mxu0
      %v1094 = vmul.f32 %v1091, 0.35355338
      %v1095 = vadd.f32 %v1094, %v734
      %v1096 = vsel %vm1018, %v1095, -inf
      %1097 = vmax.xlane.f32.xlu0 %v1096
      %v1098 = vpop.xlane.xlu0 %1097
      %v1099 = vsub.f32 %v1095, %v1098
      %v1100 = vmul.f32 %v1099, 1.442695
      %v1101 = vpow.pop %v1100
      %v1102 = vsel %vm1018, %v1101, 0.0
      %1103 = vadd.xlane.f32.xlu0 %v1102
      %v1104 = vpop.xlane.xlu0 %1103
      %v1105 = vrcp.pop %v1104
      %v1106 = vmul.f32 %v1101, %v1105
      %1107 = vrot.lane.b32.xlu0 %v817, 64
      %v1108 = vpop.permute.xlu0 %1107
      %v1111 = vsel %vm1018, %v1106, 0
      %1113 = vmatprep.subr.mxu0 0.0
      %1114 = vmatpush1.msra.mxu0 %v1108
      %1115 = vmatprep.subr.mxu0 0.0
      %1116 = vmatpush1.msra.mxu0 0.0
      %1117 = vmatprep.subr.mxu0 0.0
      %1118 = vmatpush1.msra.mxu0 0.0
      %1119 = vmatprep.subr.mxu0 0.0
      %1120 = vmatpush1.msra.mxu0 0.0
      %1121 = vmatprep.subr.mxu0 0.0
      %1122 = vmatpush1.msra.mxu0 0.0
      %1123 = vmatprep.subr.mxu0 0.0
      %1124 = vmatpush1.msra.mxu0 0.0
      %1125 = vmatprep.subr.mxu0 0.0
      %1126 = vmatpush1.msra.mxu0 0.0
      %1127 = vmatprep.subr.mxu0 0.0
      %1128 = vmatpush1.msra.mxu0 0.0
      %1129 = vmatprep.subr.mxu0 0.0
      %1130 = vmatpush1.msra.mxu0 0.0
      %1131 = vmatprep.subr.mxu0 0.0
      %1132 = vmatpush1.msra.mxu0 0.0
      %1133 = vmatprep.subr.mxu0 0.0
      %1134 = vmatpush1.msra.mxu0 0.0
      %1135 = vmatprep.subr.mxu0 0.0
      %1136 = vmatpush1.msra.mxu0 0.0
      %1137 = vmatprep.subr.mxu0 0.0
      %1138 = vmatpush1.msra.mxu0 0.0
      %1139 = vmatprep.subr.mxu0 0.0
      %1140 = vmatpush1.msra.mxu0 0.0
      %1141 = vmatprep.subr.mxu0 0.0
      %1142 = vmatpush1.msra.mxu0 0.0
      %1143 = vmatprep.subr.mxu0 0.0
      %1144 = vmatpush1.msra.mxu0 0.0
      %1145 = vmatprep.subr.mxu0 0.0
      %1146 = vmatpush1.msra.mxu0 0.0
      %1147 = vmatprep.subr.mxu0 0.0
      %1148 = vmatpush1.msra.mxu0 0.0
      %1149 = vmatprep.subr.mxu0 0.0
      %1150 = vmatpush1.msra.mxu0 0.0
      %1151 = vmatprep.subr.mxu0 0.0
      %1152 = vmatpush1.msra.mxu0 0.0
      %1153 = vmatprep.subr.mxu0 0.0
      %1154 = vmatpush1.msra.mxu0 0.0
      %1155 = vmatprep.subr.mxu0 0.0
      %1156 = vmatpush1.msra.mxu0 0.0
      %1157 = vmatprep.subr.mxu0 0.0
      %1158 = vmatpush1.msra.mxu0 0.0
      %1159 = vmatprep.subr.mxu0 0.0
      %1160 = vmatpush1.msra.mxu0 0.0
      %1161 = vmatprep.subr.mxu0 0.0
      %1162 = vmatpush1.msra.mxu0 0.0
      %1163 = vmatprep.subr.mxu0 0.0
      %1164 = vmatpush1.msra.mxu0 0.0
      %1165 = vmatprep.subr.mxu0 0.0
      %1166 = vmatpush1.msra.mxu0 0.0
      %1167 = vmatprep.subr.mxu0 0.0
      %1168 = vmatpush1.msra.mxu0 0.0
      %1169 = vmatprep.subr.mxu0 0.0
      %1170 = vmatpush1.msra.mxu0 0.0
      %1171 = vmatprep.subr.mxu0 0.0
      %1172 = vmatpush1.msra.mxu0 0.0
      %1173 = vmatprep.subr.mxu0 0.0
      %1174 = vmatpush1.msra.mxu0 0.0
      %1175 = vmatprep.subr.mxu0 0.0
      %1176 = vmatpush1.msra.mxu0 0.0
      %1177 = vmatprep.mubr.f32.mxu0 0.0
      %1178 = vmatmul.mubr.f32.gmra.mrb[0].mxu0 %v1111
      %v1179 = vpop.f32.mrb[0].mxu0
      %v1180 = vadd.f32 0.0, %v1179
      %v1181 = vpop.f32.mrb[0].mxu0
      %1182 = vdwg.mxu0
      %1183 = vrot.lane.b32.xlu0 %v908, 120
      %v1184 = vpop.permute.xlu0 %1183
      %1185 = vrot.lane.b32.xlu0 %v1013, 88
      %v1186 = vpop.permute.xlu0 %1185
      %v1187 = vsel %vm1018, %v1184, 0
      %v1189 = vsel %vm1018, %v1186, 0
      %1191 = vmatprep.subr.mxu0 0.0
      %1192 = vmatpush1.xpose.msra.mxu0 %v1189
      %1193 = vmatprep.subr.mxu0 0.0
      %1194 = vmatpush1.xpose.msra.mxu0 0.0
      %1195 = vmatprep.subr.mxu0 0.0
      %1196 = vmatpush1.xpose.msra.mxu0 0.0
      %1197 = vmatprep.subr.mxu0 0.0
      %1198 = vmatpush1.xpose.msra.mxu0 0.0
      %1199 = vmatprep.subr.mxu0 0.0
      %1200 = vmatpush1.xpose.msra.mxu0 0.0
      %1201 = vmatprep.subr.mxu0 0.0
      %1202 = vmatpush1.xpose.msra.mxu0 0.0
      %1203 = vmatprep.subr.mxu0 0.0
      %1204 = vmatpush1.xpose.msra.mxu0 0.0
      %1205 = vmatprep.subr.mxu0 0.0
      %1206 = vmatpush1.xpose.msra.mxu0 0.0
      %1207 = vmatprep.subr.mxu0 0.0
      %1208 = vmatpush1.xpose.msra.mxu0 0.0
      %1209 = vmatprep.subr.mxu0 0.0
      %1210 = vmatpush1.xpose.msra.mxu0 0.0
      %1211 = vmatprep.subr.mxu0 0.0
      %1212 = vmatpush1.xpose.msra.mxu0 0.0
      %1213 = vmatprep.subr.mxu0 0.0
      %1214 = vmatpush1.xpose.msra.mxu0 0.0
      %1215 = vmatprep.subr.mxu0 0.0
      %1216 = vmatpush1.xpose.msra.mxu0 0.0
      %1217 = vmatprep.subr.mxu0 0.0
      %1218 = vmatpush1.xpose.msra.mxu0 0.0
      %1219 = vmatprep.subr.mxu0 0.0
      %1220 = vmatpush1.xpose.msra.mxu0 0.0
      %1221 = vmatprep.subr.mxu0 0.0
      %1222 = vmatpush1.xpose.msra.mxu0 0.0
      %1223 = vmatprep.subr.mxu0 0.0
      %1224 = vmatpush1.xpose.msra.mxu0 0.0
      %1225 = vmatprep.subr.mxu0 0.0
      %1226 = vmatpush1.xpose.msra.mxu0 0.0
      %1227 = vmatprep.subr.mxu0 0.0
      %1228 = vmatpush1.xpose.msra.mxu0 0.0
      %1229 = vmatprep.subr.mxu0 0.0
      %1230 = vmatpush1.xpose.msra.mxu0 0.0
      %1231 = vmatprep.subr.mxu0 0.0
      %1232 = vmatpush1.xpose.msra.mxu0 0.0
      %1233 = vmatprep.subr.mxu0 0.0
      %1234 = vmatpush1.xpose.msra.mxu0 0.0
      %1235 = vmatprep.subr.mxu0 0.0
      %1236 = vmatpush1.xpose.msra.mxu0 0.0
      %1237 = vmatprep.subr.mxu0 0.0
      %1238 = vmatpush1.xpose.msra.mxu0 0.0
      %1239 = vmatprep.subr.mxu0 0.0
      %1240 = vmatpush1.xpose.msra.mxu0 0.0
      %1241 = vmatprep.subr.mxu0 0.0
      %1242 = vmatpush1.xpose.msra.mxu0 0.0
      %1243 = vmatprep.subr.mxu0 0.0
      %1244 = vmatpush1.xpose.msra.mxu0 0.0
      %1245 = vmatprep.subr.mxu0 0.0
      %1246 = vmatpush1.xpose.msra.mxu0 0.0
      %1247 = vmatprep.subr.mxu0 0.0
      %1248 = vmatpush1.xpose.msra.mxu0 0.0
      %1249 = vmatprep.subr.mxu0 0.0
      %1250 = vmatpush1.xpose.msra.mxu0 0.0
      %1251 = vmatprep.subr.mxu0 0.0
      %1252 = vmatpush1.xpose.msra.mxu0 0.0
      %1253 = vmatprep.subr.mxu0 0.0
      %1254 = vmatpush1.xpose.msra.mxu0 0.0
      %1255 = vmatprep.mubr.f32.mxu0 0.0
      %1256 = vmatmul.mubr.f32.gmra.mrb[0].mxu0 %v1187
      %v1257 = vpop.f32.mrb[0].mxu0
      %v1258 = vadd.f32 0.0, %v1257
      %v1259 = vpop.f32.mrb[0].mxu0
      %1260 = vdwg.mxu0
      %v1261 = vmul.f32 %v1258, 0.35355338
      %v1262 = vadd.f32 %v1261, %v734
      %v1263 = vsel %vm1018, %v1262, -inf
      %1264 = vmax.xlane.f32.xlu0 %v1263
      %v1265 = vpop.xlane.xlu0 %1264
      %v1266 = vsub.f32 %v1262, %v1265
      %v1267 = vmul.f32 %v1266, 1.442695
      %v1268 = vpow.pop %v1267
      %v1269 = vsel %vm1018, %v1268, 0.0
      %1270 = vadd.xlane.f32.xlu0 %v1269
      %v1271 = vpop.xlane.xlu0 %1270
      %v1272 = vrcp.pop %v1271
      %v1273 = vmul.f32 %v1268, %v1272
      %1274 = vrot.lane.b32.xlu0 %v817, 56
      %v1275 = vpop.permute.xlu0 %1274
      %v1278 = vsel %vm1018, %v1273, 0
      %1280 = vmatprep.subr.mxu0 0.0
      %1281 = vmatpush1.msra.mxu0 %v1275
      %1282 = vmatprep.subr.mxu0 0.0
      %1283 = vmatpush1.msra.mxu0 0.0
      %1284 = vmatprep.subr.mxu0 0.0
      %1285 = vmatpush1.msra.mxu0 0.0
      %1286 = vmatprep.subr.mxu0 0.0
      %1287 = vmatpush1.msra.mxu0 0.0
      %1288 = vmatprep.subr.mxu0 0.0
      %1289 = vmatpush1.msra.mxu0 0.0
      %1290 = vmatprep.subr.mxu0 0.0
      %1291 = vmatpush1.msra.mxu0 0.0
      %1292 = vmatprep.subr.mxu0 0.0
      %1293 = vmatpush1.msra.mxu0 0.0
      %1294 = vmatprep.subr.mxu0 0.0
      %1295 = vmatpush1.msra.mxu0 0.0
      %1296 = vmatprep.subr.mxu0 0.0
      %1297 = vmatpush1.msra.mxu0 0.0
      %1298 = vmatprep.subr.mxu0 0.0
      %1299 = vmatpush1.msra.mxu0 0.0
      %1300 = vmatprep.subr.mxu0 0.0
      %1301 = vmatpush1.msra.mxu0 0.0
      %1302 = vmatprep.subr.mxu0 0.0
      %1303 = vmatpush1.msra.mxu0 0.0
      %1304 = vmatprep.subr.mxu0 0.0
      %1305 = vmatpush1.msra.mxu0 0.0
      %1306 = vmatprep.subr.mxu0 0.0
      %1307 = vmatpush1.msra.mxu0 0.0
      %1308 = vmatprep.subr.mxu0 0.0
      %1309 = vmatpush1.msra.mxu0 0.0
      %1310 = vmatprep.subr.mxu0 0.0
      %1311 = vmatpush1.msra.mxu0 0.0
      %1312 = vmatprep.subr.mxu0 0.0
      %1313 = vmatpush1.msra.mxu0 0.0
      %1314 = vmatprep.subr.mxu0 0.0
      %1315 = vmatpush1.msra.mxu0 0.0
      %1316 = vmatprep.subr.mxu0 0.0
      %1317 = vmatpush1.msra.mxu0 0.0
      %1318 = vmatprep.subr.mxu0 0.0
      %1319 = vmatpush1.msra.mxu0 0.0
      %1320 = vmatprep.subr.mxu0 0.0
      %1321 = vmatpush1.msra.mxu0 0.0
      %1322 = vmatprep.subr.mxu0 0.0
      %1323 = vmatpush1.msra.mxu0 0.0
      %1324 = vmatprep.subr.mxu0 0.0
      %1325 = vmatpush1.msra.mxu0 0.0
      %1326 = vmatprep.subr.mxu0 0.0
      %1327 = vmatpush1.msra.mxu0 0.0
      %1328 = vmatprep.subr.mxu0 0.0
      %1329 = vmatpush1.msra.mxu0 0.0
      %1330 = vmatprep.subr.mxu0 0.0
      %1331 = vmatpush1.msra.mxu0 0.0
      %1332 = vmatprep.subr.mxu0 0.0
      %1333 = vmatpush1.msra.mxu0 0.0
      %1334 = vmatprep.subr.mxu0 0.0
      %1335 = vmatpush1.msra.mxu0 0.0
      %1336 = vmatprep.subr.mxu0 0.0
      %1337 = vmatpush1.msra.mxu0 0.0
      %1338 = vmatprep.subr.mxu0 0.0
      %1339 = vmatpush1.msra.mxu0 0.0
      %1340 = vmatprep.subr.mxu0 0.0
      %1341 = vmatpush1.msra.mxu0 0.0
      %1342 = vmatprep.subr.mxu0 0.0
      %1343 = vmatpush1.msra.mxu0 0.0
      %1344 = vmatprep.mubr.f32.mxu0 0.0
      %1345 = vmatmul.mubr.f32.gmra.mrb[0].mxu0 %v1278
      %v1346 = vpop.f32.mrb[0].mxu0
      %v1347 = vadd.f32 0.0, %v1346
      %v1348 = vpop.f32.mrb[0].mxu0
      %1349 = vdwg.mxu0
      %1350 = vrot.lane.b32.xlu0 %v908, 112
      %v1351 = vpop.permute.xlu0 %1350
      %1352 = vrot.lane.b32.xlu0 %v1013, 80
      %v1353 = vpop.permute.xlu0 %1352
      %v1354 = vsel %vm1018, %v1351, 0
      %v1356 = vsel %vm1018, %v1353, 0
      %1358 = vmatprep.subr.mxu0 0.0
      %1359 = vmatpush1.xpose.msra.mxu0 %v1356
      %1360 = vmatprep.subr.mxu0 0.0
      %1361 = vmatpush1.xpose.msra.mxu0 0.0
      %1362 = vmatprep.subr.mxu0 0.0
      %1363 = vmatpush1.xpose.msra.mxu0 0.0
      %1364 = vmatprep.subr.mxu0 0.0
      %1365 = vmatpush1.xpose.msra.mxu0 0.0
      %1366 = vmatprep.subr.mxu0 0.0
      %1367 = vmatpush1.xpose.msra.mxu0 0.0
      %1368 = vmatprep.subr.mxu0 0.0
      %1369 = vmatpush1.xpose.msra.mxu0 0.0
      %1370 = vmatprep.subr.mxu0 0.0
      %1371 = vmatpush1.xpose.msra.mxu0 0.0
      %1372 = vmatprep.subr.mxu0 0.0
      %1373 = vmatpush1.xpose.msra.mxu0 0.0
      %1374 = vmatprep.subr.mxu0 0.0
      %1375 = vmatpush1.xpose.msra.mxu0 0.0
      %1376 = vmatprep.subr.mxu0 0.0
      %1377 = vmatpush1.xpose.msra.mxu0 0.0
      %1378 = vmatprep.subr.mxu0 0.0
      %1379 = vmatpush1.xpose.msra.mxu0 0.0
      %1380 = vmatprep.subr.mxu0 0.0
      %1381 = vmatpush1.xpose.msra.mxu0 0.0
      %1382 = vmatprep.subr.mxu0 0.0
      %1383 = vmatpush1.xpose.msra.mxu0 0.0
      %1384 = vmatprep.subr.mxu0 0.0
      %1385 = vmatpush1.xpose.msra.mxu0 0.0
      %1386 = vmatprep.subr.mxu0 0.0
      %1387 = vmatpush1.xpose.msra.mxu0 0.0
      %1388 = vmatprep.subr.mxu0 0.0
      %1389 = vmatpush1.xpose.msra.mxu0 0.0
      %1390 = vmatprep.subr.mxu0 0.0
      %1391 = vmatpush1.xpose.msra.mxu0 0.0
      %1392 = vmatprep.subr.mxu0 0.0
      %1393 = vmatpush1.xpose.msra.mxu0 0.0
      %1394 = vmatprep.subr.mxu0 0.0
      %1395 = vmatpush1.xpose.msra.mxu0 0.0
      %1396 = vmatprep.subr.mxu0 0.0
      %1397 = vmatpush1.xpose.msra.mxu0 0.0
      %1398 = vmatprep.subr.mxu0 0.0
      %1399 = vmatpush1.xpose.msra.mxu0 0.0
      %1400 = vmatprep.subr.mxu0 0.0
      %1401 = vmatpush1.xpose.msra.mxu0 0.0
      %1402 = vmatprep.subr.mxu0 0.0
      %1403 = vmatpush1.xpose.msra.mxu0 0.0
      %1404 = vmatprep.subr.mxu0 0.0
      %1405 = vmatpush1.xpose.msra.mxu0 0.0
      %1406 = vmatprep.subr.mxu0 0.0
      %1407 = vmatpush1.xpose.msra.mxu0 0.0
      %1408 = vmatprep.subr.mxu0 0.0
      %1409 = vmatpush1.xpose.msra.mxu0 0.0
      %1410 = vmatprep.subr.mxu0 0.0
      %1411 = vmatpush1.xpose.msra.mxu0 0.0
      %1412 = vmatprep.subr.mxu0 0.0
      %1413 = vmatpush1.xpose.msra.mxu0 0.0
      %1414 = vmatprep.subr.mxu0 0.0
      %1415 = vmatpush1.xpose.msra.mxu0 0.0
      %1416 = vmatprep.subr.mxu0 0.0
      %1417 = vmatpush1.xpose.msra.mxu0 0.0
      %1418 = vmatprep.subr.mxu0 0.0
      %1419 = vmatpush1.xpose.msra.mxu0 0.0
      %1420 = vmatprep.subr.mxu0 0.0
      %1421 = vmatpush1.xpose.msra.mxu0 0.0
      %1422 = vmatprep.mubr.f32.mxu0 0.0
      %1423 = vmatmul.mubr.f32.gmra.mrb[0].mxu0 %v1354
      %v1424 = vpop.f32.mrb[0].mxu0
      %v1425 = vadd.f32 0.0, %v1424
      %v1426 = vpop.f32.mrb[0].mxu0
      %1427 = vdwg.mxu0
      %v1428 = vmul.f32 %v1425, 0.35355338
      %v1429 = vadd.f32 %v1428, %v734
      %v1430 = vsel %vm1018, %v1429, -inf
      %1431 = vmax.xlane.f32.xlu0 %v1430
      %v1432 = vpop.xlane.xlu0 %1431
      %v1433 = vsub.f32 %v1429, %v1432
      %v1434 = vmul.f32 %v1433, 1.442695
      %v1435 = vpow.pop %v1434
      %v1436 = vsel %vm1018, %v1435, 0.0
      %1437 = vadd.xlane.f32.xlu0 %v1436
      %v1438 = vpop.xlane.xlu0 %1437
      %v1439 = vrcp.pop %v1438
      %v1440 = vmul.f32 %v1435, %v1439
      %1441 = vrot.lane.b32.xlu0 %v817, 48
      %v1442 = vpop.permute.xlu0 %1441
      %v1445 = vsel %vm1018, %v1440, 0
      %1447 = vmatprep.subr.mxu0 0.0
      %1448 = vmatpush1.msra.mxu0 %v1442
      %1449 = vmatprep.subr.mxu0 0.0
      %1450 = vmatpush1.msra.mxu0 0.0
      %1451 = vmatprep.subr.mxu0 0.0
      %1452 = vmatpush1.msra.mxu0 0.0
      %1453 = vmatprep.subr.mxu0 0.0
      %1454 = vmatpush1.msra.mxu0 0.0
      %1455 = vmatprep.subr.mxu0 0.0
      %1456 = vmatpush1.msra.mxu0 0.0
      %1457 = vmatprep.subr.mxu0 0.0
      %1458 = vmatpush1.msra.mxu0 0.0
      %1459 = vmatprep.subr.mxu0 0.0
      %1460 = vmatpush1.msra.mxu0 0.0
      %1461 = vmatprep.subr.mxu0 0.0
      %1462 = vmatpush1.msra.mxu0 0.0
      %1463 = vmatprep.subr.mxu0 0.0
      %1464 = vmatpush1.msra.mxu0 0.0
      %1465 = vmatprep.subr.mxu0 0.0
      %1466 = vmatpush1.msra.mxu0 0.0
      %1467 = vmatprep.subr.mxu0 0.0
      %1468 = vmatpush1.msra.mxu0 0.0
      %1469 = vmatprep.subr.mxu0 0.0
      %1470 = vmatpush1.msra.mxu0 0.0
      %1471 = vmatprep.subr.mxu0 0.0
      %1472 = vmatpush1.msra.mxu0 0.0
      %1473 = vmatprep.subr.mxu0 0.0
      %1474 = vmatpush1.msra.mxu0 0.0
      %1475 = vmatprep.subr.mxu0 0.0
      %1476 = vmatpush1.msra.mxu0 0.0
      %1477 = vmatprep.subr.mxu0 0.0
      %1478 = vmatpush1.msra.mxu0 0.0
      %1479 = vmatprep.subr.mxu0 0.0
      %1480 = vmatpush1.msra.mxu0 0.0
      %1481 = vmatprep.subr.mxu0 0.0
      %1482 = vmatpush1.msra.mxu0 0.0
      %1483 = vmatprep.subr.mxu0 0.0
      %1484 = vmatpush1.msra.mxu0 0.0
      %1485 = vmatprep.subr.mxu0 0.0
      %1486 = vmatpush1.msra.mxu0 0.0
      %1487 = vmatprep.subr.mxu0 0.0
      %1488 = vmatpush1.msra.mxu0 0.0
      %1489 = vmatprep.subr.mxu0 0.0
      %1490 = vmatpush1.msra.mxu0 0.0
      %1491 = vmatprep.subr.mxu0 0.0
      %1492 = vmatpush1.msra.mxu0 0.0
      %1493 = vmatprep.subr.mxu0 0.0
      %1494 = vmatpush1.msra.mxu0 0.0
      %1495 = vmatprep.subr.mxu0 0.0
      %1496 = vmatpush1.msra.mxu0 0.0
      %1497 = vmatprep.subr.mxu0 0.0
      %1498 = vmatpush1.msra.mxu0 0.0
      %1499 = vmatprep.subr.mxu0 0.0
      %1500 = vmatpush1.msra.mxu0 0.0
      %1501 = vmatprep.subr.mxu0 0.0
      %1502 = vmatpush1.msra.mxu0 0.0
      %1503 = vmatprep.subr.mxu0 0.0
      %1504 = vmatpush1.msra.mxu0 0.0
      %1505 = vmatprep.subr.mxu0 0.0
      %1506 = vmatpush1.msra.mxu0 0.0
      %1507 = vmatprep.subr.mxu0 0.0
      %1508 = vmatpush1.msra.mxu0 0.0
      %1509 = vmatprep.subr.mxu0 0.0
      %1510 = vmatpush1.msra.mxu0 0.0
      %1511 = vmatprep.mubr.f32.mxu0 0.0
      %1512 = vmatmul.mubr.f32.gmra.mrb[0].mxu0 %v1445
      %v1513 = vpop.f32.mrb[0].mxu0
      %v1514 = vadd.f32 0.0, %v1513
      %v1515 = vpop.f32.mrb[0].mxu0
      %1516 = vdwg.mxu0
      %1517 = vrot.lane.b32.xlu0 %v908, 104
      %v1518 = vpop.permute.xlu0 %1517
      %1519 = vrot.lane.b32.xlu0 %v1013, 72
      %v1520 = vpop.permute.xlu0 %1519
      %v1521 = vsel %vm1018, %v1518, 0
      %v1523 = vsel %vm1018, %v1520, 0
      %1525 = vmatprep.subr.mxu0 0.0
      %1526 = vmatpush1.xpose.msra.mxu0 %v1523
      %1527 = vmatprep.subr.mxu0 0.0
      %1528 = vmatpush1.xpose.msra.mxu0 0.0
      %1529 = vmatprep.subr.mxu0 0.0
      %1530 = vmatpush1.xpose.msra.mxu0 0.0
      %1531 = vmatprep.subr.mxu0 0.0
      %1532 = vmatpush1.xpose.msra.mxu0 0.0
      %1533 = vmatprep.subr.mxu0 0.0
      %1534 = vmatpush1.xpose.msra.mxu0 0.0
      %1535 = vmatprep.subr.mxu0 0.0
      %1536 = vmatpush1.xpose.msra.mxu0 0.0
      %1537 = vmatprep.subr.mxu0 0.0
      %1538 = vmatpush1.xpose.msra.mxu0 0.0
      %1539 = vmatprep.subr.mxu0 0.0
      %1540 = vmatpush1.xpose.msra.mxu0 0.0
      %1541 = vmatprep.subr.mxu0 0.0
      %1542 = vmatpush1.xpose.msra.mxu0 0.0
      %1543 = vmatprep.subr.mxu0 0.0
      %1544 = vmatpush1.xpose.msra.mxu0 0.0
      %1545 = vmatprep.subr.mxu0 0.0
      %1546 = vmatpush1.xpose.msra.mxu0 0.0
      %1547 = vmatprep.subr.mxu0 0.0
      %1548 = vmatpush1.xpose.msra.mxu0 0.0
      %1549 = vmatprep.subr.mxu0 0.0
      %1550 = vmatpush1.xpose.msra.mxu0 0.0
      %1551 = vmatprep.subr.mxu0 0.0
      %1552 = vmatpush1.xpose.msra.mxu0 0.0
      %1553 = vmatprep.subr.mxu0 0.0
      %1554 = vmatpush1.xpose.msra.mxu0 0.0
      %1555 = vmatprep.subr.mxu0 0.0
      %1556 = vmatpush1.xpose.msra.mxu0 0.0
      %1557 = vmatprep.subr.mxu0 0.0
      %1558 = vmatpush1.xpose.msra.mxu0 0.0
      %1559 = vmatprep.subr.mxu0 0.0
      %1560 = vmatpush1.xpose.msra.mxu0 0.0
      %1561 = vmatprep.subr.mxu0 0.0
      %1562 = vmatpush1.xpose.msra.mxu0 0.0
      %1563 = vmatprep.subr.mxu0 0.0
      %1564 = vmatpush1.xpose.msra.mxu0 0.0
      %1565 = vmatprep.subr.mxu0 0.0
      %1566 = vmatpush1.xpose.msra.mxu0 0.0
      %1567 = vmatprep.subr.mxu0 0.0
      %1568 = vmatpush1.xpose.msra.mxu0 0.0
      %1569 = vmatprep.subr.mxu0 0.0
      %1570 = vmatpush1.xpose.msra.mxu0 0.0
      %1571 = vmatprep.subr.mxu0 0.0
      %1572 = vmatpush1.xpose.msra.mxu0 0.0
      %1573 = vmatprep.subr.mxu0 0.0
      %1574 = vmatpush1.xpose.msra.mxu0 0.0
      %1575 = vmatprep.subr.mxu0 0.0
      %1576 = vmatpush1.xpose.msra.mxu0 0.0
      %1577 = vmatprep.subr.mxu0 0.0
      %1578 = vmatpush1.xpose.msra.mxu0 0.0
      %1579 = vmatprep.subr.mxu0 0.0
      %1580 = vmatpush1.xpose.msra.mxu0 0.0
      %1581 = vmatprep.subr.mxu0 0.0
      %1582 = vmatpush1.xpose.msra.mxu0 0.0
      %1583 = vmatprep.subr.mxu0 0.0
      %1584 = vmatpush1.xpose.msra.mxu0 0.0
      %1585 = vmatprep.subr.mxu0 0.0
      %1586 = vmatpush1.xpose.msra.mxu0 0.0
      %1587 = vmatprep.subr.mxu0 0.0
      %1588 = vmatpush1.xpose.msra.mxu0 0.0
      %1589 = vmatprep.mubr.f32.mxu0 0.0
      %1590 = vmatmul.mubr.f32.gmra.mrb[0].mxu0 %v1521
      %v1591 = vpop.f32.mrb[0].mxu0
      %v1592 = vadd.f32 0.0, %v1591
      %v1593 = vpop.f32.mrb[0].mxu0
      %1594 = vdwg.mxu0
      %v1595 = vmul.f32 %v1592, 0.35355338
      %v1596 = vadd.f32 %v1595, %v734
      %v1597 = vsel %vm1018, %v1596, -inf
      %1598 = vmax.xlane.f32.xlu0 %v1597
      %v1599 = vpop.xlane.xlu0 %1598
      %v1600 = vsub.f32 %v1596, %v1599
      %v1601 = vmul.f32 %v1600, 1.442695
      %v1602 = vpow.pop %v1601
      %v1603 = vsel %vm1018, %v1602, 0.0
      %1604 = vadd.xlane.f32.xlu0 %v1603
      %v1605 = vpop.xlane.xlu0 %1604
      %v1606 = vrcp.pop %v1605
      %v1607 = vmul.f32 %v1602, %v1606
      %1608 = vrot.lane.b32.xlu0 %v817, 40
      %v1609 = vpop.permute.xlu0 %1608
      %v1612 = vsel %vm1018, %v1607, 0
      %1614 = vmatprep.subr.mxu0 0.0
      %1615 = vmatpush1.msra.mxu0 %v1609
      %1616 = vmatprep.subr.mxu0 0.0
      %1617 = vmatpush1.msra.mxu0 0.0
      %1618 = vmatprep.subr.mxu0 0.0
      %1619 = vmatpush1.msra.mxu0 0.0
      %1620 = vmatprep.subr.mxu0 0.0
      %1621 = vmatpush1.msra.mxu0 0.0
      %1622 = vmatprep.subr.mxu0 0.0
      %1623 = vmatpush1.msra.mxu0 0.0
      %1624 = vmatprep.subr.mxu0 0.0
      %1625 = vmatpush1.msra.mxu0 0.0
      %1626 = vmatprep.subr.mxu0 0.0
      %1627 = vmatpush1.msra.mxu0 0.0
      %1628 = vmatprep.subr.mxu0 0.0
      %1629 = vmatpush1.msra.mxu0 0.0
      %1630 = vmatprep.subr.mxu0 0.0
      %1631 = vmatpush1.msra.mxu0 0.0
      %1632 = vmatprep.subr.mxu0 0.0
      %1633 = vmatpush1.msra.mxu0 0.0
      %1634 = vmatprep.subr.mxu0 0.0
      %1635 = vmatpush1.msra.mxu0 0.0
      %1636 = vmatprep.subr.mxu0 0.0
      %1637 = vmatpush1.msra.mxu0 0.0
      %1638 = vmatprep.subr.mxu0 0.0
      %1639 = vmatpush1.msra.mxu0 0.0
      %1640 = vmatprep.subr.mxu0 0.0
      %1641 = vmatpush1.msra.mxu0 0.0
      %1642 = vmatprep.subr.mxu0 0.0
      %1643 = vmatpush1.msra.mxu0 0.0
      %1644 = vmatprep.subr.mxu0 0.0
      %1645 = vmatpush1.msra.mxu0 0.0
      %1646 = vmatprep.subr.mxu0 0.0
      %1647 = vmatpush1.msra.mxu0 0.0
      %1648 = vmatprep.subr.mxu0 0.0
      %1649 = vmatpush1.msra.mxu0 0.0
      %1650 = vmatprep.subr.mxu0 0.0
      %1651 = vmatpush1.msra.mxu0 0.0
      %1652 = vmatprep.subr.mxu0 0.0
      %1653 = vmatpush1.msra.mxu0 0.0
      %1654 = vmatprep.subr.mxu0 0.0
      %1655 = vmatpush1.msra.mxu0 0.0
      %1656 = vmatprep.subr.mxu0 0.0
      %1657 = vmatpush1.msra.mxu0 0.0
      %1658 = vmatprep.subr.mxu0 0.0
      %1659 = vmatpush1.msra.mxu0 0.0
      %1660 = vmatprep.subr.mxu0 0.0
      %1661 = vmatpush1.msra.mxu0 0.0
      %1662 = vmatprep.subr.mxu0 0.0
      %1663 = vmatpush1.msra.mxu0 0.0
      %1664 = vmatprep.subr.mxu0 0.0
      %1665 = vmatpush1.msra.mxu0 0.0
      %1666 = vmatprep.subr.mxu0 0.0
      %1667 = vmatpush1.msra.mxu0 0.0
      %1668 = vmatprep.subr.mxu0 0.0
      %1669 = vmatpush1.msra.mxu0 0.0
      %1670 = vmatprep.subr.mxu0 0.0
      %1671 = vmatpush1.msra.mxu0 0.0
      %1672 = vmatprep.subr.mxu0 0.0
      %1673 = vmatpush1.msra.mxu0 0.0
      %1674 = vmatprep.subr.mxu0 0.0
      %1675 = vmatpush1.msra.mxu0 0.0
      %1676 = vmatprep.subr.mxu0 0.0
      %1677 = vmatpush1.msra.mxu0 0.0
      %1678 = vmatprep.mubr.f32.mxu0 0.0
      %1679 = vmatmul.mubr.f32.gmra.mrb[0].mxu0 %v1612
      %v1680 = vpop.f32.mrb[0].mxu0
      %v1681 = vadd.f32 0.0, %v1680
      %v1682 = vpop.f32.mrb[0].mxu0
      %1683 = vdwg.mxu0
      %1685 = vrot.lane.b32.xlu0 %v1347, 8
      %v1686 = vpop.permute.xlu0 %1685
      %1689 = vrot.lane.b32.xlu0 %v1514, 16
      %v1690 = vpop.permute.xlu0 %1689
      %1693 = vrot.lane.b32.xlu0 %v1681, 24
      %v1694 = vpop.permute.xlu0 %1693
      %v1696 = vsel %vm1018, %v1180, %v1686
      %vm1697 = vcmask 130048
      %v1698 = vsel %vm1697, %v1696, %v1690
      %vm1699 = vcmask 195584
      %v1700 = vsel %vm1699, %v1698, %v1694
      %1702 = vrot.lane.b32.xlu0 %v1014, 96
      %v1703 = vpop.permute.xlu0 %1702
      %v1705 = vsel %vm1018, %v909, 0
      %v1707 = vsel %vm1018, %v1703, 0
      %1709 = vmatprep.subr.mxu0 0.0
      %1710 = vmatpush1.xpose.msra.mxu0 %v1707
      %1711 = vmatprep.subr.mxu0 0.0
      %1712 = vmatpush1.xpose.msra.mxu0 0.0
      %1713 = vmatprep.subr.mxu0 0.0
      %1714 = vmatpush1.xpose.msra.mxu0 0.0
      %1715 = vmatprep.subr.mxu0 0.0
      %1716 = vmatpush1.xpose.msra.mxu0 0.0
      %1717 = vmatprep.subr.mxu0 0.0
      %1718 = vmatpush1.xpose.msra.mxu0 0.0
      %1719 = vmatprep.subr.mxu0 0.0
      %1720 = vmatpush1.xpose.msra.mxu0 0.0
      %1721 = vmatprep.subr.mxu0 0.0
      %1722 = vmatpush1.xpose.msra.mxu0 0.0
      %1723 = vmatprep.subr.mxu0 0.0
      %1724 = vmatpush1.xpose.msra.mxu0 0.0
      %1725 = vmatprep.subr.mxu0 0.0
      %1726 = vmatpush1.xpose.msra.mxu0 0.0
      %1727 = vmatprep.subr.mxu0 0.0
      %1728 = vmatpush1.xpose.msra.mxu0 0.0
      %1729 = vmatprep.subr.mxu0 0.0
      %1730 = vmatpush1.xpose.msra.mxu0 0.0
      %1731 = vmatprep.subr.mxu0 0.0
      %1732 = vmatpush1.xpose.msra.mxu0 0.0
      %1733 = vmatprep.subr.mxu0 0.0
      %1734 = vmatpush1.xpose.msra.mxu0 0.0
      %1735 = vmatprep.subr.mxu0 0.0
      %1736 = vmatpush1.xpose.msra.mxu0 0.0
      %1737 = vmatprep.subr.mxu0 0.0
      %1738 = vmatpush1.xpose.msra.mxu0 0.0
      %1739 = vmatprep.subr.mxu0 0.0
      %1740 = vmatpush1.xpose.msra.mxu0 0.0
      %1741 = vmatprep.subr.mxu0 0.0
      %1742 = vmatpush1.xpose.msra.mxu0 0.0
      %1743 = vmatprep.subr.mxu0 0.0
      %1744 = vmatpush1.xpose.msra.mxu0 0.0
      %1745 = vmatprep.subr.mxu0 0.0
      %1746 = vmatpush1.xpose.msra.mxu0 0.0
      %1747 = vmatprep.subr.mxu0 0.0
      %1748 = vmatpush1.xpose.msra.mxu0 0.0
      %1749 = vmatprep.subr.mxu0 0.0
      %1750 = vmatpush1.xpose.msra.mxu0 0.0
      %1751 = vmatprep.subr.mxu0 0.0
      %1752 = vmatpush1.xpose.msra.mxu0 0.0
      %1753 = vmatprep.subr.mxu0 0.0
      %1754 = vmatpush1.xpose.msra.mxu0 0.0
      %1755 = vmatprep.subr.mxu0 0.0
      %1756 = vmatpush1.xpose.msra.mxu0 0.0
      %1757 = vmatprep.subr.mxu0 0.0
      %1758 = vmatpush1.xpose.msra.mxu0 0.0
      %1759 = vmatprep.subr.mxu0 0.0
      %1760 = vmatpush1.xpose.msra.mxu0 0.0
      %1761 = vmatprep.subr.mxu0 0.0
      %1762 = vmatpush1.xpose.msra.mxu0 0.0
      %1763 = vmatprep.subr.mxu0 0.0
      %1764 = vmatpush1.xpose.msra.mxu0 0.0
      %1765 = vmatprep.subr.mxu0 0.0
      %1766 = vmatpush1.xpose.msra.mxu0 0.0
      %1767 = vmatprep.subr.mxu0 0.0
      %1768 = vmatpush1.xpose.msra.mxu0 0.0
      %1769 = vmatprep.subr.mxu0 0.0
      %1770 = vmatpush1.xpose.msra.mxu0 0.0
      %1771 = vmatprep.subr.mxu0 0.0
      %1772 = vmatpush1.xpose.msra.mxu0 0.0
      %1773 = vmatprep.mubr.f32.mxu0 0.0
      %1774 = vmatmul.mubr.f32.gmra.mrb[0].mxu0 %v1705
      %v1775 = vpop.f32.mrb[0].mxu0
      %v1776 = vadd.f32 0.0, %v1775
      %v1777 = vpop.f32.mrb[0].mxu0
      %1778 = vdwg.mxu0
      %v1779 = vmul.f32 %v1776, 0.35355338
      %v1780 = vadd.f32 %v1779, %v734
      %v1781 = vsel %vm1018, %v1780, -inf
      %1782 = vmax.xlane.f32.xlu0 %v1781
      %v1783 = vpop.xlane.xlu0 %1782
      %v1784 = vsub.f32 %v1780, %v1783
      %v1785 = vmul.f32 %v1784, 1.442695
      %v1786 = vpow.pop %v1785
      %v1787 = vsel %vm1018, %v1786, 0.0
      %1788 = vadd.xlane.f32.xlu0 %v1787
      %v1789 = vpop.xlane.xlu0 %1788
      %v1790 = vrcp.pop %v1789
      %v1791 = vmul.f32 %v1786, %v1790
      %1792 = vrot.lane.b32.xlu0 %v820, 64
      %v1793 = vpop.permute.xlu0 %1792
      %v1796 = vsel %vm1018, %v1791, 0
      %1798 = vmatprep.subr.mxu0 0.0
      %1799 = vmatpush1.msra.mxu0 %v1793
      %1800 = vmatprep.subr.mxu0 0.0
      %1801 = vmatpush1.msra.mxu0 0.0
      %1802 = vmatprep.subr.mxu0 0.0
      %1803 = vmatpush1.msra.mxu0 0.0
      %1804 = vmatprep.subr.mxu0 0.0
      %1805 = vmatpush1.msra.mxu0 0.0
      %1806 = vmatprep.subr.mxu0 0.0
      %1807 = vmatpush1.msra.mxu0 0.0
      %1808 = vmatprep.subr.mxu0 0.0
      %1809 = vmatpush1.msra.mxu0 0.0
      %1810 = vmatprep.subr.mxu0 0.0
      %1811 = vmatpush1.msra.mxu0 0.0
      %1812 = vmatprep.subr.mxu0 0.0
      %1813 = vmatpush1.msra.mxu0 0.0
      %1814 = vmatprep.subr.mxu0 0.0
      %1815 = vmatpush1.msra.mxu0 0.0
      %1816 = vmatprep.subr.mxu0 0.0
      %1817 = vmatpush1.msra.mxu0 0.0
      %1818 = vmatprep.subr.mxu0 0.0
      %1819 = vmatpush1.msra.mxu0 0.0
      %1820 = vmatprep.subr.mxu0 0.0
      %1821 = vmatpush1.msra.mxu0 0.0
      %1822 = vmatprep.subr.mxu0 0.0
      %1823 = vmatpush1.msra.mxu0 0.0
      %1824 = vmatprep.subr.mxu0 0.0
      %1825 = vmatpush1.msra.mxu0 0.0
      %1826 = vmatprep.subr.mxu0 0.0
      %1827 = vmatpush1.msra.mxu0 0.0
      %1828 = vmatprep.subr.mxu0 0.0
      %1829 = vmatpush1.msra.mxu0 0.0
      %1830 = vmatprep.subr.mxu0 0.0
      %1831 = vmatpush1.msra.mxu0 0.0
      %1832 = vmatprep.subr.mxu0 0.0
      %1833 = vmatpush1.msra.mxu0 0.0
      %1834 = vmatprep.subr.mxu0 0.0
      %1835 = vmatpush1.msra.mxu0 0.0
      %1836 = vmatprep.subr.mxu0 0.0
      %1837 = vmatpush1.msra.mxu0 0.0
      %1838 = vmatprep.subr.mxu0 0.0
      %1839 = vmatpush1.msra.mxu0 0.0
      %1840 = vmatprep.subr.mxu0 0.0
      %1841 = vmatpush1.msra.mxu0 0.0
      %1842 = vmatprep.subr.mxu0 0.0
      %1843 = vmatpush1.msra.mxu0 0.0
      %1844 = vmatprep.subr.mxu0 0.0
      %1845 = vmatpush1.msra.mxu0 0.0
      %1846 = vmatprep.subr.mxu0 0.0
      %1847 = vmatpush1.msra.mxu0 0.0
      %1848 = vmatprep.subr.mxu0 0.0
      %1849 = vmatpush1.msra.mxu0 0.0
      %1850 = vmatprep.subr.mxu0 0.0
      %1851 = vmatpush1.msra.mxu0 0.0
      %1852 = vmatprep.subr.mxu0 0.0
      %1853 = vmatpush1.msra.mxu0 0.0
      %1854 = vmatprep.subr.mxu0 0.0
      %1855 = vmatpush1.msra.mxu0 0.0
      %1856 = vmatprep.subr.mxu0 0.0
      %1857 = vmatpush1.msra.mxu0 0.0
      %1858 = vmatprep.subr.mxu0 0.0
      %1859 = vmatpush1.msra.mxu0 0.0
      %1860 = vmatprep.subr.mxu0 0.0
      %1861 = vmatpush1.msra.mxu0 0.0
      %1862 = vmatprep.mubr.f32.mxu0 0.0
      %1863 = vmatmul.mubr.f32.gmra.mrb[0].mxu0 %v1796
      %v1864 = vpop.f32.mrb[0].mxu0
      %v1865 = vadd.f32 0.0, %v1864
      %v1866 = vpop.f32.mrb[0].mxu0
      %1867 = vdwg.mxu0
      %1868 = vrot.lane.b32.xlu0 %v909, 120
      %v1869 = vpop.permute.xlu0 %1868
      %1870 = vrot.lane.b32.xlu0 %v1014, 88
      %v1871 = vpop.permute.xlu0 %1870
      %v1872 = vsel %vm1018, %v1869, 0
      %v1874 = vsel %vm1018, %v1871, 0
      %1876 = vmatprep.subr.mxu0 0.0
      %1877 = vmatpush1.xpose.msra.mxu0 %v1874
      %1878 = vmatprep.subr.mxu0 0.0
      %1879 = vmatpush1.xpose.msra.mxu0 0.0
      %1880 = vmatprep.subr.mxu0 0.0
      %1881 = vmatpush1.xpose.msra.mxu0 0.0
      %1882 = vmatprep.subr.mxu0 0.0
      %1883 = vmatpush1.xpose.msra.mxu0 0.0
      %1884 = vmatprep.subr.mxu0 0.0
      %1885 = vmatpush1.xpose.msra.mxu0 0.0
      %1886 = vmatprep.subr.mxu0 0.0
      %1887 = vmatpush1.xpose.msra.mxu0 0.0
      %1888 = vmatprep.subr.mxu0 0.0
      %1889 = vmatpush1.xpose.msra.mxu0 0.0
      %1890 = vmatprep.subr.mxu0 0.0
      %1891 = vmatpush1.xpose.msra.mxu0 0.0
      %1892 = vmatprep.subr.mxu0 0.0
      %1893 = vmatpush1.xpose.msra.mxu0 0.0
      %1894 = vmatprep.subr.mxu0 0.0
      %1895 = vmatpush1.xpose.msra.mxu0 0.0
      %1896 = vmatprep.subr.mxu0 0.0
      %1897 = vmatpush1.xpose.msra.mxu0 0.0
      %1898 = vmatprep.subr.mxu0 0.0
      %1899 = vmatpush1.xpose.msra.mxu0 0.0
      %1900 = vmatprep.subr.mxu0 0.0
      %1901 = vmatpush1.xpose.msra.mxu0 0.0
      %1902 = vmatprep.subr.mxu0 0.0
      %1903 = vmatpush1.xpose.msra.mxu0 0.0
      %1904 = vmatprep.subr.mxu0 0.0
      %1905 = vmatpush1.xpose.msra.mxu0 0.0
      %1906 = vmatprep.subr.mxu0 0.0
      %1907 = vmatpush1.xpose.msra.mxu0 0.0
      %1908 = vmatprep.subr.mxu0 0.0
      %1909 = vmatpush1.xpose.msra.mxu0 0.0
      %1910 = vmatprep.subr.mxu0 0.0
      %1911 = vmatpush1.xpose.msra.mxu0 0.0
      %1912 = vmatprep.subr.mxu0 0.0
      %1913 = vmatpush1.xpose.msra.mxu0 0.0
      %1914 = vmatprep.subr.mxu0 0.0
      %1915 = vmatpush1.xpose.msra.mxu0 0.0
      %1916 = vmatprep.subr.mxu0 0.0
      %1917 = vmatpush1.xpose.msra.mxu0 0.0
      %1918 = vmatprep.subr.mxu0 0.0
      %1919 = vmatpush1.xpose.msra.mxu0 0.0
      %1920 = vmatprep.subr.mxu0 0.0
      %1921 = vmatpush1.xpose.msra.mxu0 0.0
      %1922 = vmatprep.subr.mxu0 0.0
      %1923 = vmatpush1.xpose.msra.mxu0 0.0
      %1924 = vmatprep.subr.mxu0 0.0
      %1925 = vmatpush1.xpose.msra.mxu0 0.0
      %1926 = vmatprep.subr.mxu0 0.0
      %1927 = vmatpush1.xpose.msra.mxu0 0.0
      %1928 = vmatprep.subr.mxu0 0.0
      %1929 = vmatpush1.xpose.msra.mxu0 0.0
      %1930 = vmatprep.subr.mxu0 0.0
      %1931 = vmatpush1.xpose.msra.mxu0 0.0
      %1932 = vmatprep.subr.mxu0 0.0
      %1933 = vmatpush1.xpose.msra.mxu0 0.0
      %1934 = vmatprep.subr.mxu0 0.0
      %1935 = vmatpush1.xpose.msra.mxu0 0.0
      %1936 = vmatprep.subr.mxu0 0.0
      %1937 = vmatpush1.xpose.msra.mxu0 0.0
      %1938 = vmatprep.subr.mxu0 0.0
      %1939 = vmatpush1.xpose.msra.mxu0 0.0
      %1940 = vmatprep.mubr.f32.mxu0 0.0
      %1941 = vmatmul.mubr.f32.gmra.mrb[0].mxu0 %v1872
      %v1942 = vpop.f32.mrb[0].mxu0
      %v1943 = vadd.f32 0.0, %v1942
      %v1944 = vpop.f32.mrb[0].mxu0
      %1945 = vdwg.mxu0
      %v1946 = vmul.f32 %v1943, 0.35355338
      %v1947 = vadd.f32 %v1946, %v734
      %v1948 = vsel %vm1018, %v1947, -inf
      %1949 = vmax.xlane.f32.xlu0 %v1948
      %v1950 = vpop.xlane.xlu0 %1949
      %v1951 = vsub.f32 %v1947, %v1950
      %v1952 = vmul.f32 %v1951, 1.442695
      %v1953 = vpow.pop %v1952
      %v1954 = vsel %vm1018, %v1953, 0.0
      %1955 = vadd.xlane.f32.xlu0 %v1954
      %v1956 = vpop.xlane.xlu0 %1955
      %v1957 = vrcp.pop %v1956
      %v1958 = vmul.f32 %v1953, %v1957
      %1959 = vrot.lane.b32.xlu0 %v820, 56
      %v1960 = vpop.permute.xlu0 %1959
      %v1963 = vsel %vm1018, %v1958, 0
      %1965 = vmatprep.subr.mxu0 0.0
      %1966 = vmatpush1.msra.mxu0 %v1960
      %1967 = vmatprep.subr.mxu0 0.0
      %1968 = vmatpush1.msra.mxu0 0.0
      %1969 = vmatprep.subr.mxu0 0.0
      %1970 = vmatpush1.msra.mxu0 0.0
      %1971 = vmatprep.subr.mxu0 0.0
      %1972 = vmatpush1.msra.mxu0 0.0
      %1973 = vmatprep.subr.mxu0 0.0
      %1974 = vmatpush1.msra.mxu0 0.0
      %1975 = vmatprep.subr.mxu0 0.0
      %1976 = vmatpush1.msra.mxu0 0.0
      %1977 = vmatprep.subr.mxu0 0.0
      %1978 = vmatpush1.msra.mxu0 0.0
      %1979 = vmatprep.subr.mxu0 0.0
      %1980 = vmatpush1.msra.mxu0 0.0
      %1981 = vmatprep.subr.mxu0 0.0
      %1982 = vmatpush1.msra.mxu0 0.0
      %1983 = vmatprep.subr.mxu0 0.0
      %1984 = vmatpush1.msra.mxu0 0.0
      %1985 = vmatprep.subr.mxu0 0.0
      %1986 = vmatpush1.msra.mxu0 0.0
      %1987 = vmatprep.subr.mxu0 0.0
      %1988 = vmatpush1.msra.mxu0 0.0
      %1989 = vmatprep.subr.mxu0 0.0
      %1990 = vmatpush1.msra.mxu0 0.0
      %1991 = vmatprep.subr.mxu0 0.0
      %1992 = vmatpush1.msra.mxu0 0.0
      %1993 = vmatprep.subr.mxu0 0.0
      %1994 = vmatpush1.msra.mxu0 0.0
      %1995 = vmatprep.subr.mxu0 0.0
      %1996 = vmatpush1.msra.mxu0 0.0
      %1997 = vmatprep.subr.mxu0 0.0
      %1998 = vmatpush1.msra.mxu0 0.0
      %1999 = vmatprep.subr.mxu0 0.0
      %2000 = vmatpush1.msra.mxu0 0.0
      %2001 = vmatprep.subr.mxu0 0.0
      %2002 = vmatpush1.msra.mxu0 0.0
      %2003 = vmatprep.subr.mxu0 0.0
      %2004 = vmatpush1.msra.mxu0 0.0
      %2005 = vmatprep.subr.mxu0 0.0
      %2006 = vmatpush1.msra.mxu0 0.0
      %2007 = vmatprep.subr.mxu0 0.0
      %2008 = vmatpush1.msra.mxu0 0.0
      %2009 = vmatprep.subr.mxu0 0.0
      %2010 = vmatpush1.msra.mxu0 0.0
      %2011 = vmatprep.subr.mxu0 0.0
      %2012 = vmatpush1.msra.mxu0 0.0
      %2013 = vmatprep.subr.mxu0 0.0
      %2014 = vmatpush1.msra.mxu0 0.0
      %2015 = vmatprep.subr.mxu0 0.0
      %2016 = vmatpush1.msra.mxu0 0.0
      %2017 = vmatprep.subr.mxu0 0.0
      %2018 = vmatpush1.msra.mxu0 0.0
      %2019 = vmatprep.subr.mxu0 0.0
      %2020 = vmatpush1.msra.mxu0 0.0
      %2021 = vmatprep.subr.mxu0 0.0
      %2022 = vmatpush1.msra.mxu0 0.0
      %2023 = vmatprep.subr.mxu0 0.0
      %2024 = vmatpush1.msra.mxu0 0.0
      %2025 = vmatprep.subr.mxu0 0.0
      %2026 = vmatpush1.msra.mxu0 0.0
      %2027 = vmatprep.subr.mxu0 0.0
      %2028 = vmatpush1.msra.mxu0 0.0
      %2029 = vmatprep.mubr.f32.mxu0 0.0
      %2030 = vmatmul.mubr.f32.gmra.mrb[0].mxu0 %v1963
      %v2031 = vpop.f32.mrb[0].mxu0
      %v2032 = vadd.f32 0.0, %v2031
      %v2033 = vpop.f32.mrb[0].mxu0
      %2034 = vdwg.mxu0
      %2035 = vrot.lane.b32.xlu0 %v909, 112
      %v2036 = vpop.permute.xlu0 %2035
      %2037 = vrot.lane.b32.xlu0 %v1014, 80
      %v2038 = vpop.permute.xlu0 %2037
      %v2039 = vsel %vm1018, %v2036, 0
      %v2041 = vsel %vm1018, %v2038, 0
      %2043 = vmatprep.subr.mxu0 0.0
      %2044 = vmatpush1.xpose.msra.mxu0 %v2041
      %2045 = vmatprep.subr.mxu0 0.0
      %2046 = vmatpush1.xpose.msra.mxu0 0.0
      %2047 = vmatprep.subr.mxu0 0.0
      %2048 = vmatpush1.xpose.msra.mxu0 0.0
      %2049 = vmatprep.subr.mxu0 0.0
      %2050 = vmatpush1.xpose.msra.mxu0 0.0
      %2051 = vmatprep.subr.mxu0 0.0
      %2052 = vmatpush1.xpose.msra.mxu0 0.0
      %2053 = vmatprep.subr.mxu0 0.0
      %2054 = vmatpush1.xpose.msra.mxu0 0.0
      %2055 = vmatprep.subr.mxu0 0.0
      %2056 = vmatpush1.xpose.msra.mxu0 0.0
      %2057 = vmatprep.subr.mxu0 0.0
      %2058 = vmatpush1.xpose.msra.mxu0 0.0
      %2059 = vmatprep.subr.mxu0 0.0
      %2060 = vmatpush1.xpose.msra.mxu0 0.0
      %2061 = vmatprep.subr.mxu0 0.0
      %2062 = vmatpush1.xpose.msra.mxu0 0.0
      %2063 = vmatprep.subr.mxu0 0.0
      %2064 = vmatpush1.xpose.msra.mxu0 0.0
      %2065 = vmatprep.subr.mxu0 0.0
      %2066 = vmatpush1.xpose.msra.mxu0 0.0
      %2067 = vmatprep.subr.mxu0 0.0
      %2068 = vmatpush1.xpose.msra.mxu0 0.0
      %2069 = vmatprep.subr.mxu0 0.0
      %2070 = vmatpush1.xpose.msra.mxu0 0.0
      %2071 = vmatprep.subr.mxu0 0.0
      %2072 = vmatpush1.xpose.msra.mxu0 0.0
      %2073 = vmatprep.subr.mxu0 0.0
      %2074 = vmatpush1.xpose.msra.mxu0 0.0
      %2075 = vmatprep.subr.mxu0 0.0
      %2076 = vmatpush1.xpose.msra.mxu0 0.0
      %2077 = vmatprep.subr.mxu0 0.0
      %2078 = vmatpush1.xpose.msra.mxu0 0.0
      %2079 = vmatprep.subr.mxu0 0.0
      %2080 = vmatpush1.xpose.msra.mxu0 0.0
      %2081 = vmatprep.subr.mxu0 0.0
      %2082 = vmatpush1.xpose.msra.mxu0 0.0
      %2083 = vmatprep.subr.mxu0 0.0
      %2084 = vmatpush1.xpose.msra.mxu0 0.0
      %2085 = vmatprep.subr.mxu0 0.0
      %2086 = vmatpush1.xpose.msra.mxu0 0.0
      %2087 = vmatprep.subr.mxu0 0.0
      %2088 = vmatpush1.xpose.msra.mxu0 0.0
      %2089 = vmatprep.subr.mxu0 0.0
      %2090 = vmatpush1.xpose.msra.mxu0 0.0
      %2091 = vmatprep.subr.mxu0 0.0
      %2092 = vmatpush1.xpose.msra.mxu0 0.0
      %2093 = vmatprep.subr.mxu0 0.0
      %2094 = vmatpush1.xpose.msra.mxu0 0.0
      %2095 = vmatprep.subr.mxu0 0.0
      %2096 = vmatpush1.xpose.msra.mxu0 0.0
      %2097 = vmatprep.subr.mxu0 0.0
      %2098 = vmatpush1.xpose.msra.mxu0 0.0
      %2099 = vmatprep.subr.mxu0 0.0
      %2100 = vmatpush1.xpose.msra.mxu0 0.0
      %2101 = vmatprep.subr.mxu0 0.0
      %2102 = vmatpush1.xpose.msra.mxu0 0.0
      %2103 = vmatprep.subr.mxu0 0.0
      %2104 = vmatpush1.xpose.msra.mxu0 0.0
      %2105 = vmatprep.subr.mxu0 0.0
      %2106 = vmatpush1.xpose.msra.mxu0 0.0
      %2107 = vmatprep.mubr.f32.mxu0 0.0
      %2108 = vmatmul.mubr.f32.gmra.mrb[0].mxu0 %v2039
      %v2109 = vpop.f32.mrb[0].mxu0
      %v2110 = vadd.f32 0.0, %v2109
      %v2111 = vpop.f32.mrb[0].mxu0
      %2112 = vdwg.mxu0
      %v2113 = vmul.f32 %v2110, 0.35355338
      %v2114 = vadd.f32 %v2113, %v734
      %v2115 = vsel %vm1018, %v2114, -inf
      %2116 = vmax.xlane.f32.xlu0 %v2115
      %v2117 = vpop.xlane.xlu0 %2116
      %v2118 = vsub.f32 %v2114, %v2117
      %v2119 = vmul.f32 %v2118, 1.442695
      %v2120 = vpow.pop %v2119
      %v2121 = vsel %vm1018, %v2120, 0.0
      %2122 = vadd.xlane.f32.xlu0 %v2121
      %v2123 = vpop.xlane.xlu0 %2122
      %v2124 = vrcp.pop %v2123
      %v2125 = vmul.f32 %v2120, %v2124
      %2126 = vrot.lane.b32.xlu0 %v820, 48
      %v2127 = vpop.permute.xlu0 %2126
      %v2130 = vsel %vm1018, %v2125, 0
      %2132 = vmatprep.subr.mxu0 0.0
      %2133 = vmatpush1.msra.mxu0 %v2127
      %2134 = vmatprep.subr.mxu0 0.0
      %2135 = vmatpush1.msra.mxu0 0.0
      %2136 = vmatprep.subr.mxu0 0.0
      %2137 = vmatpush1.msra.mxu0 0.0
      %2138 = vmatprep.subr.mxu0 0.0
      %2139 = vmatpush1.msra.mxu0 0.0
      %2140 = vmatprep.subr.mxu0 0.0
      %2141 = vmatpush1.msra.mxu0 0.0
      %2142 = vmatprep.subr.mxu0 0.0
      %2143 = vmatpush1.msra.mxu0 0.0
      %2144 = vmatprep.subr.mxu0 0.0
      %2145 = vmatpush1.msra.mxu0 0.0
      %2146 = vmatprep.subr.mxu0 0.0
      %2147 = vmatpush1.msra.mxu0 0.0
      %2148 = vmatprep.subr.mxu0 0.0
      %2149 = vmatpush1.msra.mxu0 0.0
      %2150 = vmatprep.subr.mxu0 0.0
      %2151 = vmatpush1.msra.mxu0 0.0
      %2152 = vmatprep.subr.mxu0 0.0
      %2153 = vmatpush1.msra.mxu0 0.0
      %2154 = vmatprep.subr.mxu0 0.0
      %2155 = vmatpush1.msra.mxu0 0.0
      %2156 = vmatprep.subr.mxu0 0.0
      %2157 = vmatpush1.msra.mxu0 0.0
      %2158 = vmatprep.subr.mxu0 0.0
      %2159 = vmatpush1.msra.mxu0 0.0
      %2160 = vmatprep.subr.mxu0 0.0
      %2161 = vmatpush1.msra.mxu0 0.0
      %2162 = vmatprep.subr.mxu0 0.0
      %2163 = vmatpush1.msra.mxu0 0.0
      %2164 = vmatprep.subr.mxu0 0.0
      %2165 = vmatpush1.msra.mxu0 0.0
      %2166 = vmatprep.subr.mxu0 0.0
      %2167 = vmatpush1.msra.mxu0 0.0
      %2168 = vmatprep.subr.mxu0 0.0
      %2169 = vmatpush1.msra.mxu0 0.0
      %2170 = vmatprep.subr.mxu0 0.0
      %2171 = vmatpush1.msra.mxu0 0.0
      %2172 = vmatprep.subr.mxu0 0.0
      %2173 = vmatpush1.msra.mxu0 0.0
      %2174 = vmatprep.subr.mxu0 0.0
      %2175 = vmatpush1.msra.mxu0 0.0
      %2176 = vmatprep.subr.mxu0 0.0
      %2177 = vmatpush1.msra.mxu0 0.0
      %2178 = vmatprep.subr.mxu0 0.0
      %2179 = vmatpush1.msra.mxu0 0.0
      %2180 = vmatprep.subr.mxu0 0.0
      %2181 = vmatpush1.msra.mxu0 0.0
      %2182 = vmatprep.subr.mxu0 0.0
      %2183 = vmatpush1.msra.mxu0 0.0
      %2184 = vmatprep.subr.mxu0 0.0
      %2185 = vmatpush1.msra.mxu0 0.0
      %2186 = vmatprep.subr.mxu0 0.0
      %2187 = vmatpush1.msra.mxu0 0.0
      %2188 = vmatprep.subr.mxu0 0.0
      %2189 = vmatpush1.msra.mxu0 0.0
      %2190 = vmatprep.subr.mxu0 0.0
      %2191 = vmatpush1.msra.mxu0 0.0
      %2192 = vmatprep.subr.mxu0 0.0
      %2193 = vmatpush1.msra.mxu0 0.0
      %2194 = vmatprep.subr.mxu0 0.0
      %2195 = vmatpush1.msra.mxu0 0.0
      %2196 = vmatprep.mubr.f32.mxu0 0.0
      %2197 = vmatmul.mubr.f32.gmra.mrb[0].mxu0 %v2130
      %v2198 = vpop.f32.mrb[0].mxu0
      %v2199 = vadd.f32 0.0, %v2198
      %v2200 = vpop.f32.mrb[0].mxu0
      %2201 = vdwg.mxu0
      %2202 = vrot.lane.b32.xlu0 %v909, 104
      %v2203 = vpop.permute.xlu0 %2202
      %2204 = vrot.lane.b32.xlu0 %v1014, 72
      %v2205 = vpop.permute.xlu0 %2204
      %v2206 = vsel %vm1018, %v2203, 0
      %v2208 = vsel %vm1018, %v2205, 0
      %2210 = vmatprep.subr.mxu0 0.0
      %2211 = vmatpush1.xpose.msra.mxu0 %v2208
      %2212 = vmatprep.subr.mxu0 0.0
      %2213 = vmatpush1.xpose.msra.mxu0 0.0
      %2214 = vmatprep.subr.mxu0 0.0
      %2215 = vmatpush1.xpose.msra.mxu0 0.0
      %2216 = vmatprep.subr.mxu0 0.0
      %2217 = vmatpush1.xpose.msra.mxu0 0.0
      %2218 = vmatprep.subr.mxu0 0.0
      %2219 = vmatpush1.xpose.msra.mxu0 0.0
      %2220 = vmatprep.subr.mxu0 0.0
      %2221 = vmatpush1.xpose.msra.mxu0 0.0
      %2222 = vmatprep.subr.mxu0 0.0
      %2223 = vmatpush1.xpose.msra.mxu0 0.0
      %2224 = vmatprep.subr.mxu0 0.0
      %2225 = vmatpush1.xpose.msra.mxu0 0.0
      %2226 = vmatprep.subr.mxu0 0.0
      %2227 = vmatpush1.xpose.msra.mxu0 0.0
      %2228 = vmatprep.subr.mxu0 0.0
      %2229 = vmatpush1.xpose.msra.mxu0 0.0
      %2230 = vmatprep.subr.mxu0 0.0
      %2231 = vmatpush1.xpose.msra.mxu0 0.0
      %2232 = vmatprep.subr.mxu0 0.0
      %2233 = vmatpush1.xpose.msra.mxu0 0.0
      %2234 = vmatprep.subr.mxu0 0.0
      %2235 = vmatpush1.xpose.msra.mxu0 0.0
      %2236 = vmatprep.subr.mxu0 0.0
      %2237 = vmatpush1.xpose.msra.mxu0 0.0
      %2238 = vmatprep.subr.mxu0 0.0
      %2239 = vmatpush1.xpose.msra.mxu0 0.0
      %2240 = vmatprep.subr.mxu0 0.0
      %2241 = vmatpush1.xpose.msra.mxu0 0.0
      %2242 = vmatprep.subr.mxu0 0.0
      %2243 = vmatpush1.xpose.msra.mxu0 0.0
      %2244 = vmatprep.subr.mxu0 0.0
      %2245 = vmatpush1.xpose.msra.mxu0 0.0
      %2246 = vmatprep.subr.mxu0 0.0
      %2247 = vmatpush1.xpose.msra.mxu0 0.0
      %2248 = vmatprep.subr.mxu0 0.0
      %2249 = vmatpush1.xpose.msra.mxu0 0.0
      %2250 = vmatprep.subr.mxu0 0.0
      %2251 = vmatpush1.xpose.msra.mxu0 0.0
      %2252 = vmatprep.subr.mxu0 0.0
      %2253 = vmatpush1.xpose.msra.mxu0 0.0
      %2254 = vmatprep.subr.mxu0 0.0
      %2255 = vmatpush1.xpose.msra.mxu0 0.0
      %2256 = vmatprep.subr.mxu0 0.0
      %2257 = vmatpush1.xpose.msra.mxu0 0.0
      %2258 = vmatprep.subr.mxu0 0.0
      %2259 = vmatpush1.xpose.msra.mxu0 0.0
      %2260 = vmatprep.subr.mxu0 0.0
      %2261 = vmatpush1.xpose.msra.mxu0 0.0
      %2262 = vmatprep.subr.mxu0 0.0
      %2263 = vmatpush1.xpose.msra.mxu0 0.0
      %2264 = vmatprep.subr.mxu0 0.0
      %2265 = vmatpush1.xpose.msra.mxu0 0.0
      %2266 = vmatprep.subr.mxu0 0.0
      %2267 = vmatpush1.xpose.msra.mxu0 0.0
      %2268 = vmatprep.subr.mxu0 0.0
      %2269 = vmatpush1.xpose.msra.mxu0 0.0
      %2270 = vmatprep.subr.mxu0 0.0
      %2271 = vmatpush1.xpose.msra.mxu0 0.0
      %2272 = vmatprep.subr.mxu0 0.0
      %2273 = vmatpush1.xpose.msra.mxu0 0.0
      %2274 = vmatprep.mubr.f32.mxu0 0.0
      %2275 = vmatmul.mubr.f32.gmra.mrb[0].mxu0 %v2206
      %v2276 = vpop.f32.mrb[0].mxu0
      %v2277 = vadd.f32 0.0, %v2276
      %v2278 = vpop.f32.mrb[0].mxu0
      %2279 = vdwg.mxu0
      %v2280 = vmul.f32 %v2277, 0.35355338
      %v2281 = vadd.f32 %v2280, %v734
      %v2282 = vsel %vm1018, %v2281, -inf
      %2283 = vmax.xlane.f32.xlu0 %v2282
      %v2284 = vpop.xlane.xlu0 %2283
      %v2285 = vsub.f32 %v2281, %v2284
      %v2286 = vmul.f32 %v2285, 1.442695
      %v2287 = vpow.pop %v2286
      %v2288 = vsel %vm1018, %v2287, 0.0
      %2289 = vadd.xlane.f32.xlu0 %v2288
      %v2290 = vpop.xlane.xlu0 %2289
      %v2291 = vrcp.pop %v2290
      %v2292 = vmul.f32 %v2287, %v2291
      %2293 = vrot.lane.b32.xlu0 %v820, 40
      %v2294 = vpop.permute.xlu0 %2293
      %v2297 = vsel %vm1018, %v2292, 0
      %2299 = vmatprep.subr.mxu0 0.0
      %2300 = vmatpush1.msra.mxu0 %v2294
      %2301 = vmatprep.subr.mxu0 0.0
      %2302 = vmatpush1.msra.mxu0 0.0
      %2303 = vmatprep.subr.mxu0 0.0
      %2304 = vmatpush1.msra.mxu0 0.0
      %2305 = vmatprep.subr.mxu0 0.0
      %2306 = vmatpush1.msra.mxu0 0.0
      %2307 = vmatprep.subr.mxu0 0.0
      %2308 = vmatpush1.msra.mxu0 0.0
      %2309 = vmatprep.subr.mxu0 0.0
      %2310 = vmatpush1.msra.mxu0 0.0
      %2311 = vmatprep.subr.mxu0 0.0
      %2312 = vmatpush1.msra.mxu0 0.0
      %2313 = vmatprep.subr.mxu0 0.0
      %2314 = vmatpush1.msra.mxu0 0.0
      %2315 = vmatprep.subr.mxu0 0.0
      %2316 = vmatpush1.msra.mxu0 0.0
      %2317 = vmatprep.subr.mxu0 0.0
      %2318 = vmatpush1.msra.mxu0 0.0
      %2319 = vmatprep.subr.mxu0 0.0
      %2320 = vmatpush1.msra.mxu0 0.0
      %2321 = vmatprep.subr.mxu0 0.0
      %2322 = vmatpush1.msra.mxu0 0.0
      %2323 = vmatprep.subr.mxu0 0.0
      %2324 = vmatpush1.msra.mxu0 0.0
      %2325 = vmatprep.subr.mxu0 0.0
      %2326 = vmatpush1.msra.mxu0 0.0
      %2327 = vmatprep.subr.mxu0 0.0
      %2328 = vmatpush1.msra.mxu0 0.0
      %2329 = vmatprep.subr.mxu0 0.0
      %2330 = vmatpush1.msra.mxu0 0.0
      %2331 = vmatprep.subr.mxu0 0.0
      %2332 = vmatpush1.msra.mxu0 0.0
      %2333 = vmatprep.subr.mxu0 0.0
      %2334 = vmatpush1.msra.mxu0 0.0
      %2335 = vmatprep.subr.mxu0 0.0
      %2336 = vmatpush1.msra.mxu0 0.0
      %2337 = vmatprep.subr.mxu0 0.0
      %2338 = vmatpush1.msra.mxu0 0.0
      %2339 = vmatprep.subr.mxu0 0.0
      %2340 = vmatpush1.msra.mxu0 0.0
      %2341 = vmatprep.subr.mxu0 0.0
      %2342 = vmatpush1.msra.mxu0 0.0
      %2343 = vmatprep.subr.mxu0 0.0
      %2344 = vmatpush1.msra.mxu0 0.0
      %2345 = vmatprep.subr.mxu0 0.0
      %2346 = vmatpush1.msra.mxu0 0.0
      %2347 = vmatprep.subr.mxu0 0.0
      %2348 = vmatpush1.msra.mxu0 0.0
      %2349 = vmatprep.subr.mxu0 0.0
      %2350 = vmatpush1.msra.mxu0 0.0
      %2351 = vmatprep.subr.mxu0 0.0
      %2352 = vmatpush1.msra.mxu0 0.0
      %2353 = vmatprep.subr.mxu0 0.0
      %2354 = vmatpush1.msra.mxu0 0.0
      %2355 = vmatprep.subr.mxu0 0.0
      %2356 = vmatpush1.msra.mxu0 0.0
      %2357 = vmatprep.subr.mxu0 0.0
      %2358 = vmatpush1.msra.mxu0 0.0
      %2359 = vmatprep.subr.mxu0 0.0
      %2360 = vmatpush1.msra.mxu0 0.0
      %2361 = vmatprep.subr.mxu0 0.0
      %2362 = vmatpush1.msra.mxu0 0.0
      %2363 = vmatprep.mubr.f32.mxu0 0.0
      %2364 = vmatmul.mubr.f32.gmra.mrb[0].mxu0 %v2297
      %v2365 = vpop.f32.mrb[0].mxu0
      %v2366 = vadd.f32 0.0, %v2365
      %v2367 = vpop.f32.mrb[0].mxu0
      %2368 = vdwg.mxu0
      %2370 = vrot.lane.b32.xlu0 %v2032, 8
      %v2371 = vpop.permute.xlu0 %2370
      %2374 = vrot.lane.b32.xlu0 %v2199, 16
      %v2375 = vpop.permute.xlu0 %2374
      %2378 = vrot.lane.b32.xlu0 %v2366, 24
      %v2379 = vpop.permute.xlu0 %2378
      %v2381 = vsel %vm1018, %v1865, %v2371
      %v2382 = vsel %vm1697, %v2381, %v2375
      %v2383 = vsel %vm1699, %v2382, %v2379
      %v2384 = vpack.c.bf16 %v2383, %v1700
      %v2385 = vld [vmem:[%s616] sm:$0xf]
      %v2386 = vld [vmem:[%s616 + $0x4] sm:$0xf]
      %v2387 = vld [vmem:[%s616 + $0x8] sm:$0xf]
      %v2388 = vld [vmem:[%s616 + $0xc] sm:$0xf]
      %v2393 = vunpack.c.l.b16 %v2385
      %v2394 = vunpack.c.l.b16 %v2386
      %v2395 = vunpack.c.l.b16 %v2387
      %v2396 = vunpack.c.l.b16 %v2388
      %v2397 = vpack.c.b16 %v2394, %v2393
      %v2398 = vpack.c.b16 %v2396, %v2395
      %v2402 = vsel %vm738, %v2384, 0
      %2404 = vmatprep.subr.bf16.mxu0 0
      %2405 = vmatpush1.bf16.msra.mxu0 %v2397
      %2406 = vmatprep.subr.bf16.mxu0 0
      %2407 = vmatpush1.bf16.msra.mxu0 %v2398
      %2408 = vmatprep.subr.bf16.mxu0 0
      %2409 = vmatpush1.bf16.msra.mxu0 0
      %2410 = vmatprep.subr.bf16.mxu0 0
      %2411 = vmatpush1.bf16.msra.mxu0 0
      %2412 = vmatprep.subr.bf16.mxu0 0
      %2413 = vmatpush1.bf16.msra.mxu0 0
      %2414 = vmatprep.subr.bf16.mxu0 0
      %2415 = vmatpush1.bf16.msra.mxu0 0
      %2416 = vmatprep.subr.bf16.mxu0 0
      %2417 = vmatpush1.bf16.msra.mxu0 0
      %2418 = vmatprep.subr.bf16.mxu0 0
      %2419 = vmatpush1.bf16.msra.mxu0 0
      %2420 = vmatprep.subr.bf16.mxu0 0
      %2421 = vmatpush1.bf16.msra.mxu0 0
      %2422 = vmatprep.subr.bf16.mxu0 0
      %2423 = vmatpush1.bf16.msra.mxu0 0
      %2424 = vmatprep.subr.bf16.mxu0 0
      %2425 = vmatpush1.bf16.msra.mxu0 0
      %2426 = vmatprep.subr.bf16.mxu0 0
      %2427 = vmatpush1.bf16.msra.mxu0 0
      %2428 = vmatprep.subr.bf16.mxu0 0
      %2429 = vmatpush1.bf16.msra.mxu0 0
      %2430 = vmatprep.subr.bf16.mxu0 0
      %2431 = vmatpush1.bf16.msra.mxu0 0
      %2432 = vmatprep.subr.bf16.mxu0 0
      %2433 = vmatpush1.bf16.msra.mxu0 0
      %2434 = vmatprep.subr.bf16.mxu0 0
      %2435 = vmatpush1.bf16.msra.mxu0 0
      %2436 = vmatprep.mubr.bf16.mxu0 0
      %2437 = vmatmul.mubr.bf16.gmra.mrb[0].mxu0 %v2402
      %v2438 = vpop.f32.mrb[0].mxu0
      %v2439 = vadd.f32 0.0, %v2438
      %v2440 = vpop.f32.mrb[0].mxu0
      %v2441 = vpop.f32.mrb[0].mxu0
      %v2442 = vadd.f32 0.0, %v2441
      %v2443 = vpop.f32.mrb[0].mxu0
      %2444 = vdwg.mxu0
      %v2445 = vadd.f32 %v715, %v2439
      %v2446 = vadd.f32 %v718, %v2442
      %v2447 = vld [vmem:[%s620] sm:$0x1]
      %v2448 = vmul.f32 %v2445, %v2445
      %v2449 = vmul.f32 %v2446, %v2446
      %v2450 = vsel %vm738, %v2448, 0.0
      %2451 = vadd.xlane.f32.xlu0 %v2450
      %v2452 = vpop.xlane.xlu0 %2451
      %v2453 = vsel %vm738, %v2449, 0.0
      %2454 = vadd.xlane.f32.xlu0 %v2453
      %v2455 = vpop.xlane.xlu0 %2454
      %v2456 = vmul.f32 %v2452, %v745
      %v2457 = vmul.f32 %v2455, %v745
      %v2458 = vadd.f32 %v2456, 1e-05
      %v2459 = vadd.f32 %v2457, 1e-05
      %v2460 = vrsqrt.pop %v2458
      %v2461 = vrsqrt.pop %v2459
      %v2462 = vmul.f32 %v2445, %v2460
      %v2463 = vmul.f32 %v2446, %v2461
      %v2465 = vlaneseq
      %v2466 = vshrl.u32 %v2465, 7
      %v2467 = vsub.s32 0, %v2466
      %v2468 = vrot.slane %v2447, %v2467
      %v2470 = vmul.f32 %v2462, %v2468
      %v2471 = vmul.f32 %v2463, %v2468
      %v2472 = vpack.c.bf16 %v2471, %v2470
      %v2473 = vld [vmem:[%s625] sm:$0xff]
      %v2474 = vld [vmem:[%s625 + $0x8] sm:$0xff]
      %v2475 = vld [vmem:[%s625 + $0x10] sm:$0xff]
      %v2476 = vld [vmem:[%s625 + $0x18] sm:$0xff]
      %v2481 = vunpack.c.l.b16 %v2473
      %v2482 = vunpack.c.h.b16 %v2473
      %v2483 = vunpack.c.l.b16 %v2474
      %v2484 = vunpack.c.h.b16 %v2474
      %v2485 = vunpack.c.l.b16 %v2475
      %v2486 = vunpack.c.h.b16 %v2475
      %v2487 = vunpack.c.l.b16 %v2476
      %v2488 = vunpack.c.h.b16 %v2476
      %v2489 = vpack.c.b16 %v2483, %v2481
      %v2490 = vpack.c.b16 %v2484, %v2482
      %v2491 = vpack.c.b16 %v2487, %v2485
      %v2492 = vpack.c.b16 %v2488, %v2486
      %v2498 = vsel %vm738, %v2472, 0
      %2500 = vmatprep.subr.bf16.mxu0 %v2490
      %2501 = vmatpush1.bf16.msra.mxu0 %v2489
      %2502 = vmatprep.subr.bf16.mxu0 %v2492
      %2503 = vmatpush1.bf16.msra.mxu0 %v2491
      %2504 = vmatprep.subr.bf16.mxu0 0
      %2505 = vmatpush1.bf16.msra.mxu0 0
      %2506 = vmatprep.subr.bf16.mxu0 0
      %2507 = vmatpush1.bf16.msra.mxu0 0
      %2508 = vmatprep.subr.bf16.mxu0 0
      %2509 = vmatpush1.bf16.msra.mxu0 0
      %2510 = vmatprep.subr.bf16.mxu0 0
      %2511 = vmatpush1.bf16.msra.mxu0 0
      %2512 = vmatprep.subr.bf16.mxu0 0
      %2513 = vmatpush1.bf16.msra.mxu0 0
      %2514 = vmatprep.subr.bf16.mxu0 0
      %2515 = vmatpush1.bf16.msra.mxu0 0
      %2516 = vmatprep.subr.bf16.mxu0 0
      %2517 = vmatpush1.bf16.msra.mxu0 0
      %2518 = vmatprep.subr.bf16.mxu0 0
      %2519 = vmatpush1.bf16.msra.mxu0 0
      %2520 = vmatprep.subr.bf16.mxu0 0
      %2521 = vmatpush1.bf16.msra.mxu0 0
      %2522 = vmatprep.subr.bf16.mxu0 0
      %2523 = vmatpush1.bf16.msra.mxu0 0
      %2524 = vmatprep.subr.bf16.mxu0 0
      %2525 = vmatpush1.bf16.msra.mxu0 0
      %2526 = vmatprep.subr.bf16.mxu0 0
      %2527 = vmatpush1.bf16.msra.mxu0 0
      %2528 = vmatprep.subr.bf16.mxu0 0
      %2529 = vmatpush1.bf16.msra.mxu0 0
      %2530 = vmatprep.subr.bf16.mxu0 0
      %2531 = vmatpush1.bf16.msra.mxu0 0
      %2532 = vmatprep.mubr.bf16.mxu0 0
      %2533 = vmatmul.mubr.bf16.gmra.mrb[0].mxu0 %v2498
      %v2534 = vpop.f32.mrb[0].mxu0
      %v2535 = vadd.f32 0.0, %v2534
      %v2536 = vpop.f32.mrb[0].mxu0
      %v2537 = vadd.f32 0.0, %v2536
      %v2538 = vpop.f32.mrb[0].mxu0
      %v2539 = vadd.f32 0.0, %v2538
      %v2540 = vpop.f32.mrb[0].mxu0
      %v2541 = vadd.f32 0.0, %v2540
      %2542 = vdwg.mxu0
      %v2543 = vxor.u32 %v2535, 2147483648
      %v2544 = vxor.u32 %v2539, 2147483648
      %v2545 = vmul.f32 %v2543, 1.442695
      %v2546 = vpow.pop %v2545
      %v2547 = vmul.f32 %v2544, 1.442695
      %v2548 = vpow.pop %v2547
      %v2549 = vadd.f32 %v2546, 1.0
      %v2550 = vadd.f32 %v2548, 1.0
      %v2551 = vrcp.pop %v2549
      %v2552 = vmul.f32 1.0, %v2551
      %v2553 = vrcp.pop %v2550
      %v2554 = vmul.f32 1.0, %v2553
      %v2555 = vmul.f32 %v2535, %v2552
      %v2556 = vmul.f32 %v2539, %v2554
      %2561 = vrot.lane.b32.xlu0 %v2535, 32
      %v2562 = vpop.permute.xlu0 %2561
      %2563 = vrot.lane.b32.xlu0 %v2537, 32
      %v2564 = vpop.permute.xlu0 %2563
      %2565 = vrot.lane.b32.xlu0 %v2539, 32
      %v2566 = vpop.permute.xlu0 %2565
      %2567 = vrot.lane.b32.xlu0 %v2541, 32
      %v2568 = vpop.permute.xlu0 %2567
      %v2569 = vsel %vm738, %v2562, %v2564
      %v2570 = vsel %vm738, %v2566, %v2568
      %v2573 = vmul.f32 %v2555, %v2569
      %v2574 = vmul.f32 %v2556, %v2570
      %v2575 = vpack.c.bf16 %v2574, %v2573
      %v2576 = vld [vmem:[%s630] sm:$0xf]
      %v2577 = vld [vmem:[%s630 + $0x4] sm:$0xf]
      %v2578 = vld [vmem:[%s630 + $0x8] sm:$0xf]
      %v2579 = vld [vmem:[%s630 + $0xc] sm:$0xf]
      %v2580 = vld [vmem:[%s630 + $0x10] sm:$0xf]
      %v2581 = vld [vmem:[%s630 + $0x14] sm:$0xf]
      %v2582 = vld [vmem:[%s630 + $0x18] sm:$0xf]
      %v2583 = vld [vmem:[%s630 + $0x1c] sm:$0xf]
      %v2584 = vld [vmem:[%s630 + $0x20] sm:$0xf]
      %v2585 = vld [vmem:[%s630 + $0x24] sm:$0xf]
      %v2586 = vld [vmem:[%s630 + $0x28] sm:$0xf]
      %v2587 = vld [vmem:[%s630 + $0x2c] sm:$0xf]
      %v2600 = vunpack.c.l.b16 %v2576
      %v2601 = vunpack.c.l.b16 %v2577
      %v2602 = vunpack.c.l.b16 %v2578
      %v2603 = vunpack.c.l.b16 %v2579
      %v2604 = vunpack.c.l.b16 %v2580
      %v2605 = vunpack.c.l.b16 %v2581
      %v2606 = vunpack.c.l.b16 %v2582
      %v2607 = vunpack.c.l.b16 %v2583
      %v2608 = vunpack.c.l.b16 %v2584
      %v2609 = vunpack.c.l.b16 %v2585
      %v2610 = vunpack.c.l.b16 %v2586
      %v2611 = vunpack.c.l.b16 %v2587
      %v2612 = vpack.c.b16 %v2601, %v2600
      %v2613 = vpack.c.b16 %v2603, %v2602
      %v2614 = vpack.c.b16 %v2605, %v2604
      %v2615 = vpack.c.b16 %v2607, %v2606
      %v2616 = vpack.c.b16 %v2609, %v2608
      %v2617 = vpack.c.b16 %v2611, %v2610
      %vm2624 = vcmask 785408
      %v2626 = vsel %vm2624, %v2575, 0
      %2628 = vmatprep.subr.bf16.mxu0 0
      %2629 = vmatpush1.bf16.msra.mxu0 %v2612
      %2630 = vmatprep.subr.bf16.mxu0 0
      %2631 = vmatpush1.bf16.msra.mxu0 %v2613
      %2632 = vmatprep.subr.bf16.mxu0 0
      %2633 = vmatpush1.bf16.msra.mxu0 %v2614
      %2634 = vmatprep.subr.bf16.mxu0 0
      %2635 = vmatpush1.bf16.msra.mxu0 %v2615
      %2636 = vmatprep.subr.bf16.mxu0 0
      %2637 = vmatpush1.bf16.msra.mxu0 %v2616
      %2638 = vmatprep.subr.bf16.mxu0 0
      %2639 = vmatpush1.bf16.msra.mxu0 %v2617
      %2640 = vmatprep.subr.bf16.mxu0 0
      %2641 = vmatpush1.bf16.msra.mxu0 0
      %2642 = vmatprep.subr.bf16.mxu0 0
      %2643 = vmatpush1.bf16.msra.mxu0 0
      %2644 = vmatprep.subr.bf16.mxu0 0
      %2645 = vmatpush1.bf16.msra.mxu0 0
      %2646 = vmatprep.subr.bf16.mxu0 0
      %2647 = vmatpush1.bf16.msra.mxu0 0
      %2648 = vmatprep.subr.bf16.mxu0 0
      %2649 = vmatpush1.bf16.msra.mxu0 0
      %2650 = vmatprep.subr.bf16.mxu0 0
      %2651 = vmatpush1.bf16.msra.mxu0 0
      %2652 = vmatprep.subr.bf16.mxu0 0
      %2653 = vmatpush1.bf16.msra.mxu0 0
      %2654 = vmatprep.subr.bf16.mxu0 0
      %2655 = vmatpush1.bf16.msra.mxu0 0
      %2656 = vmatprep.subr.bf16.mxu0 0
      %2657 = vmatpush1.bf16.msra.mxu0 0
      %2658 = vmatprep.subr.bf16.mxu0 0
      %2659 = vmatpush1.bf16.msra.mxu0 0
      %2660 = vmatprep.mubr.bf16.mxu0 0
      %2661 = vmatmul.mubr.bf16.gmra.mrb[0].mxu0 %v2626
      %v2662 = vpop.f32.mrb[0].mxu0
      %v2663 = vadd.f32 0.0, %v2662
      %v2664 = vpop.f32.mrb[0].mxu0
      %v2665 = vpop.f32.mrb[0].mxu0
      %v2666 = vadd.f32 0.0, %v2665
      %v2667 = vpop.f32.mrb[0].mxu0
      %2668 = vdwg.mxu0
      %v2669 = vadd.f32 %v2445, %v2663
      %v2670 = vadd.f32 %v2446, %v2666
      %s2671 = scalar_lea.vmem %s606, 1
      %v2672 = vld [vmem:[%s2671] sm:$0x1]
      %v2673 = vmul.f32 %v2669, %v2669
      %v2674 = vmul.f32 %v2670, %v2670
      %v2675 = vsel %vm738, %v2673, 0.0
      %2676 = vadd.xlane.f32.xlu0 %v2675
      %v2677 = vpop.xlane.xlu0 %2676
      %v2678 = vsel %vm738, %v2674, 0.0
      %2679 = vadd.xlane.f32.xlu0 %v2678
      %v2680 = vpop.xlane.xlu0 %2679
      %v2681 = vmul.f32 %v2677, %v745
      %v2682 = vmul.f32 %v2680, %v745
      %v2683 = vadd.f32 %v2681, 1e-05
      %v2684 = vadd.f32 %v2682, 1e-05
      %v2685 = vrsqrt.pop %v2683
      %v2686 = vrsqrt.pop %v2684
      %v2687 = vmul.f32 %v2669, %v2685
      %v2688 = vmul.f32 %v2670, %v2686
      %v2690 = vlaneseq
      %v2691 = vshrl.u32 %v2690, 7
      %v2692 = vsub.s32 0, %v2691
      %v2693 = vrot.slane %v2672, %v2692
      %v2695 = vmul.f32 %v2687, %v2693
      %v2696 = vmul.f32 %v2688, %v2693
      %v2697 = vpack.c.bf16 %v2696, %v2695
      %s2698 = scalar_lea.vmem %s611, 16
      %v2699 = vld [vmem:[%s2698] sm:$0xf]
      %v2700 = vld [vmem:[%s2698 + $0x4] sm:$0xf]
      %v2701 = vld [vmem:[%s2698 + $0x8] sm:$0xf]
      %v2702 = vld [vmem:[%s2698 + $0xc] sm:$0xf]
      %v2707 = vunpack.c.l.b16 %v2699
      %v2708 = vunpack.c.l.b16 %v2700
      %v2709 = vunpack.c.l.b16 %v2701
      %v2710 = vunpack.c.l.b16 %v2702
      %v2711 = vpack.c.b16 %v2708, %v2707
      %v2712 = vpack.c.b16 %v2710, %v2709
      %v2716 = vsel %vm738, %v2697, 0
      %2718 = vmatprep.subr.bf16.mxu0 0
      %2719 = vmatpush1.bf16.msra.mxu0 %v2711
      %2720 = vmatprep.subr.bf16.mxu0 0
      %2721 = vmatpush1.bf16.msra.mxu0 %v2712
      %2722 = vmatprep.subr.bf16.mxu0 0
      %2723 = vmatpush1.bf16.msra.mxu0 0
      %2724 = vmatprep.subr.bf16.mxu0 0
      %2725 = vmatpush1.bf16.msra.mxu0 0
      %2726 = vmatprep.subr.bf16.mxu0 0
      %2727 = vmatpush1.bf16.msra.mxu0 0
      %2728 = vmatprep.subr.bf16.mxu0 0
      %2729 = vmatpush1.bf16.msra.mxu0 0
      %2730 = vmatprep.subr.bf16.mxu0 0
      %2731 = vmatpush1.bf16.msra.mxu0 0
      %2732 = vmatprep.subr.bf16.mxu0 0
      %2733 = vmatpush1.bf16.msra.mxu0 0
      %2734 = vmatprep.subr.bf16.mxu0 0
      %2735 = vmatpush1.bf16.msra.mxu0 0
      %2736 = vmatprep.subr.bf16.mxu0 0
      %2737 = vmatpush1.bf16.msra.mxu0 0
      %2738 = vmatprep.subr.bf16.mxu0 0
      %2739 = vmatpush1.bf16.msra.mxu0 0
      %2740 = vmatprep.subr.bf16.mxu0 0
      %2741 = vmatpush1.bf16.msra.mxu0 0
      %2742 = vmatprep.subr.bf16.mxu0 0
      %2743 = vmatpush1.bf16.msra.mxu0 0
      %2744 = vmatprep.subr.bf16.mxu0 0
      %2745 = vmatpush1.bf16.msra.mxu0 0
      %2746 = vmatprep.subr.bf16.mxu0 0
      %2747 = vmatpush1.bf16.msra.mxu0 0
      %2748 = vmatprep.subr.bf16.mxu0 0
      %2749 = vmatpush1.bf16.msra.mxu0 0
      %2750 = vmatprep.mubr.bf16.mxu0 0
      %2751 = vmatmul.mubr.bf16.gmra.mrb[0].mxu0 %v2716
      %v2752 = vpop.f32.mrb[0].mxu0
      %v2753 = vadd.f32 0.0, %v2752
      %v2754 = vpop.f32.mrb[0].mxu0
      %v2755 = vpop.f32.mrb[0].mxu0
      %v2756 = vadd.f32 0.0, %v2755
      %v2757 = vpop.f32.mrb[0].mxu0
      %2758 = vdwg.mxu0
      %v2759 = vmul.f32 %v2753, %v721
      %v2760 = vmul.f32 %v2756, %v722
      %v2762 = vsel %vm738, %v2753, 0
      %v2765 = vsel %vm738, %v2756, 0
      %2767 = vmatprep.subr.mxu0 0.0
      %2768 = vmatpush1.msra.mxu0 %v725
      %2769 = vmatprep.subr.mxu0 0.0
      %2770 = vmatpush1.msra.mxu0 %v726
      %2771 = vmatprep.subr.mxu0 0.0
      %2772 = vmatpush1.msra.mxu0 %v727
      %2773 = vmatprep.subr.mxu0 0.0
      %2774 = vmatpush1.msra.mxu0 %v728
      %2775 = vmatprep.subr.mxu0 0.0
      %2776 = vmatpush1.msra.mxu0 0.0
      %2777 = vmatprep.subr.mxu0 0.0
      %2778 = vmatpush1.msra.mxu0 0.0
      %2779 = vmatprep.subr.mxu0 0.0
      %2780 = vmatpush1.msra.mxu0 0.0
      %2781 = vmatprep.subr.mxu0 0.0
      %2782 = vmatpush1.msra.mxu0 0.0
      %2783 = vmatprep.subr.mxu0 0.0
      %2784 = vmatpush1.msra.mxu0 0.0
      %2785 = vmatprep.subr.mxu0 0.0
      %2786 = vmatpush1.msra.mxu0 0.0
      %2787 = vmatprep.subr.mxu0 0.0
      %2788 = vmatpush1.msra.mxu0 0.0
      %2789 = vmatprep.subr.mxu0 0.0
      %2790 = vmatpush1.msra.mxu0 0.0
      %2791 = vmatprep.subr.mxu0 0.0
      %2792 = vmatpush1.msra.mxu0 0.0
      %2793 = vmatprep.subr.mxu0 0.0
      %2794 = vmatpush1.msra.mxu0 0.0
      %2795 = vmatprep.subr.mxu0 0.0
      %2796 = vmatpush1.msra.mxu0 0.0
      %2797 = vmatprep.subr.mxu0 0.0
      %2798 = vmatpush1.msra.mxu0 0.0
      %2799 = vmatprep.subr.mxu0 0.0
      %2800 = vmatpush1.msra.mxu0 0.0
      %2801 = vmatprep.subr.mxu0 0.0
      %2802 = vmatpush1.msra.mxu0 0.0
      %2803 = vmatprep.subr.mxu0 0.0
      %2804 = vmatpush1.msra.mxu0 0.0
      %2805 = vmatprep.subr.mxu0 0.0
      %2806 = vmatpush1.msra.mxu0 0.0
      %2807 = vmatprep.subr.mxu0 0.0
      %2808 = vmatpush1.msra.mxu0 0.0
      %2809 = vmatprep.subr.mxu0 0.0
      %2810 = vmatpush1.msra.mxu0 0.0
      %2811 = vmatprep.subr.mxu0 0.0
      %2812 = vmatpush1.msra.mxu0 0.0
      %2813 = vmatprep.subr.mxu0 0.0
      %2814 = vmatpush1.msra.mxu0 0.0
      %2815 = vmatprep.subr.mxu0 0.0
      %2816 = vmatpush1.msra.mxu0 0.0
      %2817 = vmatprep.subr.mxu0 0.0
      %2818 = vmatpush1.msra.mxu0 0.0
      %2819 = vmatprep.subr.mxu0 0.0
      %2820 = vmatpush1.msra.mxu0 0.0
      %2821 = vmatprep.subr.mxu0 0.0
      %2822 = vmatpush1.msra.mxu0 0.0
      %2823 = vmatprep.subr.mxu0 0.0
      %2824 = vmatpush1.msra.mxu0 0.0
      %2825 = vmatprep.subr.mxu0 0.0
      %2826 = vmatpush1.msra.mxu0 0.0
      %2827 = vmatprep.subr.mxu0 0.0
      %2828 = vmatpush1.msra.mxu0 0.0
      %2829 = vmatprep.subr.mxu0 0.0
      %2830 = vmatpush1.msra.mxu0 0.0
      %2831 = vmatprep.mubr.f32.mxu0 0.0
      %2832 = vmatmul.mubr.f32.gmra.mrb[0].mxu0 %v2762
      %v2833 = vpop.f32.mrb[0].mxu0
      %v2834 = vadd.f32 0.0, %v2833
      %v2835 = vpop.f32.mrb[0].mxu0
      %2836 = vmatprep.mubr.f32.mxu0 0.0
      %2837 = vmatmul.mubr.f32.gmra.mrb[0].mxu0 %v2765
      %v2838 = vpop.f32.mrb[0].mxu0
      %v2839 = vadd.f32 0.0, %v2838
      %v2840 = vpop.f32.mrb[0].mxu0
      %2841 = vdwg.mxu0
      %v2842 = vmul.f32 %v2834, %v723
      %v2843 = vmul.f32 %v2839, %v724
      %v2844 = vadd.f32 %v2759, %v2842
      %v2845 = vadd.f32 %v2760, %v2843
      %v2846 = vmul.f32 %v2753, %v913
      %v2847 = vmul.f32 %v2756, %v915
      %2848 = vrot.lane.b32.xlu0 %v2753, 96
      %v2849 = vpop.permute.xlu0 %2848
      %2850 = vrot.lane.b32.xlu0 %v2756, 96
      %v2851 = vpop.permute.xlu0 %2850
      %v2852 = vsel %vm738, %v2849, 0
      %v2854 = vsel %vm738, %v2851, 0
      %2856 = vmatprep.subr.mxu0 0.0
      %2857 = vmatpush1.msra.mxu0 %v725
      %2858 = vmatprep.subr.mxu0 0.0
      %2859 = vmatpush1.msra.mxu0 %v726
      %2860 = vmatprep.subr.mxu0 0.0
      %2861 = vmatpush1.msra.mxu0 %v727
      %2862 = vmatprep.subr.mxu0 0.0
      %2863 = vmatpush1.msra.mxu0 %v728
      %2864 = vmatprep.subr.mxu0 0.0
      %2865 = vmatpush1.msra.mxu0 0.0
      %2866 = vmatprep.subr.mxu0 0.0
      %2867 = vmatpush1.msra.mxu0 0.0
      %2868 = vmatprep.subr.mxu0 0.0
      %2869 = vmatpush1.msra.mxu0 0.0
      %2870 = vmatprep.subr.mxu0 0.0
      %2871 = vmatpush1.msra.mxu0 0.0
      %2872 = vmatprep.subr.mxu0 0.0
      %2873 = vmatpush1.msra.mxu0 0.0
      %2874 = vmatprep.subr.mxu0 0.0
      %2875 = vmatpush1.msra.mxu0 0.0
      %2876 = vmatprep.subr.mxu0 0.0
      %2877 = vmatpush1.msra.mxu0 0.0
      %2878 = vmatprep.subr.mxu0 0.0
      %2879 = vmatpush1.msra.mxu0 0.0
      %2880 = vmatprep.subr.mxu0 0.0
      %2881 = vmatpush1.msra.mxu0 0.0
      %2882 = vmatprep.subr.mxu0 0.0
      %2883 = vmatpush1.msra.mxu0 0.0
      %2884 = vmatprep.subr.mxu0 0.0
      %2885 = vmatpush1.msra.mxu0 0.0
      %2886 = vmatprep.subr.mxu0 0.0
      %2887 = vmatpush1.msra.mxu0 0.0
      %2888 = vmatprep.subr.mxu0 0.0
      %2889 = vmatpush1.msra.mxu0 0.0
      %2890 = vmatprep.subr.mxu0 0.0
      %2891 = vmatpush1.msra.mxu0 0.0
      %2892 = vmatprep.subr.mxu0 0.0
      %2893 = vmatpush1.msra.mxu0 0.0
      %2894 = vmatprep.subr.mxu0 0.0
      %2895 = vmatpush1.msra.mxu0 0.0
      %2896 = vmatprep.subr.mxu0 0.0
      %2897 = vmatpush1.msra.mxu0 0.0
      %2898 = vmatprep.subr.mxu0 0.0
      %2899 = vmatpush1.msra.mxu0 0.0
      %2900 = vmatprep.subr.mxu0 0.0
      %2901 = vmatpush1.msra.mxu0 0.0
      %2902 = vmatprep.subr.mxu0 0.0
      %2903 = vmatpush1.msra.mxu0 0.0
      %2904 = vmatprep.subr.mxu0 0.0
      %2905 = vmatpush1.msra.mxu0 0.0
      %2906 = vmatprep.subr.mxu0 0.0
      %2907 = vmatpush1.msra.mxu0 0.0
      %2908 = vmatprep.subr.mxu0 0.0
      %2909 = vmatpush1.msra.mxu0 0.0
      %2910 = vmatprep.subr.mxu0 0.0
      %2911 = vmatpush1.msra.mxu0 0.0
      %2912 = vmatprep.subr.mxu0 0.0
      %2913 = vmatpush1.msra.mxu0 0.0
      %2914 = vmatprep.subr.mxu0 0.0
      %2915 = vmatpush1.msra.mxu0 0.0
      %2916 = vmatprep.subr.mxu0 0.0
      %2917 = vmatpush1.msra.mxu0 0.0
      %2918 = vmatprep.subr.mxu0 0.0
      %2919 = vmatpush1.msra.mxu0 0.0
      %2920 = vmatprep.mubr.f32.mxu0 0.0
      %2921 = vmatmul.mubr.f32.gmra.mrb[0].mxu0 %v2852
      %v2922 = vpop.f32.mrb[0].mxu0
      %v2923 = vadd.f32 0.0, %v2922
      %v2924 = vpop.f32.mrb[0].mxu0
      %2925 = vmatprep.mubr.f32.mxu0 0.0
      %2926 = vmatmul.mubr.f32.gmra.mrb[0].mxu0 %v2854
      %v2927 = vpop.f32.mrb[0].mxu0
      %v2928 = vadd.f32 0.0, %v2927
      %v2929 = vpop.f32.mrb[0].mxu0
      %2930 = vdwg.mxu0
      %v2931 = vmul.f32 %v2923, %v723
      %v2932 = vmul.f32 %v2928, %v724
      %2935 = vrot.lane.b32.xlu0 %v2931, 32
      %v2936 = vpop.permute.xlu0 %2935
      %2937 = vrot.lane.b32.xlu0 %v2932, 32
      %v2938 = vpop.permute.xlu0 %2937
      %v2941 = vadd.f32 %v2846, %v2936
      %v2942 = vadd.f32 %v2847, %v2938
      %2944 = vrot.lane.b32.xlu0 %v2941, 96
      %v2945 = vpop.permute.xlu0 %2944
      %v2947 = vsel %vm1018, %v2844, 0
      %v2949 = vsel %vm1018, %v2945, 0
      %2951 = vmatprep.subr.mxu0 0.0
      %2952 = vmatpush1.xpose.msra.mxu0 %v2949
      %2953 = vmatprep.subr.mxu0 0.0
      %2954 = vmatpush1.xpose.msra.mxu0 0.0
      %2955 = vmatprep.subr.mxu0 0.0
      %2956 = vmatpush1.xpose.msra.mxu0 0.0
      %2957 = vmatprep.subr.mxu0 0.0
      %2958 = vmatpush1.xpose.msra.mxu0 0.0
      %2959 = vmatprep.subr.mxu0 0.0
      %2960 = vmatpush1.xpose.msra.mxu0 0.0
      %2961 = vmatprep.subr.mxu0 0.0
      %2962 = vmatpush1.xpose.msra.mxu0 0.0
      %2963 = vmatprep.subr.mxu0 0.0
      %2964 = vmatpush1.xpose.msra.mxu0 0.0
      %2965 = vmatprep.subr.mxu0 0.0
      %2966 = vmatpush1.xpose.msra.mxu0 0.0
      %2967 = vmatprep.subr.mxu0 0.0
      %2968 = vmatpush1.xpose.msra.mxu0 0.0
      %2969 = vmatprep.subr.mxu0 0.0
      %2970 = vmatpush1.xpose.msra.mxu0 0.0
      %2971 = vmatprep.subr.mxu0 0.0
      %2972 = vmatpush1.xpose.msra.mxu0 0.0
      %2973 = vmatprep.subr.mxu0 0.0
      %2974 = vmatpush1.xpose.msra.mxu0 0.0
      %2975 = vmatprep.subr.mxu0 0.0
      %2976 = vmatpush1.xpose.msra.mxu0 0.0
      %2977 = vmatprep.subr.mxu0 0.0
      %2978 = vmatpush1.xpose.msra.mxu0 0.0
      %2979 = vmatprep.subr.mxu0 0.0
      %2980 = vmatpush1.xpose.msra.mxu0 0.0
      %2981 = vmatprep.subr.mxu0 0.0
      %2982 = vmatpush1.xpose.msra.mxu0 0.0
      %2983 = vmatprep.subr.mxu0 0.0
      %2984 = vmatpush1.xpose.msra.mxu0 0.0
      %2985 = vmatprep.subr.mxu0 0.0
      %2986 = vmatpush1.xpose.msra.mxu0 0.0
      %2987 = vmatprep.subr.mxu0 0.0
      %2988 = vmatpush1.xpose.msra.mxu0 0.0
      %2989 = vmatprep.subr.mxu0 0.0
      %2990 = vmatpush1.xpose.msra.mxu0 0.0
      %2991 = vmatprep.subr.mxu0 0.0
      %2992 = vmatpush1.xpose.msra.mxu0 0.0
      %2993 = vmatprep.subr.mxu0 0.0
      %2994 = vmatpush1.xpose.msra.mxu0 0.0
      %2995 = vmatprep.subr.mxu0 0.0
      %2996 = vmatpush1.xpose.msra.mxu0 0.0
      %2997 = vmatprep.subr.mxu0 0.0
      %2998 = vmatpush1.xpose.msra.mxu0 0.0
      %2999 = vmatprep.subr.mxu0 0.0
      %3000 = vmatpush1.xpose.msra.mxu0 0.0
      %3001 = vmatprep.subr.mxu0 0.0
      %3002 = vmatpush1.xpose.msra.mxu0 0.0
      %3003 = vmatprep.subr.mxu0 0.0
      %3004 = vmatpush1.xpose.msra.mxu0 0.0
      %3005 = vmatprep.subr.mxu0 0.0
      %3006 = vmatpush1.xpose.msra.mxu0 0.0
      %3007 = vmatprep.subr.mxu0 0.0
      %3008 = vmatpush1.xpose.msra.mxu0 0.0
      %3009 = vmatprep.subr.mxu0 0.0
      %3010 = vmatpush1.xpose.msra.mxu0 0.0
      %3011 = vmatprep.subr.mxu0 0.0
      %3012 = vmatpush1.xpose.msra.mxu0 0.0
      %3013 = vmatprep.subr.mxu0 0.0
      %3014 = vmatpush1.xpose.msra.mxu0 0.0
      %3015 = vmatprep.mubr.f32.mxu0 0.0
      %3016 = vmatmul.mubr.f32.gmra.mrb[0].mxu0 %v2947
      %v3017 = vpop.f32.mrb[0].mxu0
      %v3018 = vadd.f32 0.0, %v3017
      %v3019 = vpop.f32.mrb[0].mxu0
      %3020 = vdwg.mxu0
      %v3021 = vmul.f32 %v3018, 0.35355338
      %v3022 = vadd.f32 %v3021, %v734
      %v3023 = vsel %vm1018, %v3022, -inf
      %3024 = vmax.xlane.f32.xlu0 %v3023
      %v3025 = vpop.xlane.xlu0 %3024
      %v3026 = vsub.f32 %v3022, %v3025
      %v3027 = vmul.f32 %v3026, 1.442695
      %v3028 = vpow.pop %v3027
      %v3029 = vsel %vm1018, %v3028, 0.0
      %3030 = vadd.xlane.f32.xlu0 %v3029
      %v3031 = vpop.xlane.xlu0 %3030
      %v3032 = vrcp.pop %v3031
      %v3033 = vmul.f32 %v3028, %v3032
      %3034 = vrot.lane.b32.xlu0 %v2753, 64
      %v3035 = vpop.permute.xlu0 %3034
      %v3038 = vsel %vm1018, %v3033, 0
      %3040 = vmatprep.subr.mxu0 0.0
      %3041 = vmatpush1.msra.mxu0 %v3035
      %3042 = vmatprep.subr.mxu0 0.0
      %3043 = vmatpush1.msra.mxu0 0.0
      %3044 = vmatprep.subr.mxu0 0.0
      %3045 = vmatpush1.msra.mxu0 0.0
      %3046 = vmatprep.subr.mxu0 0.0
      %3047 = vmatpush1.msra.mxu0 0.0
      %3048 = vmatprep.subr.mxu0 0.0
      %3049 = vmatpush1.msra.mxu0 0.0
      %3050 = vmatprep.subr.mxu0 0.0
      %3051 = vmatpush1.msra.mxu0 0.0
      %3052 = vmatprep.subr.mxu0 0.0
      %3053 = vmatpush1.msra.mxu0 0.0
      %3054 = vmatprep.subr.mxu0 0.0
      %3055 = vmatpush1.msra.mxu0 0.0
      %3056 = vmatprep.subr.mxu0 0.0
      %3057 = vmatpush1.msra.mxu0 0.0
      %3058 = vmatprep.subr.mxu0 0.0
      %3059 = vmatpush1.msra.mxu0 0.0
      %3060 = vmatprep.subr.mxu0 0.0
      %3061 = vmatpush1.msra.mxu0 0.0
      %3062 = vmatprep.subr.mxu0 0.0
      %3063 = vmatpush1.msra.mxu0 0.0
      %3064 = vmatprep.subr.mxu0 0.0
      %3065 = vmatpush1.msra.mxu0 0.0
      %3066 = vmatprep.subr.mxu0 0.0
      %3067 = vmatpush1.msra.mxu0 0.0
      %3068 = vmatprep.subr.mxu0 0.0
      %3069 = vmatpush1.msra.mxu0 0.0
      %3070 = vmatprep.subr.mxu0 0.0
      %3071 = vmatpush1.msra.mxu0 0.0
      %3072 = vmatprep.subr.mxu0 0.0
      %3073 = vmatpush1.msra.mxu0 0.0
      %3074 = vmatprep.subr.mxu0 0.0
      %3075 = vmatpush1.msra.mxu0 0.0
      %3076 = vmatprep.subr.mxu0 0.0
      %3077 = vmatpush1.msra.mxu0 0.0
      %3078 = vmatprep.subr.mxu0 0.0
      %3079 = vmatpush1.msra.mxu0 0.0
      %3080 = vmatprep.subr.mxu0 0.0
      %3081 = vmatpush1.msra.mxu0 0.0
      %3082 = vmatprep.subr.mxu0 0.0
      %3083 = vmatpush1.msra.mxu0 0.0
      %3084 = vmatprep.subr.mxu0 0.0
      %3085 = vmatpush1.msra.mxu0 0.0
      %3086 = vmatprep.subr.mxu0 0.0
      %3087 = vmatpush1.msra.mxu0 0.0
      %3088 = vmatprep.subr.mxu0 0.0
      %3089 = vmatpush1.msra.mxu0 0.0
      %3090 = vmatprep.subr.mxu0 0.0
      %3091 = vmatpush1.msra.mxu0 0.0
      %3092 = vmatprep.subr.mxu0 0.0
      %3093 = vmatpush1.msra.mxu0 0.0
      %3094 = vmatprep.subr.mxu0 0.0
      %3095 = vmatpush1.msra.mxu0 0.0
      %3096 = vmatprep.subr.mxu0 0.0
      %3097 = vmatpush1.msra.mxu0 0.0
      %3098 = vmatprep.subr.mxu0 0.0
      %3099 = vmatpush1.msra.mxu0 0.0
      %3100 = vmatprep.subr.mxu0 0.0
      %3101 = vmatpush1.msra.mxu0 0.0
      %3102 = vmatprep.subr.mxu0 0.0
      %3103 = vmatpush1.msra.mxu0 0.0
      %3104 = vmatprep.mubr.f32.mxu0 0.0
      %3105 = vmatmul.mubr.f32.gmra.mrb[0].mxu0 %v3038
      %v3106 = vpop.f32.mrb[0].mxu0
      %v3107 = vadd.f32 0.0, %v3106
      %v3108 = vpop.f32.mrb[0].mxu0
      %3109 = vdwg.mxu0
      %3110 = vrot.lane.b32.xlu0 %v2844, 120
      %v3111 = vpop.permute.xlu0 %3110
      %3112 = vrot.lane.b32.xlu0 %v2941, 88
      %v3113 = vpop.permute.xlu0 %3112
      %v3114 = vsel %vm1018, %v3111, 0
      %v3116 = vsel %vm1018, %v3113, 0
      %3118 = vmatprep.subr.mxu0 0.0
      %3119 = vmatpush1.xpose.msra.mxu0 %v3116
      %3120 = vmatprep.subr.mxu0 0.0
      %3121 = vmatpush1.xpose.msra.mxu0 0.0
      %3122 = vmatprep.subr.mxu0 0.0
      %3123 = vmatpush1.xpose.msra.mxu0 0.0
      %3124 = vmatprep.subr.mxu0 0.0
      %3125 = vmatpush1.xpose.msra.mxu0 0.0
      %3126 = vmatprep.subr.mxu0 0.0
      %3127 = vmatpush1.xpose.msra.mxu0 0.0
      %3128 = vmatprep.subr.mxu0 0.0
      %3129 = vmatpush1.xpose.msra.mxu0 0.0
      %3130 = vmatprep.subr.mxu0 0.0
      %3131 = vmatpush1.xpose.msra.mxu0 0.0
      %3132 = vmatprep.subr.mxu0 0.0
      %3133 = vmatpush1.xpose.msra.mxu0 0.0
      %3134 = vmatprep.subr.mxu0 0.0
      %3135 = vmatpush1.xpose.msra.mxu0 0.0
      %3136 = vmatprep.subr.mxu0 0.0
      %3137 = vmatpush1.xpose.msra.mxu0 0.0
      %3138 = vmatprep.subr.mxu0 0.0
      %3139 = vmatpush1.xpose.msra.mxu0 0.0
      %3140 = vmatprep.subr.mxu0 0.0
      %3141 = vmatpush1.xpose.msra.mxu0 0.0
      %3142 = vmatprep.subr.mxu0 0.0
      %3143 = vmatpush1.xpose.msra.mxu0 0.0
      %3144 = vmatprep.subr.mxu0 0.0
      %3145 = vmatpush1.xpose.msra.mxu0 0.0
      %3146 = vmatprep.subr.mxu0 0.0
      %3147 = vmatpush1.xpose.msra.mxu0 0.0
      %3148 = vmatprep.subr.mxu0 0.0
      %3149 = vmatpush1.xpose.msra.mxu0 0.0
      %3150 = vmatprep.subr.mxu0 0.0
      %3151 = vmatpush1.xpose.msra.mxu0 0.0
      %3152 = vmatprep.subr.mxu0 0.0
      %3153 = vmatpush1.xpose.msra.mxu0 0.0
      %3154 = vmatprep.subr.mxu0 0.0
      %3155 = vmatpush1.xpose.msra.mxu0 0.0
      %3156 = vmatprep.subr.mxu0 0.0
      %3157 = vmatpush1.xpose.msra.mxu0 0.0
      %3158 = vmatprep.subr.mxu0 0.0
      %3159 = vmatpush1.xpose.msra.mxu0 0.0
      %3160 = vmatprep.subr.mxu0 0.0
      %3161 = vmatpush1.xpose.msra.mxu0 0.0
      %3162 = vmatprep.subr.mxu0 0.0
      %3163 = vmatpush1.xpose.msra.mxu0 0.0
      %3164 = vmatprep.subr.mxu0 0.0
      %3165 = vmatpush1.xpose.msra.mxu0 0.0
      %3166 = vmatprep.subr.mxu0 0.0
      %3167 = vmatpush1.xpose.msra.mxu0 0.0
      %3168 = vmatprep.subr.mxu0 0.0
      %3169 = vmatpush1.xpose.msra.mxu0 0.0
      %3170 = vmatprep.subr.mxu0 0.0
      %3171 = vmatpush1.xpose.msra.mxu0 0.0
      %3172 = vmatprep.subr.mxu0 0.0
      %3173 = vmatpush1.xpose.msra.mxu0 0.0
      %3174 = vmatprep.subr.mxu0 0.0
      %3175 = vmatpush1.xpose.msra.mxu0 0.0
      %3176 = vmatprep.subr.mxu0 0.0
      %3177 = vmatpush1.xpose.msra.mxu0 0.0
      %3178 = vmatprep.subr.mxu0 0.0
      %3179 = vmatpush1.xpose.msra.mxu0 0.0
      %3180 = vmatprep.subr.mxu0 0.0
      %3181 = vmatpush1.xpose.msra.mxu0 0.0
      %3182 = vmatprep.mubr.f32.mxu0 0.0
      %3183 = vmatmul.mubr.f32.gmra.mrb[0].mxu0 %v3114
      %v3184 = vpop.f32.mrb[0].mxu0
      %v3185 = vadd.f32 0.0, %v3184
      %v3186 = vpop.f32.mrb[0].mxu0
      %3187 = vdwg.mxu0
      %v3188 = vmul.f32 %v3185, 0.35355338
      %v3189 = vadd.f32 %v3188, %v734
      %v3190 = vsel %vm1018, %v3189, -inf
      %3191 = vmax.xlane.f32.xlu0 %v3190
      %v3192 = vpop.xlane.xlu0 %3191
      %v3193 = vsub.f32 %v3189, %v3192
      %v3194 = vmul.f32 %v3193, 1.442695
      %v3195 = vpow.pop %v3194
      %v3196 = vsel %vm1018, %v3195, 0.0
      %3197 = vadd.xlane.f32.xlu0 %v3196
      %v3198 = vpop.xlane.xlu0 %3197
      %v3199 = vrcp.pop %v3198
      %v3200 = vmul.f32 %v3195, %v3199
      %3201 = vrot.lane.b32.xlu0 %v2753, 56
      %v3202 = vpop.permute.xlu0 %3201
      %v3205 = vsel %vm1018, %v3200, 0
      %3207 = vmatprep.subr.mxu0 0.0
      %3208 = vmatpush1.msra.mxu0 %v3202
      %3209 = vmatprep.subr.mxu0 0.0
      %3210 = vmatpush1.msra.mxu0 0.0
      %3211 = vmatprep.subr.mxu0 0.0
      %3212 = vmatpush1.msra.mxu0 0.0
      %3213 = vmatprep.subr.mxu0 0.0
      %3214 = vmatpush1.msra.mxu0 0.0
      %3215 = vmatprep.subr.mxu0 0.0
      %3216 = vmatpush1.msra.mxu0 0.0
      %3217 = vmatprep.subr.mxu0 0.0
      %3218 = vmatpush1.msra.mxu0 0.0
      %3219 = vmatprep.subr.mxu0 0.0
      %3220 = vmatpush1.msra.mxu0 0.0
      %3221 = vmatprep.subr.mxu0 0.0
      %3222 = vmatpush1.msra.mxu0 0.0
      %3223 = vmatprep.subr.mxu0 0.0
      %3224 = vmatpush1.msra.mxu0 0.0
      %3225 = vmatprep.subr.mxu0 0.0
      %3226 = vmatpush1.msra.mxu0 0.0
      %3227 = vmatprep.subr.mxu0 0.0
      %3228 = vmatpush1.msra.mxu0 0.0
      %3229 = vmatprep.subr.mxu0 0.0
      %3230 = vmatpush1.msra.mxu0 0.0
      %3231 = vmatprep.subr.mxu0 0.0
      %3232 = vmatpush1.msra.mxu0 0.0
      %3233 = vmatprep.subr.mxu0 0.0
      %3234 = vmatpush1.msra.mxu0 0.0
      %3235 = vmatprep.subr.mxu0 0.0
      %3236 = vmatpush1.msra.mxu0 0.0
      %3237 = vmatprep.subr.mxu0 0.0
      %3238 = vmatpush1.msra.mxu0 0.0
      %3239 = vmatprep.subr.mxu0 0.0
      %3240 = vmatpush1.msra.mxu0 0.0
      %3241 = vmatprep.subr.mxu0 0.0
      %3242 = vmatpush1.msra.mxu0 0.0
      %3243 = vmatprep.subr.mxu0 0.0
      %3244 = vmatpush1.msra.mxu0 0.0
      %3245 = vmatprep.subr.mxu0 0.0
      %3246 = vmatpush1.msra.mxu0 0.0
      %3247 = vmatprep.subr.mxu0 0.0
      %3248 = vmatpush1.msra.mxu0 0.0
      %3249 = vmatprep.subr.mxu0 0.0
      %3250 = vmatpush1.msra.mxu0 0.0
      %3251 = vmatprep.subr.mxu0 0.0
      %3252 = vmatpush1.msra.mxu0 0.0
      %3253 = vmatprep.subr.mxu0 0.0
      %3254 = vmatpush1.msra.mxu0 0.0
      %3255 = vmatprep.subr.mxu0 0.0
      %3256 = vmatpush1.msra.mxu0 0.0
      %3257 = vmatprep.subr.mxu0 0.0
      %3258 = vmatpush1.msra.mxu0 0.0
      %3259 = vmatprep.subr.mxu0 0.0
      %3260 = vmatpush1.msra.mxu0 0.0
      %3261 = vmatprep.subr.mxu0 0.0
      %3262 = vmatpush1.msra.mxu0 0.0
      %3263 = vmatprep.subr.mxu0 0.0
      %3264 = vmatpush1.msra.mxu0 0.0
      %3265 = vmatprep.subr.mxu0 0.0
      %3266 = vmatpush1.msra.mxu0 0.0
      %3267 = vmatprep.subr.mxu0 0.0
      %3268 = vmatpush1.msra.mxu0 0.0
      %3269 = vmatprep.subr.mxu0 0.0
      %3270 = vmatpush1.msra.mxu0 0.0
      %3271 = vmatprep.mubr.f32.mxu0 0.0
      %3272 = vmatmul.mubr.f32.gmra.mrb[0].mxu0 %v3205
      %v3273 = vpop.f32.mrb[0].mxu0
      %v3274 = vadd.f32 0.0, %v3273
      %v3275 = vpop.f32.mrb[0].mxu0
      %3276 = vdwg.mxu0
      %3277 = vrot.lane.b32.xlu0 %v2844, 112
      %v3278 = vpop.permute.xlu0 %3277
      %3279 = vrot.lane.b32.xlu0 %v2941, 80
      %v3280 = vpop.permute.xlu0 %3279
      %v3281 = vsel %vm1018, %v3278, 0
      %v3283 = vsel %vm1018, %v3280, 0
      %3285 = vmatprep.subr.mxu0 0.0
      %3286 = vmatpush1.xpose.msra.mxu0 %v3283
      %3287 = vmatprep.subr.mxu0 0.0
      %3288 = vmatpush1.xpose.msra.mxu0 0.0
      %3289 = vmatprep.subr.mxu0 0.0
      %3290 = vmatpush1.xpose.msra.mxu0 0.0
      %3291 = vmatprep.subr.mxu0 0.0
      %3292 = vmatpush1.xpose.msra.mxu0 0.0
      %3293 = vmatprep.subr.mxu0 0.0
      %3294 = vmatpush1.xpose.msra.mxu0 0.0
      %3295 = vmatprep.subr.mxu0 0.0
      %3296 = vmatpush1.xpose.msra.mxu0 0.0
      %3297 = vmatprep.subr.mxu0 0.0
      %3298 = vmatpush1.xpose.msra.mxu0 0.0
      %3299 = vmatprep.subr.mxu0 0.0
      %3300 = vmatpush1.xpose.msra.mxu0 0.0
      %3301 = vmatprep.subr.mxu0 0.0
      %3302 = vmatpush1.xpose.msra.mxu0 0.0
      %3303 = vmatprep.subr.mxu0 0.0
      %3304 = vmatpush1.xpose.msra.mxu0 0.0
      %3305 = vmatprep.subr.mxu0 0.0
      %3306 = vmatpush1.xpose.msra.mxu0 0.0
      %3307 = vmatprep.subr.mxu0 0.0
      %3308 = vmatpush1.xpose.msra.mxu0 0.0
      %3309 = vmatprep.subr.mxu0 0.0
      %3310 = vmatpush1.xpose.msra.mxu0 0.0
      %3311 = vmatprep.subr.mxu0 0.0
      %3312 = vmatpush1.xpose.msra.mxu0 0.0
      %3313 = vmatprep.subr.mxu0 0.0
      %3314 = vmatpush1.xpose.msra.mxu0 0.0
      %3315 = vmatprep.subr.mxu0 0.0
      %3316 = vmatpush1.xpose.msra.mxu0 0.0
      %3317 = vmatprep.subr.mxu0 0.0
      %3318 = vmatpush1.xpose.msra.mxu0 0.0
      %3319 = vmatprep.subr.mxu0 0.0
      %3320 = vmatpush1.xpose.msra.mxu0 0.0
      %3321 = vmatprep.subr.mxu0 0.0
      %3322 = vmatpush1.xpose.msra.mxu0 0.0
      %3323 = vmatprep.subr.mxu0 0.0
      %3324 = vmatpush1.xpose.msra.mxu0 0.0
      %3325 = vmatprep.subr.mxu0 0.0
      %3326 = vmatpush1.xpose.msra.mxu0 0.0
      %3327 = vmatprep.subr.mxu0 0.0
      %3328 = vmatpush1.xpose.msra.mxu0 0.0
      %3329 = vmatprep.subr.mxu0 0.0
      %3330 = vmatpush1.xpose.msra.mxu0 0.0
      %3331 = vmatprep.subr.mxu0 0.0
      %3332 = vmatpush1.xpose.msra.mxu0 0.0
      %3333 = vmatprep.subr.mxu0 0.0
      %3334 = vmatpush1.xpose.msra.mxu0 0.0
      %3335 = vmatprep.subr.mxu0 0.0
      %3336 = vmatpush1.xpose.msra.mxu0 0.0
      %3337 = vmatprep.subr.mxu0 0.0
      %3338 = vmatpush1.xpose.msra.mxu0 0.0
      %3339 = vmatprep.subr.mxu0 0.0
      %3340 = vmatpush1.xpose.msra.mxu0 0.0
      %3341 = vmatprep.subr.mxu0 0.0
      %3342 = vmatpush1.xpose.msra.mxu0 0.0
      %3343 = vmatprep.subr.mxu0 0.0
      %3344 = vmatpush1.xpose.msra.mxu0 0.0
      %3345 = vmatprep.subr.mxu0 0.0
      %3346 = vmatpush1.xpose.msra.mxu0 0.0
      %3347 = vmatprep.subr.mxu0 0.0
      %3348 = vmatpush1.xpose.msra.mxu0 0.0
      %3349 = vmatprep.mubr.f32.mxu0 0.0
      %3350 = vmatmul.mubr.f32.gmra.mrb[0].mxu0 %v3281
      %v3351 = vpop.f32.mrb[0].mxu0
      %v3352 = vadd.f32 0.0, %v3351
      %v3353 = vpop.f32.mrb[0].mxu0
      %3354 = vdwg.mxu0
      %v3355 = vmul.f32 %v3352, 0.35355338
      %v3356 = vadd.f32 %v3355, %v734
      %v3357 = vsel %vm1018, %v3356, -inf
      %3358 = vmax.xlane.f32.xlu0 %v3357
      %v3359 = vpop.xlane.xlu0 %3358
      %v3360 = vsub.f32 %v3356, %v3359
      %v3361 = vmul.f32 %v3360, 1.442695
      %v3362 = vpow.pop %v3361
      %v3363 = vsel %vm1018, %v3362, 0.0
      %3364 = vadd.xlane.f32.xlu0 %v3363
      %v3365 = vpop.xlane.xlu0 %3364
      %v3366 = vrcp.pop %v3365
      %v3367 = vmul.f32 %v3362, %v3366
      %3368 = vrot.lane.b32.xlu0 %v2753, 48
      %v3369 = vpop.permute.xlu0 %3368
      %v3372 = vsel %vm1018, %v3367, 0
      %3374 = vmatprep.subr.mxu0 0.0
      %3375 = vmatpush1.msra.mxu0 %v3369
      %3376 = vmatprep.subr.mxu0 0.0
      %3377 = vmatpush1.msra.mxu0 0.0
      %3378 = vmatprep.subr.mxu0 0.0
      %3379 = vmatpush1.msra.mxu0 0.0
      %3380 = vmatprep.subr.mxu0 0.0
      %3381 = vmatpush1.msra.mxu0 0.0
      %3382 = vmatprep.subr.mxu0 0.0
      %3383 = vmatpush1.msra.mxu0 0.0
      %3384 = vmatprep.subr.mxu0 0.0
      %3385 = vmatpush1.msra.mxu0 0.0
      %3386 = vmatprep.subr.mxu0 0.0
      %3387 = vmatpush1.msra.mxu0 0.0
      %3388 = vmatprep.subr.mxu0 0.0
      %3389 = vmatpush1.msra.mxu0 0.0
      %3390 = vmatprep.subr.mxu0 0.0
      %3391 = vmatpush1.msra.mxu0 0.0
      %3392 = vmatprep.subr.mxu0 0.0
      %3393 = vmatpush1.msra.mxu0 0.0
      %3394 = vmatprep.subr.mxu0 0.0
      %3395 = vmatpush1.msra.mxu0 0.0
      %3396 = vmatprep.subr.mxu0 0.0
      %3397 = vmatpush1.msra.mxu0 0.0
      %3398 = vmatprep.subr.mxu0 0.0
      %3399 = vmatpush1.msra.mxu0 0.0
      %3400 = vmatprep.subr.mxu0 0.0
      %3401 = vmatpush1.msra.mxu0 0.0
      %3402 = vmatprep.subr.mxu0 0.0
      %3403 = vmatpush1.msra.mxu0 0.0
      %3404 = vmatprep.subr.mxu0 0.0
      %3405 = vmatpush1.msra.mxu0 0.0
      %3406 = vmatprep.subr.mxu0 0.0
      %3407 = vmatpush1.msra.mxu0 0.0
      %3408 = vmatprep.subr.mxu0 0.0
      %3409 = vmatpush1.msra.mxu0 0.0
      %3410 = vmatprep.subr.mxu0 0.0
      %3411 = vmatpush1.msra.mxu0 0.0
      %3412 = vmatprep.subr.mxu0 0.0
      %3413 = vmatpush1.msra.mxu0 0.0
      %3414 = vmatprep.subr.mxu0 0.0
      %3415 = vmatpush1.msra.mxu0 0.0
      %3416 = vmatprep.subr.mxu0 0.0
      %3417 = vmatpush1.msra.mxu0 0.0
      %3418 = vmatprep.subr.mxu0 0.0
      %3419 = vmatpush1.msra.mxu0 0.0
      %3420 = vmatprep.subr.mxu0 0.0
      %3421 = vmatpush1.msra.mxu0 0.0
      %3422 = vmatprep.subr.mxu0 0.0
      %3423 = vmatpush1.msra.mxu0 0.0
      %3424 = vmatprep.subr.mxu0 0.0
      %3425 = vmatpush1.msra.mxu0 0.0
      %3426 = vmatprep.subr.mxu0 0.0
      %3427 = vmatpush1.msra.mxu0 0.0
      %3428 = vmatprep.subr.mxu0 0.0
      %3429 = vmatpush1.msra.mxu0 0.0
      %3430 = vmatprep.subr.mxu0 0.0
      %3431 = vmatpush1.msra.mxu0 0.0
      %3432 = vmatprep.subr.mxu0 0.0
      %3433 = vmatpush1.msra.mxu0 0.0
      %3434 = vmatprep.subr.mxu0 0.0
      %3435 = vmatpush1.msra.mxu0 0.0
      %3436 = vmatprep.subr.mxu0 0.0
      %3437 = vmatpush1.msra.mxu0 0.0
      %3438 = vmatprep.mubr.f32.mxu0 0.0
      %3439 = vmatmul.mubr.f32.gmra.mrb[0].mxu0 %v3372
      %v3440 = vpop.f32.mrb[0].mxu0
      %v3441 = vadd.f32 0.0, %v3440
      %v3442 = vpop.f32.mrb[0].mxu0
      %3443 = vdwg.mxu0
      %3444 = vrot.lane.b32.xlu0 %v2844, 104
      %v3445 = vpop.permute.xlu0 %3444
      %3446 = vrot.lane.b32.xlu0 %v2941, 72
      %v3447 = vpop.permute.xlu0 %3446
      %v3448 = vsel %vm1018, %v3445, 0
      %v3450 = vsel %vm1018, %v3447, 0
      %3452 = vmatprep.subr.mxu0 0.0
      %3453 = vmatpush1.xpose.msra.mxu0 %v3450
      %3454 = vmatprep.subr.mxu0 0.0
      %3455 = vmatpush1.xpose.msra.mxu0 0.0
      %3456 = vmatprep.subr.mxu0 0.0
      %3457 = vmatpush1.xpose.msra.mxu0 0.0
      %3458 = vmatprep.subr.mxu0 0.0
      %3459 = vmatpush1.xpose.msra.mxu0 0.0
      %3460 = vmatprep.subr.mxu0 0.0
      %3461 = vmatpush1.xpose.msra.mxu0 0.0
      %3462 = vmatprep.subr.mxu0 0.0
      %3463 = vmatpush1.xpose.msra.mxu0 0.0
      %3464 = vmatprep.subr.mxu0 0.0
      %3465 = vmatpush1.xpose.msra.mxu0 0.0
      %3466 = vmatprep.subr.mxu0 0.0
      %3467 = vmatpush1.xpose.msra.mxu0 0.0
      %3468 = vmatprep.subr.mxu0 0.0
      %3469 = vmatpush1.xpose.msra.mxu0 0.0
      %3470 = vmatprep.subr.mxu0 0.0
      %3471 = vmatpush1.xpose.msra.mxu0 0.0
      %3472 = vmatprep.subr.mxu0 0.0
      %3473 = vmatpush1.xpose.msra.mxu0 0.0
      %3474 = vmatprep.subr.mxu0 0.0
      %3475 = vmatpush1.xpose.msra.mxu0 0.0
      %3476 = vmatprep.subr.mxu0 0.0
      %3477 = vmatpush1.xpose.msra.mxu0 0.0
      %3478 = vmatprep.subr.mxu0 0.0
      %3479 = vmatpush1.xpose.msra.mxu0 0.0
      %3480 = vmatprep.subr.mxu0 0.0
      %3481 = vmatpush1.xpose.msra.mxu0 0.0
      %3482 = vmatprep.subr.mxu0 0.0
      %3483 = vmatpush1.xpose.msra.mxu0 0.0
      %3484 = vmatprep.subr.mxu0 0.0
      %3485 = vmatpush1.xpose.msra.mxu0 0.0
      %3486 = vmatprep.subr.mxu0 0.0
      %3487 = vmatpush1.xpose.msra.mxu0 0.0
      %3488 = vmatprep.subr.mxu0 0.0
      %3489 = vmatpush1.xpose.msra.mxu0 0.0
      %3490 = vmatprep.subr.mxu0 0.0
      %3491 = vmatpush1.xpose.msra.mxu0 0.0
      %3492 = vmatprep.subr.mxu0 0.0
      %3493 = vmatpush1.xpose.msra.mxu0 0.0
      %3494 = vmatprep.subr.mxu0 0.0
      %3495 = vmatpush1.xpose.msra.mxu0 0.0
      %3496 = vmatprep.subr.mxu0 0.0
      %3497 = vmatpush1.xpose.msra.mxu0 0.0
      %3498 = vmatprep.subr.mxu0 0.0
      %3499 = vmatpush1.xpose.msra.mxu0 0.0
      %3500 = vmatprep.subr.mxu0 0.0
      %3501 = vmatpush1.xpose.msra.mxu0 0.0
      %3502 = vmatprep.subr.mxu0 0.0
      %3503 = vmatpush1.xpose.msra.mxu0 0.0
      %3504 = vmatprep.subr.mxu0 0.0
      %3505 = vmatpush1.xpose.msra.mxu0 0.0
      %3506 = vmatprep.subr.mxu0 0.0
      %3507 = vmatpush1.xpose.msra.mxu0 0.0
      %3508 = vmatprep.subr.mxu0 0.0
      %3509 = vmatpush1.xpose.msra.mxu0 0.0
      %3510 = vmatprep.subr.mxu0 0.0
      %3511 = vmatpush1.xpose.msra.mxu0 0.0
      %3512 = vmatprep.subr.mxu0 0.0
      %3513 = vmatpush1.xpose.msra.mxu0 0.0
      %3514 = vmatprep.subr.mxu0 0.0
      %3515 = vmatpush1.xpose.msra.mxu0 0.0
      %3516 = vmatprep.mubr.f32.mxu0 0.0
      %3517 = vmatmul.mubr.f32.gmra.mrb[0].mxu0 %v3448
      %v3518 = vpop.f32.mrb[0].mxu0
      %v3519 = vadd.f32 0.0, %v3518
      %v3520 = vpop.f32.mrb[0].mxu0
      %3521 = vdwg.mxu0
      %v3522 = vmul.f32 %v3519, 0.35355338
      %v3523 = vadd.f32 %v3522, %v734
      %v3524 = vsel %vm1018, %v3523, -inf
      %3525 = vmax.xlane.f32.xlu0 %v3524
      %v3526 = vpop.xlane.xlu0 %3525
      %v3527 = vsub.f32 %v3523, %v3526
      %v3528 = vmul.f32 %v3527, 1.442695
      %v3529 = vpow.pop %v3528
      %v3530 = vsel %vm1018, %v3529, 0.0
      %3531 = vadd.xlane.f32.xlu0 %v3530
      %v3532 = vpop.xlane.xlu0 %3531
      %v3533 = vrcp.pop %v3532
      %v3534 = vmul.f32 %v3529, %v3533
      %3535 = vrot.lane.b32.xlu0 %v2753, 40
      %v3536 = vpop.permute.xlu0 %3535
      %v3539 = vsel %vm1018, %v3534, 0
      %3541 = vmatprep.subr.mxu0 0.0
      %3542 = vmatpush1.msra.mxu0 %v3536
      %3543 = vmatprep.subr.mxu0 0.0
      %3544 = vmatpush1.msra.mxu0 0.0
      %3545 = vmatprep.subr.mxu0 0.0
      %3546 = vmatpush1.msra.mxu0 0.0
      %3547 = vmatprep.subr.mxu0 0.0
      %3548 = vmatpush1.msra.mxu0 0.0
      %3549 = vmatprep.subr.mxu0 0.0
      %3550 = vmatpush1.msra.mxu0 0.0
      %3551 = vmatprep.subr.mxu0 0.0
      %3552 = vmatpush1.msra.mxu0 0.0
      %3553 = vmatprep.subr.mxu0 0.0
      %3554 = vmatpush1.msra.mxu0 0.0
      %3555 = vmatprep.subr.mxu0 0.0
      %3556 = vmatpush1.msra.mxu0 0.0
      %3557 = vmatprep.subr.mxu0 0.0
      %3558 = vmatpush1.msra.mxu0 0.0
      %3559 = vmatprep.subr.mxu0 0.0
      %3560 = vmatpush1.msra.mxu0 0.0
      %3561 = vmatprep.subr.mxu0 0.0
      %3562 = vmatpush1.msra.mxu0 0.0
      %3563 = vmatprep.subr.mxu0 0.0
      %3564 = vmatpush1.msra.mxu0 0.0
      %3565 = vmatprep.subr.mxu0 0.0
      %3566 = vmatpush1.msra.mxu0 0.0
      %3567 = vmatprep.subr.mxu0 0.0
      %3568 = vmatpush1.msra.mxu0 0.0
      %3569 = vmatprep.subr.mxu0 0.0
      %3570 = vmatpush1.msra.mxu0 0.0
      %3571 = vmatprep.subr.mxu0 0.0
      %3572 = vmatpush1.msra.mxu0 0.0
      %3573 = vmatprep.subr.mxu0 0.0
      %3574 = vmatpush1.msra.mxu0 0.0
      %3575 = vmatprep.subr.mxu0 0.0
      %3576 = vmatpush1.msra.mxu0 0.0
      %3577 = vmatprep.subr.mxu0 0.0
      %3578 = vmatpush1.msra.mxu0 0.0
      %3579 = vmatprep.subr.mxu0 0.0
      %3580 = vmatpush1.msra.mxu0 0.0
      %3581 = vmatprep.subr.mxu0 0.0
      %3582 = vmatpush1.msra.mxu0 0.0
      %3583 = vmatprep.subr.mxu0 0.0
      %3584 = vmatpush1.msra.mxu0 0.0
      %3585 = vmatprep.subr.mxu0 0.0
      %3586 = vmatpush1.msra.mxu0 0.0
      %3587 = vmatprep.subr.mxu0 0.0
      %3588 = vmatpush1.msra.mxu0 0.0
      %3589 = vmatprep.subr.mxu0 0.0
      %3590 = vmatpush1.msra.mxu0 0.0
      %3591 = vmatprep.subr.mxu0 0.0
      %3592 = vmatpush1.msra.mxu0 0.0
      %3593 = vmatprep.subr.mxu0 0.0
      %3594 = vmatpush1.msra.mxu0 0.0
      %3595 = vmatprep.subr.mxu0 0.0
      %3596 = vmatpush1.msra.mxu0 0.0
      %3597 = vmatprep.subr.mxu0 0.0
      %3598 = vmatpush1.msra.mxu0 0.0
      %3599 = vmatprep.subr.mxu0 0.0
      %3600 = vmatpush1.msra.mxu0 0.0
      %3601 = vmatprep.subr.mxu0 0.0
      %3602 = vmatpush1.msra.mxu0 0.0
      %3603 = vmatprep.subr.mxu0 0.0
      %3604 = vmatpush1.msra.mxu0 0.0
      %3605 = vmatprep.mubr.f32.mxu0 0.0
      %3606 = vmatmul.mubr.f32.gmra.mrb[0].mxu0 %v3539
      %v3607 = vpop.f32.mrb[0].mxu0
      %v3608 = vadd.f32 0.0, %v3607
      %v3609 = vpop.f32.mrb[0].mxu0
      %3610 = vdwg.mxu0
      %3612 = vrot.lane.b32.xlu0 %v3274, 8
      %v3613 = vpop.permute.xlu0 %3612
      %3616 = vrot.lane.b32.xlu0 %v3441, 16
      %v3617 = vpop.permute.xlu0 %3616
      %3620 = vrot.lane.b32.xlu0 %v3608, 24
      %v3621 = vpop.permute.xlu0 %3620
      %v3623 = vsel %vm1018, %v3107, %v3613
      %v3624 = vsel %vm1697, %v3623, %v3617
      %v3625 = vsel %vm1699, %v3624, %v3621
      %3627 = vrot.lane.b32.xlu0 %v2942, 96
      %v3628 = vpop.permute.xlu0 %3627
      %v3630 = vsel %vm1018, %v2845, 0
      %v3632 = vsel %vm1018, %v3628, 0
      %3634 = vmatprep.subr.mxu0 0.0
      %3635 = vmatpush1.xpose.msra.mxu0 %v3632
      %3636 = vmatprep.subr.mxu0 0.0
      %3637 = vmatpush1.xpose.msra.mxu0 0.0
      %3638 = vmatprep.subr.mxu0 0.0
      %3639 = vmatpush1.xpose.msra.mxu0 0.0
      %3640 = vmatprep.subr.mxu0 0.0
      %3641 = vmatpush1.xpose.msra.mxu0 0.0
      %3642 = vmatprep.subr.mxu0 0.0
      %3643 = vmatpush1.xpose.msra.mxu0 0.0
      %3644 = vmatprep.subr.mxu0 0.0
      %3645 = vmatpush1.xpose.msra.mxu0 0.0
      %3646 = vmatprep.subr.mxu0 0.0
      %3647 = vmatpush1.xpose.msra.mxu0 0.0
      %3648 = vmatprep.subr.mxu0 0.0
      %3649 = vmatpush1.xpose.msra.mxu0 0.0
      %3650 = vmatprep.subr.mxu0 0.0
      %3651 = vmatpush1.xpose.msra.mxu0 0.0
      %3652 = vmatprep.subr.mxu0 0.0
      %3653 = vmatpush1.xpose.msra.mxu0 0.0
      %3654 = vmatprep.subr.mxu0 0.0
      %3655 = vmatpush1.xpose.msra.mxu0 0.0
      %3656 = vmatprep.subr.mxu0 0.0
      %3657 = vmatpush1.xpose.msra.mxu0 0.0
      %3658 = vmatprep.subr.mxu0 0.0
      %3659 = vmatpush1.xpose.msra.mxu0 0.0
      %3660 = vmatprep.subr.mxu0 0.0
      %3661 = vmatpush1.xpose.msra.mxu0 0.0
      %3662 = vmatprep.subr.mxu0 0.0
      %3663 = vmatpush1.xpose.msra.mxu0 0.0
      %3664 = vmatprep.subr.mxu0 0.0
      %3665 = vmatpush1.xpose.msra.mxu0 0.0
      %3666 = vmatprep.subr.mxu0 0.0
      %3667 = vmatpush1.xpose.msra.mxu0 0.0
      %3668 = vmatprep.subr.mxu0 0.0
      %3669 = vmatpush1.xpose.msra.mxu0 0.0
      %3670 = vmatprep.subr.mxu0 0.0
      %3671 = vmatpush1.xpose.msra.mxu0 0.0
      %3672 = vmatprep.subr.mxu0 0.0
      %3673 = vmatpush1.xpose.msra.mxu0 0.0
      %3674 = vmatprep.subr.mxu0 0.0
      %3675 = vmatpush1.xpose.msra.mxu0 0.0
      %3676 = vmatprep.subr.mxu0 0.0
      %3677 = vmatpush1.xpose.msra.mxu0 0.0
      %3678 = vmatprep.subr.mxu0 0.0
      %3679 = vmatpush1.xpose.msra.mxu0 0.0
      %3680 = vmatprep.subr.mxu0 0.0
      %3681 = vmatpush1.xpose.msra.mxu0 0.0
      %3682 = vmatprep.subr.mxu0 0.0
      %3683 = vmatpush1.xpose.msra.mxu0 0.0
      %3684 = vmatprep.subr.mxu0 0.0
      %3685 = vmatpush1.xpose.msra.mxu0 0.0
      %3686 = vmatprep.subr.mxu0 0.0
      %3687 = vmatpush1.xpose.msra.mxu0 0.0
      %3688 = vmatprep.subr.mxu0 0.0
      %3689 = vmatpush1.xpose.msra.mxu0 0.0
      %3690 = vmatprep.subr.mxu0 0.0
      %3691 = vmatpush1.xpose.msra.mxu0 0.0
      %3692 = vmatprep.subr.mxu0 0.0
      %3693 = vmatpush1.xpose.msra.mxu0 0.0
      %3694 = vmatprep.subr.mxu0 0.0
      %3695 = vmatpush1.xpose.msra.mxu0 0.0
      %3696 = vmatprep.subr.mxu0 0.0
      %3697 = vmatpush1.xpose.msra.mxu0 0.0
      %3698 = vmatprep.mubr.f32.mxu0 0.0
      %3699 = vmatmul.mubr.f32.gmra.mrb[0].mxu0 %v3630
      %v3700 = vpop.f32.mrb[0].mxu0
      %v3701 = vadd.f32 0.0, %v3700
      %v3702 = vpop.f32.mrb[0].mxu0
      %3703 = vdwg.mxu0
      %v3704 = vmul.f32 %v3701, 0.35355338
      %v3705 = vadd.f32 %v3704, %v734
      %v3706 = vsel %vm1018, %v3705, -inf
      %3707 = vmax.xlane.f32.xlu0 %v3706
      %v3708 = vpop.xlane.xlu0 %3707
      %v3709 = vsub.f32 %v3705, %v3708
      %v3710 = vmul.f32 %v3709, 1.442695
      %v3711 = vpow.pop %v3710
      %v3712 = vsel %vm1018, %v3711, 0.0
      %3713 = vadd.xlane.f32.xlu0 %v3712
      %v3714 = vpop.xlane.xlu0 %3713
      %v3715 = vrcp.pop %v3714
      %v3716 = vmul.f32 %v3711, %v3715
      %3717 = vrot.lane.b32.xlu0 %v2756, 64
      %v3718 = vpop.permute.xlu0 %3717
      %v3721 = vsel %vm1018, %v3716, 0
      %3723 = vmatprep.subr.mxu0 0.0
      %3724 = vmatpush1.msra.mxu0 %v3718
      %3725 = vmatprep.subr.mxu0 0.0
      %3726 = vmatpush1.msra.mxu0 0.0
      %3727 = vmatprep.subr.mxu0 0.0
      %3728 = vmatpush1.msra.mxu0 0.0
      %3729 = vmatprep.subr.mxu0 0.0
      %3730 = vmatpush1.msra.mxu0 0.0
      %3731 = vmatprep.subr.mxu0 0.0
      %3732 = vmatpush1.msra.mxu0 0.0
      %3733 = vmatprep.subr.mxu0 0.0
      %3734 = vmatpush1.msra.mxu0 0.0
      %3735 = vmatprep.subr.mxu0 0.0
      %3736 = vmatpush1.msra.mxu0 0.0
      %3737 = vmatprep.subr.mxu0 0.0
      %3738 = vmatpush1.msra.mxu0 0.0
      %3739 = vmatprep.subr.mxu0 0.0
      %3740 = vmatpush1.msra.mxu0 0.0
      %3741 = vmatprep.subr.mxu0 0.0
      %3742 = vmatpush1.msra.mxu0 0.0
      %3743 = vmatprep.subr.mxu0 0.0
      %3744 = vmatpush1.msra.mxu0 0.0
      %3745 = vmatprep.subr.mxu0 0.0
      %3746 = vmatpush1.msra.mxu0 0.0
      %3747 = vmatprep.subr.mxu0 0.0
      %3748 = vmatpush1.msra.mxu0 0.0
      %3749 = vmatprep.subr.mxu0 0.0
      %3750 = vmatpush1.msra.mxu0 0.0
      %3751 = vmatprep.subr.mxu0 0.0
      %3752 = vmatpush1.msra.mxu0 0.0
      %3753 = vmatprep.subr.mxu0 0.0
      %3754 = vmatpush1.msra.mxu0 0.0
      %3755 = vmatprep.subr.mxu0 0.0
      %3756 = vmatpush1.msra.mxu0 0.0
      %3757 = vmatprep.subr.mxu0 0.0
      %3758 = vmatpush1.msra.mxu0 0.0
      %3759 = vmatprep.subr.mxu0 0.0
      %3760 = vmatpush1.msra.mxu0 0.0
      %3761 = vmatprep.subr.mxu0 0.0
      %3762 = vmatpush1.msra.mxu0 0.0
      %3763 = vmatprep.subr.mxu0 0.0
      %3764 = vmatpush1.msra.mxu0 0.0
      %3765 = vmatprep.subr.mxu0 0.0
      %3766 = vmatpush1.msra.mxu0 0.0
      %3767 = vmatprep.subr.mxu0 0.0
      %3768 = vmatpush1.msra.mxu0 0.0
      %3769 = vmatprep.subr.mxu0 0.0
      %3770 = vmatpush1.msra.mxu0 0.0
      %3771 = vmatprep.subr.mxu0 0.0
      %3772 = vmatpush1.msra.mxu0 0.0
      %3773 = vmatprep.subr.mxu0 0.0
      %3774 = vmatpush1.msra.mxu0 0.0
      %3775 = vmatprep.subr.mxu0 0.0
      %3776 = vmatpush1.msra.mxu0 0.0
      %3777 = vmatprep.subr.mxu0 0.0
      %3778 = vmatpush1.msra.mxu0 0.0
      %3779 = vmatprep.subr.mxu0 0.0
      %3780 = vmatpush1.msra.mxu0 0.0
      %3781 = vmatprep.subr.mxu0 0.0
      %3782 = vmatpush1.msra.mxu0 0.0
      %3783 = vmatprep.subr.mxu0 0.0
      %3784 = vmatpush1.msra.mxu0 0.0
      %3785 = vmatprep.subr.mxu0 0.0
      %3786 = vmatpush1.msra.mxu0 0.0
      %3787 = vmatprep.mubr.f32.mxu0 0.0
      %3788 = vmatmul.mubr.f32.gmra.mrb[0].mxu0 %v3721
      %v3789 = vpop.f32.mrb[0].mxu0
      %v3790 = vadd.f32 0.0, %v3789
      %v3791 = vpop.f32.mrb[0].mxu0
      %3792 = vdwg.mxu0
      %3793 = vrot.lane.b32.xlu0 %v2845, 120
      %v3794 = vpop.permute.xlu0 %3793
      %3795 = vrot.lane.b32.xlu0 %v2942, 88
      %v3796 = vpop.permute.xlu0 %3795
      %v3797 = vsel %vm1018, %v3794, 0
      %v3799 = vsel %vm1018, %v3796, 0
      %3801 = vmatprep.subr.mxu0 0.0
      %3802 = vmatpush1.xpose.msra.mxu0 %v3799
      %3803 = vmatprep.subr.mxu0 0.0
      %3804 = vmatpush1.xpose.msra.mxu0 0.0
      %3805 = vmatprep.subr.mxu0 0.0
      %3806 = vmatpush1.xpose.msra.mxu0 0.0
      %3807 = vmatprep.subr.mxu0 0.0
      %3808 = vmatpush1.xpose.msra.mxu0 0.0
      %3809 = vmatprep.subr.mxu0 0.0
      %3810 = vmatpush1.xpose.msra.mxu0 0.0
      %3811 = vmatprep.subr.mxu0 0.0
      %3812 = vmatpush1.xpose.msra.mxu0 0.0
      %3813 = vmatprep.subr.mxu0 0.0
      %3814 = vmatpush1.xpose.msra.mxu0 0.0
      %3815 = vmatprep.subr.mxu0 0.0
      %3816 = vmatpush1.xpose.msra.mxu0 0.0
      %3817 = vmatprep.subr.mxu0 0.0
      %3818 = vmatpush1.xpose.msra.mxu0 0.0
      %3819 = vmatprep.subr.mxu0 0.0
      %3820 = vmatpush1.xpose.msra.mxu0 0.0
      %3821 = vmatprep.subr.mxu0 0.0
      %3822 = vmatpush1.xpose.msra.mxu0 0.0
      %3823 = vmatprep.subr.mxu0 0.0
      %3824 = vmatpush1.xpose.msra.mxu0 0.0
      %3825 = vmatprep.subr.mxu0 0.0
      %3826 = vmatpush1.xpose.msra.mxu0 0.0
      %3827 = vmatprep.subr.mxu0 0.0
      %3828 = vmatpush1.xpose.msra.mxu0 0.0
      %3829 = vmatprep.subr.mxu0 0.0
      %3830 = vmatpush1.xpose.msra.mxu0 0.0
      %3831 = vmatprep.subr.mxu0 0.0
      %3832 = vmatpush1.xpose.msra.mxu0 0.0
      %3833 = vmatprep.subr.mxu0 0.0
      %3834 = vmatpush1.xpose.msra.mxu0 0.0
      %3835 = vmatprep.subr.mxu0 0.0
      %3836 = vmatpush1.xpose.msra.mxu0 0.0
      %3837 = vmatprep.subr.mxu0 0.0
      %3838 = vmatpush1.xpose.msra.mxu0 0.0
      %3839 = vmatprep.subr.mxu0 0.0
      %3840 = vmatpush1.xpose.msra.mxu0 0.0
      %3841 = vmatprep.subr.mxu0 0.0
      %3842 = vmatpush1.xpose.msra.mxu0 0.0
      %3843 = vmatprep.subr.mxu0 0.0
      %3844 = vmatpush1.xpose.msra.mxu0 0.0
      %3845 = vmatprep.subr.mxu0 0.0
      %3846 = vmatpush1.xpose.msra.mxu0 0.0
      %3847 = vmatprep.subr.mxu0 0.0
      %3848 = vmatpush1.xpose.msra.mxu0 0.0
      %3849 = vmatprep.subr.mxu0 0.0
      %3850 = vmatpush1.xpose.msra.mxu0 0.0
      %3851 = vmatprep.subr.mxu0 0.0
      %3852 = vmatpush1.xpose.msra.mxu0 0.0
      %3853 = vmatprep.subr.mxu0 0.0
      %3854 = vmatpush1.xpose.msra.mxu0 0.0
      %3855 = vmatprep.subr.mxu0 0.0
      %3856 = vmatpush1.xpose.msra.mxu0 0.0
      %3857 = vmatprep.subr.mxu0 0.0
      %3858 = vmatpush1.xpose.msra.mxu0 0.0
      %3859 = vmatprep.subr.mxu0 0.0
      %3860 = vmatpush1.xpose.msra.mxu0 0.0
      %3861 = vmatprep.subr.mxu0 0.0
      %3862 = vmatpush1.xpose.msra.mxu0 0.0
      %3863 = vmatprep.subr.mxu0 0.0
      %3864 = vmatpush1.xpose.msra.mxu0 0.0
      %3865 = vmatprep.mubr.f32.mxu0 0.0
      %3866 = vmatmul.mubr.f32.gmra.mrb[0].mxu0 %v3797
      %v3867 = vpop.f32.mrb[0].mxu0
      %v3868 = vadd.f32 0.0, %v3867
      %v3869 = vpop.f32.mrb[0].mxu0
      %3870 = vdwg.mxu0
      %v3871 = vmul.f32 %v3868, 0.35355338
      %v3872 = vadd.f32 %v3871, %v734
      %v3873 = vsel %vm1018, %v3872, -inf
      %3874 = vmax.xlane.f32.xlu0 %v3873
      %v3875 = vpop.xlane.xlu0 %3874
      %v3876 = vsub.f32 %v3872, %v3875
      %v3877 = vmul.f32 %v3876, 1.442695
      %v3878 = vpow.pop %v3877
      %v3879 = vsel %vm1018, %v3878, 0.0
      %3880 = vadd.xlane.f32.xlu0 %v3879
      %v3881 = vpop.xlane.xlu0 %3880
      %v3882 = vrcp.pop %v3881
      %v3883 = vmul.f32 %v3878, %v3882
      %3884 = vrot.lane.b32.xlu0 %v2756, 56
      %v3885 = vpop.permute.xlu0 %3884
      %v3888 = vsel %vm1018, %v3883, 0
      %3890 = vmatprep.subr.mxu0 0.0
      %3891 = vmatpush1.msra.mxu0 %v3885
      %3892 = vmatprep.subr.mxu0 0.0
      %3893 = vmatpush1.msra.mxu0 0.0
      %3894 = vmatprep.subr.mxu0 0.0
      %3895 = vmatpush1.msra.mxu0 0.0
      %3896 = vmatprep.subr.mxu0 0.0
      %3897 = vmatpush1.msra.mxu0 0.0
      %3898 = vmatprep.subr.mxu0 0.0
      %3899 = vmatpush1.msra.mxu0 0.0
      %3900 = vmatprep.subr.mxu0 0.0
      %3901 = vmatpush1.msra.mxu0 0.0
      %3902 = vmatprep.subr.mxu0 0.0
      %3903 = vmatpush1.msra.mxu0 0.0
      %3904 = vmatprep.subr.mxu0 0.0
      %3905 = vmatpush1.msra.mxu0 0.0
      %3906 = vmatprep.subr.mxu0 0.0
      %3907 = vmatpush1.msra.mxu0 0.0
      %3908 = vmatprep.subr.mxu0 0.0
      %3909 = vmatpush1.msra.mxu0 0.0
      %3910 = vmatprep.subr.mxu0 0.0
      %3911 = vmatpush1.msra.mxu0 0.0
      %3912 = vmatprep.subr.mxu0 0.0
      %3913 = vmatpush1.msra.mxu0 0.0
      %3914 = vmatprep.subr.mxu0 0.0
      %3915 = vmatpush1.msra.mxu0 0.0
      %3916 = vmatprep.subr.mxu0 0.0
      %3917 = vmatpush1.msra.mxu0 0.0
      %3918 = vmatprep.subr.mxu0 0.0
      %3919 = vmatpush1.msra.mxu0 0.0
      %3920 = vmatprep.subr.mxu0 0.0
      %3921 = vmatpush1.msra.mxu0 0.0
      %3922 = vmatprep.subr.mxu0 0.0
      %3923 = vmatpush1.msra.mxu0 0.0
      %3924 = vmatprep.subr.mxu0 0.0
      %3925 = vmatpush1.msra.mxu0 0.0
      %3926 = vmatprep.subr.mxu0 0.0
      %3927 = vmatpush1.msra.mxu0 0.0
      %3928 = vmatprep.subr.mxu0 0.0
      %3929 = vmatpush1.msra.mxu0 0.0
      %3930 = vmatprep.subr.mxu0 0.0
      %3931 = vmatpush1.msra.mxu0 0.0
      %3932 = vmatprep.subr.mxu0 0.0
      %3933 = vmatpush1.msra.mxu0 0.0
      %3934 = vmatprep.subr.mxu0 0.0
      %3935 = vmatpush1.msra.mxu0 0.0
      %3936 = vmatprep.subr.mxu0 0.0
      %3937 = vmatpush1.msra.mxu0 0.0
      %3938 = vmatprep.subr.mxu0 0.0
      %3939 = vmatpush1.msra.mxu0 0.0
      %3940 = vmatprep.subr.mxu0 0.0
      %3941 = vmatpush1.msra.mxu0 0.0
      %3942 = vmatprep.subr.mxu0 0.0
      %3943 = vmatpush1.msra.mxu0 0.0
      %3944 = vmatprep.subr.mxu0 0.0
      %3945 = vmatpush1.msra.mxu0 0.0
      %3946 = vmatprep.subr.mxu0 0.0
      %3947 = vmatpush1.msra.mxu0 0.0
      %3948 = vmatprep.subr.mxu0 0.0
      %3949 = vmatpush1.msra.mxu0 0.0
      %3950 = vmatprep.subr.mxu0 0.0
      %3951 = vmatpush1.msra.mxu0 0.0
      %3952 = vmatprep.subr.mxu0 0.0
      %3953 = vmatpush1.msra.mxu0 0.0
      %3954 = vmatprep.mubr.f32.mxu0 0.0
      %3955 = vmatmul.mubr.f32.gmra.mrb[0].mxu0 %v3888
      %v3956 = vpop.f32.mrb[0].mxu0
      %v3957 = vadd.f32 0.0, %v3956
      %v3958 = vpop.f32.mrb[0].mxu0
      %3959 = vdwg.mxu0
      %3960 = vrot.lane.b32.xlu0 %v2845, 112
      %v3961 = vpop.permute.xlu0 %3960
      %3962 = vrot.lane.b32.xlu0 %v2942, 80
      %v3963 = vpop.permute.xlu0 %3962
      %v3964 = vsel %vm1018, %v3961, 0
      %v3966 = vsel %vm1018, %v3963, 0
      %3968 = vmatprep.subr.mxu0 0.0
      %3969 = vmatpush1.xpose.msra.mxu0 %v3966
      %3970 = vmatprep.subr.mxu0 0.0
      %3971 = vmatpush1.xpose.msra.mxu0 0.0
      %3972 = vmatprep.subr.mxu0 0.0
      %3973 = vmatpush1.xpose.msra.mxu0 0.0
      %3974 = vmatprep.subr.mxu0 0.0
      %3975 = vmatpush1.xpose.msra.mxu0 0.0
      %3976 = vmatprep.subr.mxu0 0.0
      %3977 = vmatpush1.xpose.msra.mxu0 0.0
      %3978 = vmatprep.subr.mxu0 0.0
      %3979 = vmatpush1.xpose.msra.mxu0 0.0
      %3980 = vmatprep.subr.mxu0 0.0
      %3981 = vmatpush1.xpose.msra.mxu0 0.0
      %3982 = vmatprep.subr.mxu0 0.0
      %3983 = vmatpush1.xpose.msra.mxu0 0.0
      %3984 = vmatprep.subr.mxu0 0.0
      %3985 = vmatpush1.xpose.msra.mxu0 0.0
      %3986 = vmatprep.subr.mxu0 0.0
      %3987 = vmatpush1.xpose.msra.mxu0 0.0
      %3988 = vmatprep.subr.mxu0 0.0
      %3989 = vmatpush1.xpose.msra.mxu0 0.0
      %3990 = vmatprep.subr.mxu0 0.0
      %3991 = vmatpush1.xpose.msra.mxu0 0.0
      %3992 = vmatprep.subr.mxu0 0.0
      %3993 = vmatpush1.xpose.msra.mxu0 0.0
      %3994 = vmatprep.subr.mxu0 0.0
      %3995 = vmatpush1.xpose.msra.mxu0 0.0
      %3996 = vmatprep.subr.mxu0 0.0
      %3997 = vmatpush1.xpose.msra.mxu0 0.0
      %3998 = vmatprep.subr.mxu0 0.0
      %3999 = vmatpush1.xpose.msra.mxu0 0.0
      %4000 = vmatprep.subr.mxu0 0.0
      %4001 = vmatpush1.xpose.msra.mxu0 0.0
      %4002 = vmatprep.subr.mxu0 0.0
      %4003 = vmatpush1.xpose.msra.mxu0 0.0
      %4004 = vmatprep.subr.mxu0 0.0
      %4005 = vmatpush1.xpose.msra.mxu0 0.0
      %4006 = vmatprep.subr.mxu0 0.0
      %4007 = vmatpush1.xpose.msra.mxu0 0.0
      %4008 = vmatprep.subr.mxu0 0.0
      %4009 = vmatpush1.xpose.msra.mxu0 0.0
      %4010 = vmatprep.subr.mxu0 0.0
      %4011 = vmatpush1.xpose.msra.mxu0 0.0
      %4012 = vmatprep.subr.mxu0 0.0
      %4013 = vmatpush1.xpose.msra.mxu0 0.0
      %4014 = vmatprep.subr.mxu0 0.0
      %4015 = vmatpush1.xpose.msra.mxu0 0.0
      %4016 = vmatprep.subr.mxu0 0.0
      %4017 = vmatpush1.xpose.msra.mxu0 0.0
      %4018 = vmatprep.subr.mxu0 0.0
      %4019 = vmatpush1.xpose.msra.mxu0 0.0
      %4020 = vmatprep.subr.mxu0 0.0
      %4021 = vmatpush1.xpose.msra.mxu0 0.0
      %4022 = vmatprep.subr.mxu0 0.0
      %4023 = vmatpush1.xpose.msra.mxu0 0.0
      %4024 = vmatprep.subr.mxu0 0.0
      %4025 = vmatpush1.xpose.msra.mxu0 0.0
      %4026 = vmatprep.subr.mxu0 0.0
      %4027 = vmatpush1.xpose.msra.mxu0 0.0
      %4028 = vmatprep.subr.mxu0 0.0
      %4029 = vmatpush1.xpose.msra.mxu0 0.0
      %4030 = vmatprep.subr.mxu0 0.0
      %4031 = vmatpush1.xpose.msra.mxu0 0.0
      %4032 = vmatprep.mubr.f32.mxu0 0.0
      %4033 = vmatmul.mubr.f32.gmra.mrb[0].mxu0 %v3964
      %v4034 = vpop.f32.mrb[0].mxu0
      %v4035 = vadd.f32 0.0, %v4034
      %v4036 = vpop.f32.mrb[0].mxu0
      %4037 = vdwg.mxu0
      %v4038 = vmul.f32 %v4035, 0.35355338
      %v4039 = vadd.f32 %v4038, %v734
      %v4040 = vsel %vm1018, %v4039, -inf
      %4041 = vmax.xlane.f32.xlu0 %v4040
      %v4042 = vpop.xlane.xlu0 %4041
      %v4043 = vsub.f32 %v4039, %v4042
      %v4044 = vmul.f32 %v4043, 1.442695
      %v4045 = vpow.pop %v4044
      %v4046 = vsel %vm1018, %v4045, 0.0
      %4047 = vadd.xlane.f32.xlu0 %v4046
      %v4048 = vpop.xlane.xlu0 %4047
      %v4049 = vrcp.pop %v4048
      %v4050 = vmul.f32 %v4045, %v4049
      %4051 = vrot.lane.b32.xlu0 %v2756, 48
      %v4052 = vpop.permute.xlu0 %4051
      %v4055 = vsel %vm1018, %v4050, 0
      %4057 = vmatprep.subr.mxu0 0.0
      %4058 = vmatpush1.msra.mxu0 %v4052
      %4059 = vmatprep.subr.mxu0 0.0
      %4060 = vmatpush1.msra.mxu0 0.0
      %4061 = vmatprep.subr.mxu0 0.0
      %4062 = vmatpush1.msra.mxu0 0.0
      %4063 = vmatprep.subr.mxu0 0.0
      %4064 = vmatpush1.msra.mxu0 0.0
      %4065 = vmatprep.subr.mxu0 0.0
      %4066 = vmatpush1.msra.mxu0 0.0
      %4067 = vmatprep.subr.mxu0 0.0
      %4068 = vmatpush1.msra.mxu0 0.0
      %4069 = vmatprep.subr.mxu0 0.0
      %4070 = vmatpush1.msra.mxu0 0.0
      %4071 = vmatprep.subr.mxu0 0.0
      %4072 = vmatpush1.msra.mxu0 0.0
      %4073 = vmatprep.subr.mxu0 0.0
      %4074 = vmatpush1.msra.mxu0 0.0
      %4075 = vmatprep.subr.mxu0 0.0
      %4076 = vmatpush1.msra.mxu0 0.0
      %4077 = vmatprep.subr.mxu0 0.0
      %4078 = vmatpush1.msra.mxu0 0.0
      %4079 = vmatprep.subr.mxu0 0.0
      %4080 = vmatpush1.msra.mxu0 0.0
      %4081 = vmatprep.subr.mxu0 0.0
      %4082 = vmatpush1.msra.mxu0 0.0
      %4083 = vmatprep.subr.mxu0 0.0
      %4084 = vmatpush1.msra.mxu0 0.0
      %4085 = vmatprep.subr.mxu0 0.0
      %4086 = vmatpush1.msra.mxu0 0.0
      %4087 = vmatprep.subr.mxu0 0.0
      %4088 = vmatpush1.msra.mxu0 0.0
      %4089 = vmatprep.subr.mxu0 0.0
      %4090 = vmatpush1.msra.mxu0 0.0
      %4091 = vmatprep.subr.mxu0 0.0
      %4092 = vmatpush1.msra.mxu0 0.0
      %4093 = vmatprep.subr.mxu0 0.0
      %4094 = vmatpush1.msra.mxu0 0.0
      %4095 = vmatprep.subr.mxu0 0.0
      %4096 = vmatpush1.msra.mxu0 0.0
      %4097 = vmatprep.subr.mxu0 0.0
      %4098 = vmatpush1.msra.mxu0 0.0
      %4099 = vmatprep.subr.mxu0 0.0
      %4100 = vmatpush1.msra.mxu0 0.0
      %4101 = vmatprep.subr.mxu0 0.0
      %4102 = vmatpush1.msra.mxu0 0.0
      %4103 = vmatprep.subr.mxu0 0.0
      %4104 = vmatpush1.msra.mxu0 0.0
      %4105 = vmatprep.subr.mxu0 0.0
      %4106 = vmatpush1.msra.mxu0 0.0
      %4107 = vmatprep.subr.mxu0 0.0
      %4108 = vmatpush1.msra.mxu0 0.0
      %4109 = vmatprep.subr.mxu0 0.0
      %4110 = vmatpush1.msra.mxu0 0.0
      %4111 = vmatprep.subr.mxu0 0.0
      %4112 = vmatpush1.msra.mxu0 0.0
      %4113 = vmatprep.subr.mxu0 0.0
      %4114 = vmatpush1.msra.mxu0 0.0
      %4115 = vmatprep.subr.mxu0 0.0
      %4116 = vmatpush1.msra.mxu0 0.0
      %4117 = vmatprep.subr.mxu0 0.0
      %4118 = vmatpush1.msra.mxu0 0.0
      %4119 = vmatprep.subr.mxu0 0.0
      %4120 = vmatpush1.msra.mxu0 0.0
      %4121 = vmatprep.mubr.f32.mxu0 0.0
      %4122 = vmatmul.mubr.f32.gmra.mrb[0].mxu0 %v4055
      %v4123 = vpop.f32.mrb[0].mxu0
      %v4124 = vadd.f32 0.0, %v4123
      %v4125 = vpop.f32.mrb[0].mxu0
      %4126 = vdwg.mxu0
      %4127 = vrot.lane.b32.xlu0 %v2845, 104
      %v4128 = vpop.permute.xlu0 %4127
      %4129 = vrot.lane.b32.xlu0 %v2942, 72
      %v4130 = vpop.permute.xlu0 %4129
      %v4131 = vsel %vm1018, %v4128, 0
      %v4133 = vsel %vm1018, %v4130, 0
      %4135 = vmatprep.subr.mxu0 0.0
      %4136 = vmatpush1.xpose.msra.mxu0 %v4133
      %4137 = vmatprep.subr.mxu0 0.0
      %4138 = vmatpush1.xpose.msra.mxu0 0.0
      %4139 = vmatprep.subr.mxu0 0.0
      %4140 = vmatpush1.xpose.msra.mxu0 0.0
      %4141 = vmatprep.subr.mxu0 0.0
      %4142 = vmatpush1.xpose.msra.mxu0 0.0
      %4143 = vmatprep.subr.mxu0 0.0
      %4144 = vmatpush1.xpose.msra.mxu0 0.0
      %4145 = vmatprep.subr.mxu0 0.0
      %4146 = vmatpush1.xpose.msra.mxu0 0.0
      %4147 = vmatprep.subr.mxu0 0.0
      %4148 = vmatpush1.xpose.msra.mxu0 0.0
      %4149 = vmatprep.subr.mxu0 0.0
      %4150 = vmatpush1.xpose.msra.mxu0 0.0
      %4151 = vmatprep.subr.mxu0 0.0
      %4152 = vmatpush1.xpose.msra.mxu0 0.0
      %4153 = vmatprep.subr.mxu0 0.0
      %4154 = vmatpush1.xpose.msra.mxu0 0.0
      %4155 = vmatprep.subr.mxu0 0.0
      %4156 = vmatpush1.xpose.msra.mxu0 0.0
      %4157 = vmatprep.subr.mxu0 0.0
      %4158 = vmatpush1.xpose.msra.mxu0 0.0
      %4159 = vmatprep.subr.mxu0 0.0
      %4160 = vmatpush1.xpose.msra.mxu0 0.0
      %4161 = vmatprep.subr.mxu0 0.0
      %4162 = vmatpush1.xpose.msra.mxu0 0.0
      %4163 = vmatprep.subr.mxu0 0.0
      %4164 = vmatpush1.xpose.msra.mxu0 0.0
      %4165 = vmatprep.subr.mxu0 0.0
      %4166 = vmatpush1.xpose.msra.mxu0 0.0
      %4167 = vmatprep.subr.mxu0 0.0
      %4168 = vmatpush1.xpose.msra.mxu0 0.0
      %4169 = vmatprep.subr.mxu0 0.0
      %4170 = vmatpush1.xpose.msra.mxu0 0.0
      %4171 = vmatprep.subr.mxu0 0.0
      %4172 = vmatpush1.xpose.msra.mxu0 0.0
      %4173 = vmatprep.subr.mxu0 0.0
      %4174 = vmatpush1.xpose.msra.mxu0 0.0
      %4175 = vmatprep.subr.mxu0 0.0
      %4176 = vmatpush1.xpose.msra.mxu0 0.0
      %4177 = vmatprep.subr.mxu0 0.0
      %4178 = vmatpush1.xpose.msra.mxu0 0.0
      %4179 = vmatprep.subr.mxu0 0.0
      %4180 = vmatpush1.xpose.msra.mxu0 0.0
      %4181 = vmatprep.subr.mxu0 0.0
      %4182 = vmatpush1.xpose.msra.mxu0 0.0
      %4183 = vmatprep.subr.mxu0 0.0
      %4184 = vmatpush1.xpose.msra.mxu0 0.0
      %4185 = vmatprep.subr.mxu0 0.0
      %4186 = vmatpush1.xpose.msra.mxu0 0.0
      %4187 = vmatprep.subr.mxu0 0.0
      %4188 = vmatpush1.xpose.msra.mxu0 0.0
      %4189 = vmatprep.subr.mxu0 0.0
      %4190 = vmatpush1.xpose.msra.mxu0 0.0
      %4191 = vmatprep.subr.mxu0 0.0
      %4192 = vmatpush1.xpose.msra.mxu0 0.0
      %4193 = vmatprep.subr.mxu0 0.0
      %4194 = vmatpush1.xpose.msra.mxu0 0.0
      %4195 = vmatprep.subr.mxu0 0.0
      %4196 = vmatpush1.xpose.msra.mxu0 0.0
      %4197 = vmatprep.subr.mxu0 0.0
      %4198 = vmatpush1.xpose.msra.mxu0 0.0
      %4199 = vmatprep.mubr.f32.mxu0 0.0
      %4200 = vmatmul.mubr.f32.gmra.mrb[0].mxu0 %v4131
      %v4201 = vpop.f32.mrb[0].mxu0
      %v4202 = vadd.f32 0.0, %v4201
      %v4203 = vpop.f32.mrb[0].mxu0
      %4204 = vdwg.mxu0
      %v4205 = vmul.f32 %v4202, 0.35355338
      %v4206 = vadd.f32 %v4205, %v734
      %v4207 = vsel %vm1018, %v4206, -inf
      %4208 = vmax.xlane.f32.xlu0 %v4207
      %v4209 = vpop.xlane.xlu0 %4208
      %v4210 = vsub.f32 %v4206, %v4209
      %v4211 = vmul.f32 %v4210, 1.442695
      %v4212 = vpow.pop %v4211
      %v4213 = vsel %vm1018, %v4212, 0.0
      %4214 = vadd.xlane.f32.xlu0 %v4213
      %v4215 = vpop.xlane.xlu0 %4214
      %v4216 = vrcp.pop %v4215
      %v4217 = vmul.f32 %v4212, %v4216
      %4218 = vrot.lane.b32.xlu0 %v2756, 40
      %v4219 = vpop.permute.xlu0 %4218
      %v4222 = vsel %vm1018, %v4217, 0
      %4224 = vmatprep.subr.mxu0 0.0
      %4225 = vmatpush1.msra.mxu0 %v4219
      %4226 = vmatprep.subr.mxu0 0.0
      %4227 = vmatpush1.msra.mxu0 0.0
      %4228 = vmatprep.subr.mxu0 0.0
      %4229 = vmatpush1.msra.mxu0 0.0
      %4230 = vmatprep.subr.mxu0 0.0
      %4231 = vmatpush1.msra.mxu0 0.0
      %4232 = vmatprep.subr.mxu0 0.0
      %4233 = vmatpush1.msra.mxu0 0.0
      %4234 = vmatprep.subr.mxu0 0.0
      %4235 = vmatpush1.msra.mxu0 0.0
      %4236 = vmatprep.subr.mxu0 0.0
      %4237 = vmatpush1.msra.mxu0 0.0
      %4238 = vmatprep.subr.mxu0 0.0
      %4239 = vmatpush1.msra.mxu0 0.0
      %4240 = vmatprep.subr.mxu0 0.0
      %4241 = vmatpush1.msra.mxu0 0.0
      %4242 = vmatprep.subr.mxu0 0.0
      %4243 = vmatpush1.msra.mxu0 0.0
      %4244 = vmatprep.subr.mxu0 0.0
      %4245 = vmatpush1.msra.mxu0 0.0
      %4246 = vmatprep.subr.mxu0 0.0
      %4247 = vmatpush1.msra.mxu0 0.0
      %4248 = vmatprep.subr.mxu0 0.0
      %4249 = vmatpush1.msra.mxu0 0.0
      %4250 = vmatprep.subr.mxu0 0.0
      %4251 = vmatpush1.msra.mxu0 0.0
      %4252 = vmatprep.subr.mxu0 0.0
      %4253 = vmatpush1.msra.mxu0 0.0
      %4254 = vmatprep.subr.mxu0 0.0
      %4255 = vmatpush1.msra.mxu0 0.0
      %4256 = vmatprep.subr.mxu0 0.0
      %4257 = vmatpush1.msra.mxu0 0.0
      %4258 = vmatprep.subr.mxu0 0.0
      %4259 = vmatpush1.msra.mxu0 0.0
      %4260 = vmatprep.subr.mxu0 0.0
      %4261 = vmatpush1.msra.mxu0 0.0
      %4262 = vmatprep.subr.mxu0 0.0
      %4263 = vmatpush1.msra.mxu0 0.0
      %4264 = vmatprep.subr.mxu0 0.0
      %4265 = vmatpush1.msra.mxu0 0.0
      %4266 = vmatprep.subr.mxu0 0.0
      %4267 = vmatpush1.msra.mxu0 0.0
      %4268 = vmatprep.subr.mxu0 0.0
      %4269 = vmatpush1.msra.mxu0 0.0
      %4270 = vmatprep.subr.mxu0 0.0
      %4271 = vmatpush1.msra.mxu0 0.0
      %4272 = vmatprep.subr.mxu0 0.0
      %4273 = vmatpush1.msra.mxu0 0.0
      %4274 = vmatprep.subr.mxu0 0.0
      %4275 = vmatpush1.msra.mxu0 0.0
      %4276 = vmatprep.subr.mxu0 0.0
      %4277 = vmatpush1.msra.mxu0 0.0
      %4278 = vmatprep.subr.mxu0 0.0
      %4279 = vmatpush1.msra.mxu0 0.0
      %4280 = vmatprep.subr.mxu0 0.0
      %4281 = vmatpush1.msra.mxu0 0.0
      %4282 = vmatprep.subr.mxu0 0.0
      %4283 = vmatpush1.msra.mxu0 0.0
      %4284 = vmatprep.subr.mxu0 0.0
      %4285 = vmatpush1.msra.mxu0 0.0
      %4286 = vmatprep.subr.mxu0 0.0
      %4287 = vmatpush1.msra.mxu0 0.0
      %4288 = vmatprep.mubr.f32.mxu0 0.0
      %4289 = vmatmul.mubr.f32.gmra.mrb[0].mxu0 %v4222
      %v4290 = vpop.f32.mrb[0].mxu0
      %v4291 = vadd.f32 0.0, %v4290
      %v4292 = vpop.f32.mrb[0].mxu0
      %4293 = vdwg.mxu0
      %4295 = vrot.lane.b32.xlu0 %v3957, 8
      %v4296 = vpop.permute.xlu0 %4295
      %4299 = vrot.lane.b32.xlu0 %v4124, 16
      %v4300 = vpop.permute.xlu0 %4299
      %4303 = vrot.lane.b32.xlu0 %v4291, 24
      %v4304 = vpop.permute.xlu0 %4303
      %v4306 = vsel %vm1018, %v3790, %v4296
      %v4307 = vsel %vm1697, %v4306, %v4300
      %v4308 = vsel %vm1699, %v4307, %v4304
      %v4309 = vpack.c.bf16 %v4308, %v3625
      %s4310 = scalar_lea.vmem %s616, 16
      %v4311 = vld [vmem:[%s4310] sm:$0xf]
      %v4312 = vld [vmem:[%s4310 + $0x4] sm:$0xf]
      %v4313 = vld [vmem:[%s4310 + $0x8] sm:$0xf]
      %v4314 = vld [vmem:[%s4310 + $0xc] sm:$0xf]
      %v4319 = vunpack.c.l.b16 %v4311
      %v4320 = vunpack.c.l.b16 %v4312
      %v4321 = vunpack.c.l.b16 %v4313
      %v4322 = vunpack.c.l.b16 %v4314
      %v4323 = vpack.c.b16 %v4320, %v4319
      %v4324 = vpack.c.b16 %v4322, %v4321
      %v4328 = vsel %vm738, %v4309, 0
      %4330 = vmatprep.subr.bf16.mxu0 0
      %4331 = vmatpush1.bf16.msra.mxu0 %v4323
      %4332 = vmatprep.subr.bf16.mxu0 0
      %4333 = vmatpush1.bf16.msra.mxu0 %v4324
      %4334 = vmatprep.subr.bf16.mxu0 0
      %4335 = vmatpush1.bf16.msra.mxu0 0
      %4336 = vmatprep.subr.bf16.mxu0 0
      %4337 = vmatpush1.bf16.msra.mxu0 0
      %4338 = vmatprep.subr.bf16.mxu0 0
      %4339 = vmatpush1.bf16.msra.mxu0 0
      %4340 = vmatprep.subr.bf16.mxu0 0
      %4341 = vmatpush1.bf16.msra.mxu0 0
      %4342 = vmatprep.subr.bf16.mxu0 0
      %4343 = vmatpush1.bf16.msra.mxu0 0
      %4344 = vmatprep.subr.bf16.mxu0 0
      %4345 = vmatpush1.bf16.msra.mxu0 0
      %4346 = vmatprep.subr.bf16.mxu0 0
      %4347 = vmatpush1.bf16.msra.mxu0 0
      %4348 = vmatprep.subr.bf16.mxu0 0
      %4349 = vmatpush1.bf16.msra.mxu0 0
      %4350 = vmatprep.subr.bf16.mxu0 0
      %4351 = vmatpush1.bf16.msra.mxu0 0
      %4352 = vmatprep.subr.bf16.mxu0 0
      %4353 = vmatpush1.bf16.msra.mxu0 0
      %4354 = vmatprep.subr.bf16.mxu0 0
      %4355 = vmatpush1.bf16.msra.mxu0 0
      %4356 = vmatprep.subr.bf16.mxu0 0
      %4357 = vmatpush1.bf16.msra.mxu0 0
      %4358 = vmatprep.subr.bf16.mxu0 0
      %4359 = vmatpush1.bf16.msra.mxu0 0
      %4360 = vmatprep.subr.bf16.mxu0 0
      %4361 = vmatpush1.bf16.msra.mxu0 0
      %4362 = vmatprep.mubr.bf16.mxu0 0
      %4363 = vmatmul.mubr.bf16.gmra.mrb[0].mxu0 %v4328
      %v4364 = vpop.f32.mrb[0].mxu0
      %v4365 = vadd.f32 0.0, %v4364
      %v4366 = vpop.f32.mrb[0].mxu0
      %v4367 = vpop.f32.mrb[0].mxu0
      %v4368 = vadd.f32 0.0, %v4367
      %v4369 = vpop.f32.mrb[0].mxu0
      %4370 = vdwg.mxu0
      %v4371 = vadd.f32 %v2669, %v4365
      %v4372 = vadd.f32 %v2670, %v4368
      %s4373 = scalar_lea.vmem %s620, 1
      %v4374 = vld [vmem:[%s4373] sm:$0x1]
      %v4375 = vmul.f32 %v4371, %v4371
      %v4376 = vmul.f32 %v4372, %v4372
      %v4377 = vsel %vm738, %v4375, 0.0
      %4378 = vadd.xlane.f32.xlu0 %v4377
      %v4379 = vpop.xlane.xlu0 %4378
      %v4380 = vsel %vm738, %v4376, 0.0
      %4381 = vadd.xlane.f32.xlu0 %v4380
      %v4382 = vpop.xlane.xlu0 %4381
      %v4383 = vmul.f32 %v4379, %v745
      %v4384 = vmul.f32 %v4382, %v745
      %v4385 = vadd.f32 %v4383, 1e-05
      %v4386 = vadd.f32 %v4384, 1e-05
      %v4387 = vrsqrt.pop %v4385
      %v4388 = vrsqrt.pop %v4386
      %v4389 = vmul.f32 %v4371, %v4387
      %v4390 = vmul.f32 %v4372, %v4388
      %v4392 = vlaneseq
      %v4393 = vshrl.u32 %v4392, 7
      %v4394 = vsub.s32 0, %v4393
      %v4395 = vrot.slane %v4374, %v4394
      %v4397 = vmul.f32 %v4389, %v4395
      %v4398 = vmul.f32 %v4390, %v4395
      %v4399 = vpack.c.bf16 %v4398, %v4397
      %s4400 = scalar_lea.vmem %s625, 32
      %v4401 = vld [vmem:[%s4400] sm:$0xff]
      %v4402 = vld [vmem:[%s4400 + $0x8] sm:$0xff]
      %v4403 = vld [vmem:[%s4400 + $0x10] sm:$0xff]
      %v4404 = vld [vmem:[%s4400 + $0x18] sm:$0xff]
      %v4409 = vunpack.c.l.b16 %v4401
      %v4410 = vunpack.c.h.b16 %v4401
      %v4411 = vunpack.c.l.b16 %v4402
      %v4412 = vunpack.c.h.b16 %v4402
      %v4413 = vunpack.c.l.b16 %v4403
      %v4414 = vunpack.c.h.b16 %v4403
      %v4415 = vunpack.c.l.b16 %v4404
      %v4416 = vunpack.c.h.b16 %v4404
      %v4417 = vpack.c.b16 %v4411, %v4409
      %v4418 = vpack.c.b16 %v4412, %v4410
      %v4419 = vpack.c.b16 %v4415, %v4413
      %v4420 = vpack.c.b16 %v4416, %v4414
      %v4426 = vsel %vm738, %v4399, 0
      %4428 = vmatprep.subr.bf16.mxu0 %v4418
      %4429 = vmatpush1.bf16.msra.mxu0 %v4417
      %4430 = vmatprep.subr.bf16.mxu0 %v4420
      %4431 = vmatpush1.bf16.msra.mxu0 %v4419
      %4432 = vmatprep.subr.bf16.mxu0 0
      %4433 = vmatpush1.bf16.msra.mxu0 0
      %4434 = vmatprep.subr.bf16.mxu0 0
      %4435 = vmatpush1.bf16.msra.mxu0 0
      %4436 = vmatprep.subr.bf16.mxu0 0
      %4437 = vmatpush1.bf16.msra.mxu0 0
      %4438 = vmatprep.subr.bf16.mxu0 0
      %4439 = vmatpush1.bf16.msra.mxu0 0
      %4440 = vmatprep.subr.bf16.mxu0 0
      %4441 = vmatpush1.bf16.msra.mxu0 0
      %4442 = vmatprep.subr.bf16.mxu0 0
      %4443 = vmatpush1.bf16.msra.mxu0 0
      %4444 = vmatprep.subr.bf16.mxu0 0
      %4445 = vmatpush1.bf16.msra.mxu0 0
      %4446 = vmatprep.subr.bf16.mxu0 0
      %4447 = vmatpush1.bf16.msra.mxu0 0
      %4448 = vmatprep.subr.bf16.mxu0 0
      %4449 = vmatpush1.bf16.msra.mxu0 0
      %4450 = vmatprep.subr.bf16.mxu0 0
      %4451 = vmatpush1.bf16.msra.mxu0 0
      %4452 = vmatprep.subr.bf16.mxu0 0
      %4453 = vmatpush1.bf16.msra.mxu0 0
      %4454 = vmatprep.subr.bf16.mxu0 0
      %4455 = vmatpush1.bf16.msra.mxu0 0
      %4456 = vmatprep.subr.bf16.mxu0 0
      %4457 = vmatpush1.bf16.msra.mxu0 0
      %4458 = vmatprep.subr.bf16.mxu0 0
      %4459 = vmatpush1.bf16.msra.mxu0 0
      %4460 = vmatprep.mubr.bf16.mxu0 0
      %4461 = vmatmul.mubr.bf16.gmra.mrb[0].mxu0 %v4426
      %v4462 = vpop.f32.mrb[0].mxu0
      %v4463 = vadd.f32 0.0, %v4462
      %v4464 = vpop.f32.mrb[0].mxu0
      %v4465 = vadd.f32 0.0, %v4464
      %v4466 = vpop.f32.mrb[0].mxu0
      %v4467 = vadd.f32 0.0, %v4466
      %v4468 = vpop.f32.mrb[0].mxu0
      %v4469 = vadd.f32 0.0, %v4468
      %4470 = vdwg.mxu0
      %v4471 = vxor.u32 %v4463, 2147483648
      %v4472 = vxor.u32 %v4467, 2147483648
      %v4473 = vmul.f32 %v4471, 1.442695
      %v4474 = vpow.pop %v4473
      %v4475 = vmul.f32 %v4472, 1.442695
      %v4476 = vpow.pop %v4475
      %v4477 = vadd.f32 %v4474, 1.0
      %v4478 = vadd.f32 %v4476, 1.0
      %v4479 = vrcp.pop %v4477
      %v4480 = vmul.f32 1.0, %v4479
      %v4481 = vrcp.pop %v4478
      %v4482 = vmul.f32 1.0, %v4481
      %v4483 = vmul.f32 %v4463, %v4480
      %v4484 = vmul.f32 %v4467, %v4482
      %4489 = vrot.lane.b32.xlu0 %v4463, 32
      %v4490 = vpop.permute.xlu0 %4489
      %4491 = vrot.lane.b32.xlu0 %v4465, 32
      %v4492 = vpop.permute.xlu0 %4491
      %4493 = vrot.lane.b32.xlu0 %v4467, 32
      %v4494 = vpop.permute.xlu0 %4493
      %4495 = vrot.lane.b32.xlu0 %v4469, 32
      %v4496 = vpop.permute.xlu0 %4495
      %v4497 = vsel %vm738, %v4490, %v4492
      %v4498 = vsel %vm738, %v4494, %v4496
      %v4501 = vmul.f32 %v4483, %v4497
      %v4502 = vmul.f32 %v4484, %v4498
      %v4503 = vpack.c.bf16 %v4502, %v4501
      %s4504 = scalar_lea.vmem %s630, 48
      %v4505 = vld [vmem:[%s4504] sm:$0xf]
      %v4506 = vld [vmem:[%s4504 + $0x4] sm:$0xf]
      %v4507 = vld [vmem:[%s4504 + $0x8] sm:$0xf]
      %v4508 = vld [vmem:[%s4504 + $0xc] sm:$0xf]
      %v4509 = vld [vmem:[%s4504 + $0x10] sm:$0xf]
      %v4510 = vld [vmem:[%s4504 + $0x14] sm:$0xf]
      %v4511 = vld [vmem:[%s4504 + $0x18] sm:$0xf]
      %v4512 = vld [vmem:[%s4504 + $0x1c] sm:$0xf]
      %v4513 = vld [vmem:[%s4504 + $0x20] sm:$0xf]
      %v4514 = vld [vmem:[%s4504 + $0x24] sm:$0xf]
      %v4515 = vld [vmem:[%s4504 + $0x28] sm:$0xf]
      %v4516 = vld [vmem:[%s4504 + $0x2c] sm:$0xf]
      %v4529 = vunpack.c.l.b16 %v4505
      %v4530 = vunpack.c.l.b16 %v4506
      %v4531 = vunpack.c.l.b16 %v4507
      %v4532 = vunpack.c.l.b16 %v4508
      %v4533 = vunpack.c.l.b16 %v4509
      %v4534 = vunpack.c.l.b16 %v4510
      %v4535 = vunpack.c.l.b16 %v4511
      %v4536 = vunpack.c.l.b16 %v4512
      %v4537 = vunpack.c.l.b16 %v4513
      %v4538 = vunpack.c.l.b16 %v4514
      %v4539 = vunpack.c.l.b16 %v4515
      %v4540 = vunpack.c.l.b16 %v4516
      %v4541 = vpack.c.b16 %v4530, %v4529
      %v4542 = vpack.c.b16 %v4532, %v4531
      %v4543 = vpack.c.b16 %v4534, %v4533
      %v4544 = vpack.c.b16 %v4536, %v4535
      %v4545 = vpack.c.b16 %v4538, %v4537
      %v4546 = vpack.c.b16 %v4540, %v4539
      %v4554 = vsel %vm2624, %v4503, 0
      %4556 = vmatprep.subr.bf16.mxu0 0
      %4557 = vmatpush1.bf16.msra.mxu0 %v4541
      %4558 = vmatprep.subr.bf16.mxu0 0
      %4559 = vmatpush1.bf16.msra.mxu0 %v4542
      %4560 = vmatprep.subr.bf16.mxu0 0
      %4561 = vmatpush1.bf16.msra.mxu0 %v4543
      %4562 = vmatprep.subr.bf16.mxu0 0
      %4563 = vmatpush1.bf16.msra.mxu0 %v4544
      %4564 = vmatprep.subr.bf16.mxu0 0
      %4565 = vmatpush1.bf16.msra.mxu0 %v4545
      %4566 = vmatprep.subr.bf16.mxu0 0
      %4567 = vmatpush1.bf16.msra.mxu0 %v4546
      %4568 = vmatprep.subr.bf16.mxu0 0
      %4569 = vmatpush1.bf16.msra.mxu0 0
      %4570 = vmatprep.subr.bf16.mxu0 0
      %4571 = vmatpush1.bf16.msra.mxu0 0
      %4572 = vmatprep.subr.bf16.mxu0 0
      %4573 = vmatpush1.bf16.msra.mxu0 0
      %4574 = vmatprep.subr.bf16.mxu0 0
      %4575 = vmatpush1.bf16.msra.mxu0 0
      %4576 = vmatprep.subr.bf16.mxu0 0
      %4577 = vmatpush1.bf16.msra.mxu0 0
      %4578 = vmatprep.subr.bf16.mxu0 0
      %4579 = vmatpush1.bf16.msra.mxu0 0
      %4580 = vmatprep.subr.bf16.mxu0 0
      %4581 = vmatpush1.bf16.msra.mxu0 0
      %4582 = vmatprep.subr.bf16.mxu0 0
      %4583 = vmatpush1.bf16.msra.mxu0 0
      %4584 = vmatprep.subr.bf16.mxu0 0
      %4585 = vmatpush1.bf16.msra.mxu0 0
      %4586 = vmatprep.subr.bf16.mxu0 0
      %4587 = vmatpush1.bf16.msra.mxu0 0
      %4588 = vmatprep.mubr.bf16.mxu0 0
      %4589 = vmatmul.mubr.bf16.gmra.mrb[0].mxu0 %v4554
      %v4590 = vpop.f32.mrb[0].mxu0
      %v4591 = vadd.f32 0.0, %v4590
      %v4592 = vpop.f32.mrb[0].mxu0
      %v4593 = vpop.f32.mrb[0].mxu0
      %v4594 = vadd.f32 0.0, %v4593
      %v4595 = vpop.f32.mrb[0].mxu0
      %4596 = vdwg.mxu0
      %v4597 = vadd.f32 %v4371, %v4591
      %v4598 = vadd.f32 %v4372, %v4594
      %v4599 = vld [vmem:[%s602] sm:$0x1]
      %v4600 = vmul.f32 %v4597, %v4597
      %v4601 = vmul.f32 %v4598, %v4598
      %v4602 = vsel %vm738, %v4600, 0.0
      %4603 = vadd.xlane.f32.xlu0 %v4602
      %v4604 = vpop.xlane.xlu0 %4603
      %v4605 = vsel %vm738, %v4601, 0.0
      %4606 = vadd.xlane.f32.xlu0 %v4605
      %v4607 = vpop.xlane.xlu0 %4606
      %v4608 = vmul.f32 %v4604, %v745
      %v4609 = vmul.f32 %v4607, %v745
      %v4610 = vadd.f32 %v4608, 1e-05
      %v4611 = vadd.f32 %v4609, 1e-05
      %v4612 = vrsqrt.pop %v4610
      %v4613 = vrsqrt.pop %v4611
      %v4614 = vmul.f32 %v4597, %v4612
      %v4615 = vmul.f32 %v4598, %v4613
      %v4617 = vlaneseq
      %v4618 = vshrl.u32 %v4617, 7
      %v4619 = vsub.s32 0, %v4618
      %v4620 = vrot.slane %v4599, %v4619
      %v4622 = vmul.f32 %v4614, %v4620
      %v4623 = vmul.f32 %v4615, %v4620
      %v4624 = vpack.c.bf16 %v4623, %v4622
      %v4625 = vld [vmem:[%s599] sm:$0xf]
      %v4626 = vld [vmem:[%s599 + $0x4] sm:$0xf]
      %v4627 = vld [vmem:[%s599 + $0x8] sm:$0xf]
      %v4628 = vld [vmem:[%s599 + $0xc] sm:$0xf]
      %v4633 = vunpack.c.l.b16 %v4625
      %v4634 = vunpack.c.l.b16 %v4626
      %v4635 = vunpack.c.l.b16 %v4627
      %v4636 = vunpack.c.l.b16 %v4628
      %v4637 = vpack.c.b16 %v4634, %v4633
      %v4638 = vpack.c.b16 %v4636, %v4635
      %v4642 = vsel %vm738, %v4624, 0
      %4644 = vmatprep.subr.bf16.mxu0 0
      %4645 = vmatpush1.bf16.msra.mxu0 %v4637
      %4646 = vmatprep.subr.bf16.mxu0 0
      %4647 = vmatpush1.bf16.msra.mxu0 %v4638
      %4648 = vmatprep.subr.bf16.mxu0 0
      %4649 = vmatpush1.bf16.msra.mxu0 0
      %4650 = vmatprep.subr.bf16.mxu0 0
      %4651 = vmatpush1.bf16.msra.mxu0 0
      %4652 = vmatprep.subr.bf16.mxu0 0
      %4653 = vmatpush1.bf16.msra.mxu0 0
      %4654 = vmatprep.subr.bf16.mxu0 0
      %4655 = vmatpush1.bf16.msra.mxu0 0
      %4656 = vmatprep.subr.bf16.mxu0 0
      %4657 = vmatpush1.bf16.msra.mxu0 0
      %4658 = vmatprep.subr.bf16.mxu0 0
      %4659 = vmatpush1.bf16.msra.mxu0 0
      %4660 = vmatprep.subr.bf16.mxu0 0
      %4661 = vmatpush1.bf16.msra.mxu0 0
      %4662 = vmatprep.subr.bf16.mxu0 0
      %4663 = vmatpush1.bf16.msra.mxu0 0
      %4664 = vmatprep.subr.bf16.mxu0 0
      %4665 = vmatpush1.bf16.msra.mxu0 0
      %4666 = vmatprep.subr.bf16.mxu0 0
      %4667 = vmatpush1.bf16.msra.mxu0 0
      %4668 = vmatprep.subr.bf16.mxu0 0
      %4669 = vmatpush1.bf16.msra.mxu0 0
      %4670 = vmatprep.subr.bf16.mxu0 0
      %4671 = vmatpush1.bf16.msra.mxu0 0
      %4672 = vmatprep.subr.bf16.mxu0 0
      %4673 = vmatpush1.bf16.msra.mxu0 0
      %4674 = vmatprep.subr.bf16.mxu0 0
      %4675 = vmatpush1.bf16.msra.mxu0 0
      %4676 = vmatprep.mubr.bf16.mxu0 0
      %4677 = vmatmul.mubr.bf16.gmra.mrb[0].mxu0 %v4642
      %v4678 = vpop.f32.mrb[0].mxu0
      %v4679 = vadd.f32 0.0, %v4678
      %v4680 = vpop.f32.mrb[0].mxu0
      %v4681 = vpop.f32.mrb[0].mxu0
      %v4682 = vadd.f32 0.0, %v4681
      %v4683 = vpop.f32.mrb[0].mxu0
      %4684 = vdwg.mxu0
      %v4685 = vld [vmem:[%s589] sm:$0xff]
      %v4686 = vld [vmem:[%s589 + $0x8] sm:$0xff]
      %4688 = vset.pattern.permute.xlu0 0
      %4689 = vperm.xlu0 %4688, %v4685
      %v4690 = vpop.permute.xlu0 %4689
      %4693 = vset.pattern.permute.xlu0 0
      %4694 = vperm.xlu0 %4693, %v4686
      %v4695 = vpop.permute.xlu0 %4694
      %v4697 = vmul.f32 %v4679, %v4690
      %v4698 = vmul.f32 %v4682, %v4695
      %v4699 = vpack.c.bf16 %v4698, %v4697
      %v4701 = vunpack.c.l.b16 %v4699
      %v4702 = vunpack.c.h.b16 %v4699
      %v4703 = vpack.c.b16 %v4701, %v4701
      %v4704 = vpack.c.b16 %v4702, %v4702
      %vm4707 = vcmask 519168
      %4708 = vst.msk [vmem:[%s635] sm:$0xf] %vm4707, %v4703
      %4709 = vst.msk [vmem:[%s635 + $0x4] sm:$0xf] %vm4707, %v4704
      %p4710 = scmp.lt.s32.totalorder %s25, 1
      %s4711 = scalar_select %p4710, %s25, 1
      %s4712 = smul.addr %s4711, 2
      %s4713 = smul.addr %s4712, 4
      %s4714 = scalar_lea.vmem %s14, %s4713
      // Predicated region
      $region77: #{_lambda_.1} parent=75 // pred_check
        %p4715 = pneg %p387
      $region78: #{_lambda_.1} parent=75 // pred_check_branch
        %4717 = sbr.rel (%p4715) target = $region80
      $region79: #{_lambda_.1} parent=75 // pred_region
        _
      $region80: #{_lambda_.1} parent=75 // pred_fallthru
        _
    $region76: #{_lambda_.1} parent=5 // pred_fallthru
      _
    %p4718 = scmp.le.s32.totalorder 2, %s20
    // Predicated region
    $region81: #{_lambda_.1} parent=5 // pred_check
      %p4719 = pneg %p4718
    $region82: #{_lambda_.1} parent=5 // pred_check_branch
      %4721 = sbr.rel (%p4719) target = $region84
    $region83: #{_lambda_.1} parent=5 // pred_region
      %s4722 = ssub.s32 %s20, 2
      // Predicated region
      $region85: #{_lambda_.1} parent=83 // pred_check
        %p4723 = pneg %p393
      $region86: #{_lambda_.1} parent=83 // pred_check_branch
        %4725 = sbr.rel (%p4723) target = $region88
      $region87: #{_lambda_.1} parent=83 // pred_region
        %p4726 = scmp.lt.s32.totalorder %s26, 1
        %s4727 = scalar_select %p4726, %s26, 1
        %s4728 = smul.addr %s4727, 2
        %s4729 = smul.addr %s4728, 4
        %s4730 = scalar_lea.vmem %s14, %s4729
      $region88: #{_lambda_.1} parent=83 // pred_fallthru
        _
    $region84: #{_lambda_.1} parent=5 // pred_fallthru
      _
  $region6: #{_lambda_.1} parent=0 // loop_footer
    %s24 = sadd.s32 1, %s20
  $region7: #{_lambda_.1} parent=0 // loop_footer_branch
    %19 = sbr.rel target = $region3
  $region8: #{_lambda_.1} parent=0 // loop_exit
    _

</llo_original>
